<compile_context>
chip_gen: v7x
topology: tpu7x:2x2x1
jax: 0.10.0
libtpu: 0.0.40
codegen_flags: <defaults>
</compile_context>

<pallas_src>
import functools

import jax
import jax.numpy as jnp
from jax.experimental import pallas as pl
from jax.experimental.pallas import tpu as pltpu


def _round_up(x, m):
    return ((x + m - 1) // m) * m


def _fm_kernel(bias_ref, utab_ref, itab_ref, atab_ref,
               uidx_ref, iidx_ref, aidx_ref, out_ref, *, factors):
    # utab/itab/atab: resident [F+1, N_pad] f32 tables (row `factors` = bias).
    # uidx/iidx/aidx: [1, TB] int32 index blocks.  out: [1, TB] f32.
    tb = out_ref.shape[1]

    def gather(tab_ref, idx_ref):
        n_pad = tab_ref.shape[1]
        col = jax.lax.broadcasted_iota(jnp.int32, (n_pad, tb), 0)
        onehot = (col == idx_ref[...]).astype(jnp.float32)          # [N_pad, TB]
        # One-hot gather on the idle MXU; HIGHEST precision keeps f32 exactness.
        return jnp.dot(tab_ref[...], onehot,
                       preferred_element_type=jnp.float32,
                       precision=jax.lax.Precision.HIGHEST)         # [F+1, TB]

    gu = gather(utab_ref, uidx_ref)
    gi = gather(itab_ref, iidx_ref)
    ga = gather(atab_ref, aidx_ref)

    # Single sublane reduction over ALL F+1 rows:
    #   sum_{F+1} [ gu*(gi+ga) + ga*gi ]
    #     = [ eu.ei + ea.eu + ea.ei ]  +  ub*ib + ub*ab + ab*ib
    total = jnp.sum(gu * (gi + ga) + ga * gi, axis=0, keepdims=True)  # [1, TB]

    ub = gu[factors:factors + 1, :]
    ib = gi[factors:factors + 1, :]
    ab = ga[factors:factors + 1, :]
    cross = ub * (ib + ab) + ab * ib

    out_ref[...] = total - cross + ub + ib + ab + bias_ref[0]


def pointfm_forward(params, user, item, age, *, tb_max=2048):
    """feature==1 PointFM forward: pred[b] for (user[b], item[b], age[b])."""
    F = params["user_table"].shape[0] - 1
    B = user.shape[0]

    # Pad the batch only to a lane multiple (128); the grid uses cdiv and
    # Pallas masks the partial last block, so the waste is bounded by <128.
    B_pad = _round_up(B, 128)
    TB = min(_round_up(tb_max, 128), B_pad)
    pad = B_pad - B

    def prep_idx(idx):
        idx = idx.astype(jnp.int32)
        if pad:
            idx = jnp.concatenate([idx, jnp.zeros((pad,), jnp.int32)])
        return idx.reshape(1, B_pad)

    def prep_tab(tab):
        n = tab.shape[1]
        n_pad = _round_up(n, 128)
        if n_pad != n:
            tab = jnp.pad(tab, ((0, 0), (0, n_pad - n)))
        return tab

    u_idx, i_idx, a_idx = prep_idx(user), prep_idx(item), prep_idx(age)
    u_tab = prep_tab(params["user_table"])
    i_tab = prep_tab(params["item_table"])
    a_tab = prep_tab(params["age_table"])

    # TODO(synk): for user/item tables too large to keep resident in VMEM,
    # switch to PrefetchScalarGridSpec (scalar-prefetched indices) +
    # memory_space=pl.ANY + manual per-row DMA gather, and store the tables in
    # bfloat16 (upcast + accumulate in f32 in-kernel).

    kernel = functools.partial(_fm_kernel, factors=F)

    out = pl.pallas_call(
        kernel,
        out_shape=jax.ShapeDtypeStruct((1, B_pad), jnp.float32),
        grid=(pl.cdiv(B_pad, TB),),
        in_specs=[
            pl.BlockSpec(memory_space=pltpu.MemorySpace.SMEM),    # bias_ scalar
            pl.BlockSpec(memory_space=pltpu.MemorySpace.VMEM),    # user table (resident)
            pl.BlockSpec(memory_space=pltpu.MemorySpace.VMEM),    # item table (resident)
            pl.BlockSpec(memory_space=pltpu.MemorySpace.VMEM),    # age  table (resident)
            pl.BlockSpec((1, TB), lambda i: (0, i)),              # user idx block
            pl.BlockSpec((1, TB), lambda i: (0, i)),              # item idx block
            pl.BlockSpec((1, TB), lambda i: (0, i)),              # age  idx block
        ],
        out_specs=pl.BlockSpec((1, TB), lambda i: (0, i)),
        compiler_params=pltpu.CompilerParams(
            dimension_semantics=("parallel",),
            vmem_limit_bytes=32 * 1024 * 1024,
        ),
    )(params["bias_"], u_tab, i_tab, a_tab, u_idx, i_idx, a_idx)

    return out.reshape(-1)[:B]   # pred.view(-1)


def init_params(key, user_num, item_num, factors):
    """Factor-major tables with the per-entity bias folded in as the last row."""
    k_u, k_i, k_a = jax.random.split(key, 3)

    def table(k, n):
        emb = jax.random.normal(k, (factors, n), jnp.float32)   # nn.init.normal_
        bias = jnp.zeros((1, n), jnp.float32)                   # constant_(0.0)
        return jnp.concatenate([emb, bias], axis=0)             # [factors+1, n]

    return {
        "user_table": table(k_u, user_num),
        "item_table": table(k_i, item_num),
        "age_table": table(k_a, 3),
        "bias_": jnp.zeros((1,), jnp.float32),
    }


def reference_forward(params, user, item, age):
    F = params["user_table"].shape[0] - 1
    ug = params["user_table"][:, user]
    ig = params["item_table"][:, item]
    ag = params["age_table"][:, age]
    eu, ub = ug[:F].T, ug[F]
    ei, ib = ig[:F].T, ig[F]
    ea, ab = ag[:F].T, ag[F]
    pred = jnp.sum(eu * ei, axis=-1)
    pred = pred + ub + ib + params["bias_"][0]
    pred = pred + jnp.sum(ea * eu, axis=-1) + jnp.sum(ea * ei, axis=-1)
    pred = pred + ab
    return pred


if __name__ == "__main__":
    key = jax.random.PRNGKey(0)
    (k_params, k_user, k_item, k_age,
     k_b1, k_b2, k_b3, k_b4) = jax.random.split(key, 8)

    user_num, item_num, factors = 10, 20, 84
    batch = 8

    params = init_params(k_params, user_num, item_num, factors)

    user = jax.random.randint(k_user, (batch,), 0, user_num, dtype=jnp.int32)
    item = jax.random.randint(k_item, (batch,), 0, item_num, dtype=jnp.int32)
    age = jax.random.randint(k_age, (batch,), 0, 3, dtype=jnp.int32)

    # 1) Module-faithful init (entity biases are zero).
    pred = jax.block_until_ready(pointfm_forward(params, user, item, age))
    ref = reference_forward(params, user, item, age)
    assert pred.shape == (batch,)
    assert jnp.allclose(pred, ref, atol=1e-4, rtol=1e-4)

    # 2) Non-zero biases to exercise the full bias path end-to-end.
    params2 = dict(params)
    params2["user_table"] = params["user_table"].at[factors, :].set(
        jax.random.normal(k_b1, (user_num,), jnp.float32))
    params2["item_table"] = params["item_table"].at[factors, :].set(
        jax.random.normal(k_b2, (item_num,), jnp.float32))
    params2["age_table"] = params["age_table"].at[factors, :].set(
        jax.random.normal(k_b3, (3,), jnp.float32))
    params2["bias_"] = jax.random.normal(k_b4, (1,), jnp.float32)

    pred2 = jax.block_until_ready(pointfm_forward(params2, user, item, age))
    ref2 = reference_forward(params2, user, item, age)
    assert jnp.allclose(pred2, ref2, atol=1e-4, rtol=1e-4)

    print("KERNEL_OK")
</pallas_src>

<mosaic_0001>
module attributes {stable_mosaic.version = 11 : i64} {
  func.func @_fm_kernel(%arg0: i32, %arg1: memref<1xf32, #tpu.memory_space<smem>>, %arg2: memref<85x128xf32, #tpu.memory_space<vmem>>, %arg3: memref<85x128xf32, #tpu.memory_space<vmem>>, %arg4: memref<85x128xf32, #tpu.memory_space<vmem>>, %arg5: memref<1x128xi32, #tpu.memory_space<vmem>>, %arg6: memref<1x128xi32, #tpu.memory_space<vmem>>, %arg7: memref<1x128xi32, #tpu.memory_space<vmem>>, %arg8: memref<1x128xf32, #tpu.memory_space<vmem>>) attributes {dimension_semantics = [#tpu.dimension_semantics<parallel>], iteration_bounds = array<i64: 1>, scalar_prefetch = 0 : i64, scratch_operands = 0 : i64, tpu.core_type = #tpu.core_type<tc>, window_params = [{transform_indices = @transform_0, window_bounds = array<i64: 1>}, {pipeline_mode = #tpu.pipeline_mode<synchronous>, transform_indices = @transform_1, window_bounds = array<i64: 85, 128>}, {pipeline_mode = #tpu.pipeline_mode<synchronous>, transform_indices = @transform_2, window_bounds = array<i64: 85, 128>}, {pipeline_mode = #tpu.pipeline_mode<synchronous>, transform_indices = @transform_3, window_bounds = array<i64: 85, 128>}, {transform_indices = @transform_4, window_bounds = array<i64: 1, 128>}, {transform_indices = @transform_5, window_bounds = array<i64: 1, 128>}, {transform_indices = @transform_6, window_bounds = array<i64: 1, 128>}, {transform_indices = @transform_7, window_bounds = array<i64: 1, 128>}]} {
    %0 = tpu.iota {dimensions = array<i32: 0>} : vector<128x128xi32>
    %c0 = arith.constant 0 : index
    %c0_0 = arith.constant 0 : index
    %1 = vector.load %arg5[%c0, %c0_0] : memref<1x128xi32, #tpu.memory_space<vmem>>, vector<1x128xi32>
    %2 = vector.broadcast %1 : vector<1x128xi32> to vector<128x128xi32>
    %3 = arith.cmpi eq, %0, %2 : vector<128x128xi32>
    %4 = arith.extui %3 : vector<128x128xi1> to vector<128x128xi32>
    %5 = arith.sitofp %4 : vector<128x128xi32> to vector<128x128xf32>
    %c0_1 = arith.constant 0 : index
    %c0_2 = arith.constant 0 : index
    %6 = vector.load %arg2[%c0_1, %c0_2] : memref<85x128xf32, #tpu.memory_space<vmem>>, vector<85x128xf32>
    %cst = arith.constant dense<0.000000e+00> : vector<85x128xf32>
    %7 = tpu.matmul %6, %5, %cst {dimension_numbers = #tpu.dot_dimension_numbers<[1], [0], [0], [1], [0, 0, 1, 1], [], []>, precision = #tpu.contract_precision<fp32>} : vector<85x128xf32>, vector<128x128xf32>, vector<85x128xf32> -> vector<85x128xf32>
    %8 = tpu.iota {dimensions = array<i32: 0>} : vector<128x128xi32>
    %c0_3 = arith.constant 0 : index
    %c0_4 = arith.constant 0 : index
    %9 = vector.load %arg6[%c0_3, %c0_4] : memref<1x128xi32, #tpu.memory_space<vmem>>, vector<1x128xi32>
    %10 = vector.broadcast %9 : vector<1x128xi32> to vector<128x128xi32>
    %11 = arith.cmpi eq, %8, %10 : vector<128x128xi32>
    %12 = arith.extui %11 : vector<128x128xi1> to vector<128x128xi32>
    %13 = arith.sitofp %12 : vector<128x128xi32> to vector<128x128xf32>
    %c0_5 = arith.constant 0 : index
    %c0_6 = arith.constant 0 : index
    %14 = vector.load %arg3[%c0_5, %c0_6] : memref<85x128xf32, #tpu.memory_space<vmem>>, vector<85x128xf32>
    %cst_7 = arith.constant dense<0.000000e+00> : vector<85x128xf32>
    %15 = tpu.matmul %14, %13, %cst_7 {dimension_numbers = #tpu.dot_dimension_numbers<[1], [0], [0], [1], [0, 0, 1, 1], [], []>, precision = #tpu.contract_precision<fp32>} : vector<85x128xf32>, vector<128x128xf32>, vector<85x128xf32> -> vector<85x128xf32>
    %16 = tpu.iota {dimensions = array<i32: 0>} : vector<128x128xi32>
    %c0_8 = arith.constant 0 : index
    %c0_9 = arith.constant 0 : index
    %17 = vector.load %arg7[%c0_8, %c0_9] : memref<1x128xi32, #tpu.memory_space<vmem>>, vector<1x128xi32>
    %18 = vector.broadcast %17 : vector<1x128xi32> to vector<128x128xi32>
    %19 = arith.cmpi eq, %16, %18 : vector<128x128xi32>
    %20 = arith.extui %19 : vector<128x128xi1> to vector<128x128xi32>
    %21 = arith.sitofp %20 : vector<128x128xi32> to vector<128x128xf32>
    %c0_10 = arith.constant 0 : index
    %c0_11 = arith.constant 0 : index
    %22 = vector.load %arg4[%c0_10, %c0_11] : memref<85x128xf32, #tpu.memory_space<vmem>>, vector<85x128xf32>
    %cst_12 = arith.constant dense<0.000000e+00> : vector<85x128xf32>
    %23 = tpu.matmul %22, %21, %cst_12 {dimension_numbers = #tpu.dot_dimension_numbers<[1], [0], [0], [1], [0, 0, 1, 1], [], []>, precision = #tpu.contract_precision<fp32>} : vector<85x128xf32>, vector<128x128xf32>, vector<85x128xf32> -> vector<85x128xf32>
    %24 = arith.addf %15, %23 : vector<85x128xf32>
    %25 = arith.mulf %7, %24 : vector<85x128xf32>
    %26 = arith.mulf %23, %15 : vector<85x128xf32>
    %27 = arith.addf %25, %26 : vector<85x128xf32>
    %cst_13 = arith.constant dense<0.000000e+00> : vector<128xf32>
    %28 = vector.multi_reduction <add>, %27, %cst_13 [0] : vector<85x128xf32> to vector<128xf32>
    %29 = vector.shape_cast %28 : vector<128xf32> to vector<1x128xf32>
    %30 = vector.extract_strided_slice %7 {offsets = [84, 0], sizes = [1, 128], strides = [1, 1]} : vector<85x128xf32> to vector<1x128xf32>
    %31 = vector.extract_strided_slice %15 {offsets = [84, 0], sizes = [1, 128], strides = [1, 1]} : vector<85x128xf32> to vector<1x128xf32>
    %32 = vector.extract_strided_slice %23 {offsets = [84, 0], sizes = [1, 128], strides = [1, 1]} : vector<85x128xf32> to vector<1x128xf32>
    %33 = arith.addf %31, %32 : vector<1x128xf32>
    %34 = arith.mulf %30, %33 : vector<1x128xf32>
    %35 = arith.mulf %32, %31 : vector<1x128xf32>
    %36 = arith.addf %34, %35 : vector<1x128xf32>
    %37 = arith.subf %29, %36 : vector<1x128xf32>
    %38 = arith.addf %37, %30 : vector<1x128xf32>
    %39 = arith.addf %38, %31 : vector<1x128xf32>
    %40 = arith.addf %39, %32 : vector<1x128xf32>
    %c0_14 = arith.constant 0 : index
    %41 = memref.load %arg1[%c0_14] : memref<1xf32, #tpu.memory_space<smem>>
    %42 = vector.broadcast %41 : f32 to vector<1x128xf32>
    %43 = arith.addf %40, %42 : vector<1x128xf32>
    %c0_15 = arith.constant 0 : index
    %c0_16 = arith.constant 0 : index
    %44 = vector.load %arg8[%c0_15, %c0_16] : memref<1x128xf32, #tpu.memory_space<vmem>>, vector<1x128xf32>
    tpu.vector_store %arg8[%c0_15, %c0_16], %43 {strides = array<i32>} : memref<1x128xf32, #tpu.memory_space<vmem>>, vector<1x128xf32>,
    return
  }
  func.func @transform_0(%arg0: i32) -> i32 {
    %c0_i32 = arith.constant 0 : i32
    %c0_i32_0 = arith.constant 0 : i32
    return %c0_i32 : i32
  }
  func.func @transform_1(%arg0: i32) -> (i32, i32) {
    %c0_i32 = arith.constant 0 : i32
    %c0_i32_0 = arith.constant 0 : i32
    %c0_i32_1 = arith.constant 0 : i32
    return %c0_i32, %c0_i32_0 : i32, i32
  }
  func.func @transform_2(%arg0: i32) -> (i32, i32) {
    %c0_i32 = arith.constant 0 : i32
    %c0_i32_0 = arith.constant 0 : i32
    %c0_i32_1 = arith.constant 0 : i32
    return %c0_i32, %c0_i32_0 : i32, i32
  }
  func.func @transform_3(%arg0: i32) -> (i32, i32) {
    %c0_i32 = arith.constant 0 : i32
    %c0_i32_0 = arith.constant 0 : i32
    %c0_i32_1 = arith.constant 0 : i32
    return %c0_i32, %c0_i32_0 : i32, i32
  }
  func.func @transform_4(%arg0: i32) -> (i32, i32) {
    %c0_i32 = arith.constant 0 : i32
    %c0_i32_0 = arith.constant 0 : i32
    return %c0_i32, %arg0 : i32, i32
  }
  func.func @transform_5(%arg0: i32) -> (i32, i32) {
    %c0_i32 = arith.constant 0 : i32
    %c0_i32_0 = arith.constant 0 : i32
    return %c0_i32, %arg0 : i32, i32
  }
  func.func @transform_6(%arg0: i32) -> (i32, i32) {
    %c0_i32 = arith.constant 0 : i32
    %c0_i32_0 = arith.constant 0 : i32
    return %c0_i32, %arg0 : i32, i32
  }
  func.func @transform_7(%arg0: i32) -> (i32, i32) {
    %c0_i32 = arith.constant 0 : i32
    %c0_i32_0 = arith.constant 0 : i32
    return %c0_i32, %arg0 : i32, i32
  }
}

</mosaic_0001>

<llo_original>
// kernel: tpu_custom_call.1
$region0: #{tpu_custom_call.1}
  #allocation0 [shape = 'u32[]', space=smem, size = 0x4, offset = 0x4, fixed_abs, tag = 'smem constant byte address 0x4 - core index']
  #allocation1 [shape = 'u32[144,128]{1,0:T(1,128)}', space=vmem, size = 0x12000, scoped, tag = 'internal scratch']
  #allocation2 [shape = 'f32[1]{0:T(128)S(6)}', space=smem, size = 0x200, scoped, tag = 'scoped memory for tpu_custom_call.1']
  %s0 = inlined_call_operand.<no memory space> [shape: f32[1], index: 0, kind: input, shape index: {}]
  %s1 = inlined_call_operand.hbm [shape: f32[85,128], index: 1, kind: input, shape index: {}]
  %s2 = inlined_call_operand.hbm [shape: f32[85,128], index: 2, kind: input, shape index: {}]
  %s3 = inlined_call_operand.hbm [shape: f32[85,128], index: 3, kind: input, shape index: {}]
  %s4 = inlined_call_operand.vmem [shape: s32[1,128], index: 4, kind: input, shape index: {}]
  %s5 = inlined_call_operand.vmem [shape: s32[1,128], index: 5, kind: input, shape index: {}]
  %s6 = inlined_call_operand.vmem [shape: s32[1,128], index: 6, kind: input, shape index: {}]
  %s7 = inlined_call_operand.hbm [shape: f32[1,128], index: 7, kind: output, shape index: {}]
  %s8 = sld [smem:[#allocation0]]
  $region50: #{tpu_custom_call.1} parent=0
    _
  %s10 = ssub.s32 1, %s8
  %s11 = scalar_select 0, %s10, %s8
  %12 = sst [smem:[#allocation2]] %s0
  $region1: #{tpu_custom_call.1} parent=0
    #allocation3 [shape = 'u8[45056]{0}', space=vmem, size = 0xb000, scoped, tag = 'input window, operand 1, single buffered']
    #allocation4 [shape = 's32[1]{0}', space=sflag, size = 0x4, scoped, tag = 'scoped memory for tpu_custom_call.1']
    #allocation5 [shape = 's32[1]{0}', space=sflag, size = 0x4, scoped, tag = 'scoped memory for tpu_custom_call.1']
    #allocation6 [shape = 'u8[45056]{0}', space=vmem, size = 0xb000, scoped, tag = 'input window, operand 2, single buffered']
    #allocation7 [shape = 's32[1]{0}', space=sflag, size = 0x4, scoped, tag = 'scoped memory for tpu_custom_call.1']
    #allocation8 [shape = 'u8[45056]{0}', space=vmem, size = 0xb000, scoped, tag = 'input window, operand 3, single buffered']
    #allocation9 [shape = 'u8[512]{0}', space=vmem, size = 0x400, scoped, tag = 'output window, operand 0, single buffered']
    %13 = vsyncpa [#allocation4], 0
    %14 = vsyncpa [#allocation7], 0
    %15 = vsyncpa [#allocation5], 0
    // Predicated region
    $region2: #{tpu_custom_call.1} parent=1 // pred_check
      _
    $region3: #{tpu_custom_call.1} parent=1 // pred_check_branch
      %17 = sbr.rel (0) target = $region5
    $region4: #{tpu_custom_call.1} parent=1 // pred_region
      _
    $region5: #{tpu_custom_call.1} parent=1 // pred_fallthru
      _
    // Predicated region
    $region6: #{tpu_custom_call.1} parent=1 // pred_check
      _
    $region7: #{tpu_custom_call.1} parent=1 // pred_check_branch
      %19 = sbr.rel (0) target = $region9
    $region8: #{tpu_custom_call.1} parent=1 // pred_region
      %s21 = ssub.s32 1408, 1408
      %22 = vsyncadd [#allocation4], %s21
      %s23 = sshll.u32 [#allocation3], 4
      %s24 = int_to_ptr.vmem [resolvable:$true] %s23
      %29 = dma.hbm_to_vmem [thread:$0]  %s1, 1408, %s24, [#allocation4], 128, 128, 8
    $region9: #{tpu_custom_call.1} parent=1 // pred_fallthru
      _
    // Predicated region
    $region10: #{tpu_custom_call.1} parent=1 // pred_check
      _
    $region11: #{tpu_custom_call.1} parent=1 // pred_check_branch
      %31 = sbr.rel (0) target = $region13
    $region12: #{tpu_custom_call.1} parent=1 // pred_region
      %s33 = ssub.s32 1408, 1408
      %34 = vsyncadd [#allocation7], %s33
      %s35 = sshll.u32 [#allocation6], 4
      %s36 = int_to_ptr.vmem [resolvable:$true] %s35
      %41 = dma.hbm_to_vmem [thread:$0]  %s2, 1408, %s36, [#allocation7], 128, 128, 8
    $region13: #{tpu_custom_call.1} parent=1 // pred_fallthru
      _
    // Predicated region
    $region14: #{tpu_custom_call.1} parent=1 // pred_check
      _
    $region15: #{tpu_custom_call.1} parent=1 // pred_check_branch
      %43 = sbr.rel (0) target = $region17
    $region16: #{tpu_custom_call.1} parent=1 // pred_region
      %s45 = ssub.s32 1408, 1408
      %46 = vsyncadd [#allocation7], %s45
      %s47 = sshll.u32 [#allocation8], 4
      %s48 = int_to_ptr.vmem [resolvable:$true] %s47
      %53 = dma.hbm_to_vmem [thread:$0]  %s3, 1408, %s48, [#allocation7], 128, 128, 8
    $region17: #{tpu_custom_call.1} parent=1 // pred_fallthru
      _
    // Predicated region
    $region18: #{tpu_custom_call.1} parent=1 // pred_check
      _
    $region19: #{tpu_custom_call.1} parent=1 // pred_check_branch
      %55 = sbr.rel (0) target = $region21
    $region20: #{tpu_custom_call.1} parent=1 // pred_region
      _
    $region21: #{tpu_custom_call.1} parent=1 // pred_fallthru
      _
    // Predicated region
    $region22: #{tpu_custom_call.1} parent=1 // pred_check
      _
    $region23: #{tpu_custom_call.1} parent=1 // pred_check_branch
      %57 = sbr.rel (0) target = $region25
    $region24: #{tpu_custom_call.1} parent=1 // pred_region
      _
    $region25: #{tpu_custom_call.1} parent=1 // pred_fallthru
      _
    // Predicated region
    $region26: #{tpu_custom_call.1} parent=1 // pred_check
      _
    $region27: #{tpu_custom_call.1} parent=1 // pred_check_branch
      %59 = sbr.rel (0) target = $region29
    $region28: #{tpu_custom_call.1} parent=1 // pred_region
      _
    $region29: #{tpu_custom_call.1} parent=1 // pred_fallthru
      _
    // Predicated region
    $region30: #{tpu_custom_call.1} parent=1 // pred_check
      _
    $region31: #{tpu_custom_call.1} parent=1 // pred_check_branch
      %61 = sbr.rel (0) target = $region33
    $region32: #{tpu_custom_call.1} parent=1 // pred_region
      %62 = dma.done [#allocation4], 1408
    $region33: #{tpu_custom_call.1} parent=1 // pred_fallthru
      _
    // Predicated region
    $region34: #{tpu_custom_call.1} parent=1 // pred_check
      _
    $region35: #{tpu_custom_call.1} parent=1 // pred_check_branch
      %64 = sbr.rel (0) target = $region37
    $region36: #{tpu_custom_call.1} parent=1 // pred_region
      %65 = dma.done [#allocation7], 1408
    $region37: #{tpu_custom_call.1} parent=1 // pred_fallthru
      _
    // Predicated region
    $region38: #{tpu_custom_call.1} parent=1 // pred_check
      _
    $region39: #{tpu_custom_call.1} parent=1 // pred_check_branch
      %67 = sbr.rel (0) target = $region41
    $region40: #{tpu_custom_call.1} parent=1 // pred_region
      %68 = dma.done [#allocation7], 1408
    $region41: #{tpu_custom_call.1} parent=1 // pred_fallthru
      _
    %v69 = vlaneseq
    %v70 = vshrl.u32 %v69, 7
    %v71 = vadd.s32 %v70, 8
    %v72 = vadd.s32 %v70, 16
    %v73 = vadd.s32 %v70, 24
    %v74 = vadd.s32 %v70, 32
    %v75 = vadd.s32 %v70, 40
    %v76 = vadd.s32 %v70, 48
    %v77 = vadd.s32 %v70, 56
    %v78 = vadd.s32 %v70, 64
    %v79 = vadd.s32 %v70, 72
    %v80 = vadd.s32 %v70, 80
    %v81 = vadd.s32 %v70, 88
    %v82 = vadd.s32 %v70, 96
    %v83 = vadd.s32 %v70, 104
    %v84 = vadd.s32 %v70, 112
    %v85 = vadd.s32 %v70, 120
    %v86 = vld [vmem:[%s4] sm:$0x1]
    %v87 = vlaneseq
    %v88 = vshrl.u32 %v87, 7
    %v89 = vsub.s32 0, %v88
    %v90 = vrot.slane %v86, %v89
    %vm91 = vcmp.eq.s32.totalorder %v70, %v90
    %vm92 = vcmp.eq.s32.totalorder %v71, %v90
    %vm93 = vcmp.eq.s32.totalorder %v72, %v90
    %vm94 = vcmp.eq.s32.totalorder %v73, %v90
    %vm95 = vcmp.eq.s32.totalorder %v74, %v90
    %vm96 = vcmp.eq.s32.totalorder %v75, %v90
    %vm97 = vcmp.eq.s32.totalorder %v76, %v90
    %vm98 = vcmp.eq.s32.totalorder %v77, %v90
    %vm99 = vcmp.eq.s32.totalorder %v78, %v90
    %vm100 = vcmp.eq.s32.totalorder %v79, %v90
    %vm101 = vcmp.eq.s32.totalorder %v80, %v90
    %vm102 = vcmp.eq.s32.totalorder %v81, %v90
    %vm103 = vcmp.eq.s32.totalorder %v82, %v90
    %vm104 = vcmp.eq.s32.totalorder %v83, %v90
    %vm105 = vcmp.eq.s32.totalorder %v84, %v90
    %vm106 = vcmp.eq.s32.totalorder %v85, %v90
    %v107 = vsel %vm91, 1, 0
    %v108 = vsel %vm92, 1, 0
    %v109 = vsel %vm93, 1, 0
    %v110 = vsel %vm94, 1, 0
    %v111 = vsel %vm95, 1, 0
    %v112 = vsel %vm96, 1, 0
    %v113 = vsel %vm97, 1, 0
    %v114 = vsel %vm98, 1, 0
    %v115 = vsel %vm99, 1, 0
    %v116 = vsel %vm100, 1, 0
    %v117 = vsel %vm101, 1, 0
    %v118 = vsel %vm102, 1, 0
    %v119 = vsel %vm103, 1, 0
    %v120 = vsel %vm104, 1, 0
    %v121 = vsel %vm105, 1, 0
    %v122 = vsel %vm106, 1, 0
    %v123 = vcvt.s32.f32 %v107
    %v124 = vcvt.s32.f32 %v108
    %v125 = vcvt.s32.f32 %v109
    %v126 = vcvt.s32.f32 %v110
    %v127 = vcvt.s32.f32 %v111
    %v128 = vcvt.s32.f32 %v112
    %v129 = vcvt.s32.f32 %v113
    %v130 = vcvt.s32.f32 %v114
    %v131 = vcvt.s32.f32 %v115
    %v132 = vcvt.s32.f32 %v116
    %v133 = vcvt.s32.f32 %v117
    %v134 = vcvt.s32.f32 %v118
    %v135 = vcvt.s32.f32 %v119
    %v136 = vcvt.s32.f32 %v120
    %v137 = vcvt.s32.f32 %v121
    %v138 = vcvt.s32.f32 %v122
    %v139 = vld [vmem:[#allocation3] sm:$0xff]
    %v140 = vld [vmem:[#allocation3 + $0x8] sm:$0xff]
    %v141 = vld [vmem:[#allocation3 + $0x10] sm:$0xff]
    %v142 = vld [vmem:[#allocation3 + $0x18] sm:$0xff]
    %v143 = vld [vmem:[#allocation3 + $0x20] sm:$0xff]
    %v144 = vld [vmem:[#allocation3 + $0x28] sm:$0xff]
    %v145 = vld [vmem:[#allocation3 + $0x30] sm:$0xff]
    %v146 = vld [vmem:[#allocation3 + $0x38] sm:$0xff]
    %v147 = vld [vmem:[#allocation3 + $0x40] sm:$0xff]
    %v148 = vld [vmem:[#allocation3 + $0x48] sm:$0xff]
    %v149 = vld [vmem:[#allocation3 + $0x50] sm:$0x1f]
    %150 = vmatprep.subr.mxu0 0.0
    %v151 = vand.u32 %v123, 4294901760
    %152 = vmatpush1.msra.mxu0 %v151
    %153 = vmatprep.subr.mxu0 0.0
    %v154 = vand.u32 %v124, 4294901760
    %155 = vmatpush1.msra.mxu0 %v154
    %156 = vmatprep.subr.mxu0 0.0
    %v157 = vand.u32 %v125, 4294901760
    %158 = vmatpush1.msra.mxu0 %v157
    %159 = vmatprep.subr.mxu0 0.0
    %v160 = vand.u32 %v126, 4294901760
    %161 = vmatpush1.msra.mxu0 %v160
    %162 = vmatprep.subr.mxu0 0.0
    %v163 = vand.u32 %v127, 4294901760
    %164 = vmatpush1.msra.mxu0 %v163
    %165 = vmatprep.subr.mxu0 0.0
    %v166 = vand.u32 %v128, 4294901760
    %167 = vmatpush1.msra.mxu0 %v166
    %168 = vmatprep.subr.mxu0 0.0
    %v169 = vand.u32 %v129, 4294901760
    %170 = vmatpush1.msra.mxu0 %v169
    %171 = vmatprep.subr.mxu0 0.0
    %v172 = vand.u32 %v130, 4294901760
    %173 = vmatpush1.msra.mxu0 %v172
    %174 = vmatprep.subr.mxu0 0.0
    %v175 = vand.u32 %v131, 4294901760
    %176 = vmatpush1.msra.mxu0 %v175
    %177 = vmatprep.subr.mxu0 0.0
    %v178 = vand.u32 %v132, 4294901760
    %179 = vmatpush1.msra.mxu0 %v178
    %180 = vmatprep.subr.mxu0 0.0
    %v181 = vand.u32 %v133, 4294901760
    %182 = vmatpush1.msra.mxu0 %v181
    %183 = vmatprep.subr.mxu0 0.0
    %v184 = vand.u32 %v134, 4294901760
    %185 = vmatpush1.msra.mxu0 %v184
    %186 = vmatprep.subr.mxu0 0.0
    %v187 = vand.u32 %v135, 4294901760
    %188 = vmatpush1.msra.mxu0 %v187
    %189 = vmatprep.subr.mxu0 0.0
    %v190 = vand.u32 %v136, 4294901760
    %191 = vmatpush1.msra.mxu0 %v190
    %192 = vmatprep.subr.mxu0 0.0
    %v193 = vand.u32 %v137, 4294901760
    %194 = vmatpush1.msra.mxu0 %v193
    %195 = vmatprep.subr.mxu0 0.0
    %v196 = vand.u32 %v138, 4294901760
    %197 = vmatpush1.msra.mxu0 %v196
    %198 = vmatprep.subr.mxu0 0.0
    %199 = vmatpush1.msra.mxu0 0.0
    %200 = vmatprep.subr.mxu0 0.0
    %201 = vmatpush1.msra.mxu0 0.0
    %202 = vmatprep.subr.mxu0 0.0
    %203 = vmatpush1.msra.mxu0 0.0
    %204 = vmatprep.subr.mxu0 0.0
    %205 = vmatpush1.msra.mxu0 0.0
    %206 = vmatprep.subr.mxu0 0.0
    %207 = vmatpush1.msra.mxu0 0.0
    %208 = vmatprep.subr.mxu0 0.0
    %209 = vmatpush1.msra.mxu0 0.0
    %210 = vmatprep.subr.mxu0 0.0
    %211 = vmatpush1.msra.mxu0 0.0
    %212 = vmatprep.subr.mxu0 0.0
    %213 = vmatpush1.msra.mxu0 0.0
    %214 = vmatprep.subr.mxu0 0.0
    %215 = vmatpush1.msra.mxu0 0.0
    %216 = vmatprep.subr.mxu0 0.0
    %217 = vmatpush1.msra.mxu0 0.0
    %218 = vmatprep.subr.mxu0 0.0
    %219 = vmatpush1.msra.mxu0 0.0
    %220 = vmatprep.subr.mxu0 0.0
    %221 = vmatpush1.msra.mxu0 0.0
    %222 = vmatprep.subr.mxu0 0.0
    %223 = vmatpush1.msra.mxu0 0.0
    %224 = vmatprep.subr.mxu0 0.0
    %225 = vmatpush1.msra.mxu0 0.0
    %226 = vmatprep.subr.mxu0 0.0
    %227 = vmatpush1.msra.mxu0 0.0
    %228 = vmatprep.subr.mxu0 0.0
    %229 = vmatpush1.msra.mxu0 0.0
    %230 = vmatprep.mubr.f32.mxu0 0.0
    %v231 = vand.u32 %v139, 4294901760
    %v232 = vsub.f32 %v139, %v231
    %v233 = vand.u32 %v232, 4294901760
    %v234 = vsub.f32 %v232, %v233
    %v235 = vand.u32 %v234, 4294901760
    %236 = vmatmul.mubr.f32.gmra.mrb[0].mxu0 %v235
    %v237 = vpop.f32.mrb[0].mxu0
    %v238 = vadd.f32 0.0, %v237
    %v239 = vpop.f32.mrb[0].mxu0
    %240 = vmatprep.mubr.f32.mxu0 0.0
    %v241 = vand.u32 %v140, 4294901760
    %v242 = vsub.f32 %v140, %v241
    %v243 = vand.u32 %v242, 4294901760
    %v244 = vsub.f32 %v242, %v243
    %v245 = vand.u32 %v244, 4294901760
    %246 = vmatmul.mubr.f32.gmra.mrb[0].mxu0 %v245
    %v247 = vpop.f32.mrb[0].mxu0
    %v248 = vadd.f32 0.0, %v247
    %v249 = vpop.f32.mrb[0].mxu0
    %250 = vmatprep.mubr.f32.mxu0 0.0
    %v251 = vand.u32 %v141, 4294901760
    %v252 = vsub.f32 %v141, %v251
    %v253 = vand.u32 %v252, 4294901760
    %v254 = vsub.f32 %v252, %v253
    %v255 = vand.u32 %v254, 4294901760
    %256 = vmatmul.mubr.f32.gmra.mrb[0].mxu0 %v255
    %v257 = vpop.f32.mrb[0].mxu0
    %v258 = vadd.f32 0.0, %v257
    %v259 = vpop.f32.mrb[0].mxu0
    %260 = vmatprep.mubr.f32.mxu0 0.0
    %v261 = vand.u32 %v142, 4294901760
    %v262 = vsub.f32 %v142, %v261
    %v263 = vand.u32 %v262, 4294901760
    %v264 = vsub.f32 %v262, %v263
    %v265 = vand.u32 %v264, 4294901760
    %266 = vmatmul.mubr.f32.gmra.mrb[0].mxu0 %v265
    %v267 = vpop.f32.mrb[0].mxu0
    %v268 = vadd.f32 0.0, %v267
    %v269 = vpop.f32.mrb[0].mxu0
    %270 = vmatprep.mubr.f32.mxu0 0.0
    %v271 = vand.u32 %v143, 4294901760
    %v272 = vsub.f32 %v143, %v271
    %v273 = vand.u32 %v272, 4294901760
    %v274 = vsub.f32 %v272, %v273
    %v275 = vand.u32 %v274, 4294901760
    %276 = vmatmul.mubr.f32.gmra.mrb[0].mxu0 %v275
    %v277 = vpop.f32.mrb[0].mxu0
    %v278 = vadd.f32 0.0, %v277
    %v279 = vpop.f32.mrb[0].mxu0
    %280 = vmatprep.mubr.f32.mxu0 0.0
    %v281 = vand.u32 %v144, 4294901760
    %v282 = vsub.f32 %v144, %v281
    %v283 = vand.u32 %v282, 4294901760
    %v284 = vsub.f32 %v282, %v283
    %v285 = vand.u32 %v284, 4294901760
    %286 = vmatmul.mubr.f32.gmra.mrb[0].mxu0 %v285
    %v287 = vpop.f32.mrb[0].mxu0
    %v288 = vadd.f32 0.0, %v287
    %v289 = vpop.f32.mrb[0].mxu0
    %290 = vmatprep.mubr.f32.mxu0 0.0
    %v291 = vand.u32 %v145, 4294901760
    %v292 = vsub.f32 %v145, %v291
    %v293 = vand.u32 %v292, 4294901760
    %v294 = vsub.f32 %v292, %v293
    %v295 = vand.u32 %v294, 4294901760
    %296 = vmatmul.mubr.f32.gmra.mrb[0].mxu0 %v295
    %v297 = vpop.f32.mrb[0].mxu0
    %v298 = vadd.f32 0.0, %v297
    %v299 = vpop.f32.mrb[0].mxu0
    %300 = vmatprep.mubr.f32.mxu0 0.0
    %v301 = vand.u32 %v146, 4294901760
    %v302 = vsub.f32 %v146, %v301
    %v303 = vand.u32 %v302, 4294901760
    %v304 = vsub.f32 %v302, %v303
    %v305 = vand.u32 %v304, 4294901760
    %306 = vmatmul.mubr.f32.gmra.mrb[0].mxu0 %v305
    %v307 = vpop.f32.mrb[0].mxu0
    %v308 = vadd.f32 0.0, %v307
    %v309 = vpop.f32.mrb[0].mxu0
    %310 = vmatprep.mubr.f32.mxu0 0.0
    %v311 = vand.u32 %v147, 4294901760
    %v312 = vsub.f32 %v147, %v311
    %v313 = vand.u32 %v312, 4294901760
    %v314 = vsub.f32 %v312, %v313
    %v315 = vand.u32 %v314, 4294901760
    %316 = vmatmul.mubr.f32.gmra.mrb[0].mxu0 %v315
    %v317 = vpop.f32.mrb[0].mxu0
    %v318 = vadd.f32 0.0, %v317
    %v319 = vpop.f32.mrb[0].mxu0
    %320 = vmatprep.mubr.f32.mxu0 0.0
    %v321 = vand.u32 %v148, 4294901760
    %v322 = vsub.f32 %v148, %v321
    %v323 = vand.u32 %v322, 4294901760
    %v324 = vsub.f32 %v322, %v323
    %v325 = vand.u32 %v324, 4294901760
    %326 = vmatmul.mubr.f32.gmra.mrb[0].mxu0 %v325
    %v327 = vpop.f32.mrb[0].mxu0
    %v328 = vadd.f32 0.0, %v327
    %v329 = vpop.f32.mrb[0].mxu0
    %330 = vmatprep.mubr.f32.mxu0 0.0
    %v331 = vand.u32 %v149, 4294901760
    %v332 = vsub.f32 %v149, %v331
    %v333 = vand.u32 %v332, 4294901760
    %v334 = vsub.f32 %v332, %v333
    %v335 = vand.u32 %v334, 4294901760
    %336 = vmatmul.mubr.f32.gmra.mrb[0].mxu0 %v335
    %v337 = vpop.f32.mrb[0].mxu0
    %v338 = vadd.f32 0.0, %v337
    %v339 = vpop.f32.mrb[0].mxu0
    %340 = vdwg.mxu0
    %341 = vmatprep.subr.mxu0 0.0
    %v342 = vand.u32 %v123, 4294901760
    %v343 = vsub.f32 %v123, %v342
    %v344 = vand.u32 %v343, 4294901760
    %v345 = vsub.f32 %v343, %v344
    %v346 = vand.u32 %v345, 4294901760
    %347 = vmatpush1.msra.mxu0 %v346
    %348 = vmatprep.subr.mxu0 0.0
    %v349 = vand.u32 %v124, 4294901760
    %v350 = vsub.f32 %v124, %v349
    %v351 = vand.u32 %v350, 4294901760
    %v352 = vsub.f32 %v350, %v351
    %v353 = vand.u32 %v352, 4294901760
    %354 = vmatpush1.msra.mxu0 %v353
    %355 = vmatprep.subr.mxu0 0.0
    %v356 = vand.u32 %v125, 4294901760
    %v357 = vsub.f32 %v125, %v356
    %v358 = vand.u32 %v357, 4294901760
    %v359 = vsub.f32 %v357, %v358
    %v360 = vand.u32 %v359, 4294901760
    %361 = vmatpush1.msra.mxu0 %v360
    %362 = vmatprep.subr.mxu0 0.0
    %v363 = vand.u32 %v126, 4294901760
    %v364 = vsub.f32 %v126, %v363
    %v365 = vand.u32 %v364, 4294901760
    %v366 = vsub.f32 %v364, %v365
    %v367 = vand.u32 %v366, 4294901760
    %368 = vmatpush1.msra.mxu0 %v367
    %369 = vmatprep.subr.mxu0 0.0
    %v370 = vand.u32 %v127, 4294901760
    %v371 = vsub.f32 %v127, %v370
    %v372 = vand.u32 %v371, 4294901760
    %v373 = vsub.f32 %v371, %v372
    %v374 = vand.u32 %v373, 4294901760
    %375 = vmatpush1.msra.mxu0 %v374
    %376 = vmatprep.subr.mxu0 0.0
    %v377 = vand.u32 %v128, 4294901760
    %v378 = vsub.f32 %v128, %v377
    %v379 = vand.u32 %v378, 4294901760
    %v380 = vsub.f32 %v378, %v379
    %v381 = vand.u32 %v380, 4294901760
    %382 = vmatpush1.msra.mxu0 %v381
    %383 = vmatprep.subr.mxu0 0.0
    %v384 = vand.u32 %v129, 4294901760
    %v385 = vsub.f32 %v129, %v384
    %v386 = vand.u32 %v385, 4294901760
    %v387 = vsub.f32 %v385, %v386
    %v388 = vand.u32 %v387, 4294901760
    %389 = vmatpush1.msra.mxu0 %v388
    %390 = vmatprep.subr.mxu0 0.0
    %v391 = vand.u32 %v130, 4294901760
    %v392 = vsub.f32 %v130, %v391
    %v393 = vand.u32 %v392, 4294901760
    %v394 = vsub.f32 %v392, %v393
    %v395 = vand.u32 %v394, 4294901760
    %396 = vmatpush1.msra.mxu0 %v395
    %397 = vmatprep.subr.mxu0 0.0
    %v398 = vand.u32 %v131, 4294901760
    %v399 = vsub.f32 %v131, %v398
    %v400 = vand.u32 %v399, 4294901760
    %v401 = vsub.f32 %v399, %v400
    %v402 = vand.u32 %v401, 4294901760
    %403 = vmatpush1.msra.mxu0 %v402
    %404 = vmatprep.subr.mxu0 0.0
    %v405 = vand.u32 %v132, 4294901760
    %v406 = vsub.f32 %v132, %v405
    %v407 = vand.u32 %v406, 4294901760
    %v408 = vsub.f32 %v406, %v407
    %v409 = vand.u32 %v408, 4294901760
    %410 = vmatpush1.msra.mxu0 %v409
    %411 = vmatprep.subr.mxu0 0.0
    %v412 = vand.u32 %v133, 4294901760
    %v413 = vsub.f32 %v133, %v412
    %v414 = vand.u32 %v413, 4294901760
    %v415 = vsub.f32 %v413, %v414
    %v416 = vand.u32 %v415, 4294901760
    %417 = vmatpush1.msra.mxu0 %v416
    %418 = vmatprep.subr.mxu0 0.0
    %v419 = vand.u32 %v134, 4294901760
    %v420 = vsub.f32 %v134, %v419
    %v421 = vand.u32 %v420, 4294901760
    %v422 = vsub.f32 %v420, %v421
    %v423 = vand.u32 %v422, 4294901760
    %424 = vmatpush1.msra.mxu0 %v423
    %425 = vmatprep.subr.mxu0 0.0
    %v426 = vand.u32 %v135, 4294901760
    %v427 = vsub.f32 %v135, %v426
    %v428 = vand.u32 %v427, 4294901760
    %v429 = vsub.f32 %v427, %v428
    %v430 = vand.u32 %v429, 4294901760
    %431 = vmatpush1.msra.mxu0 %v430
    %432 = vmatprep.subr.mxu0 0.0
    %v433 = vand.u32 %v136, 4294901760
    %v434 = vsub.f32 %v136, %v433
    %v435 = vand.u32 %v434, 4294901760
    %v436 = vsub.f32 %v434, %v435
    %v437 = vand.u32 %v436, 4294901760
    %438 = vmatpush1.msra.mxu0 %v437
    %439 = vmatprep.subr.mxu0 0.0
    %v440 = vand.u32 %v137, 4294901760
    %v441 = vsub.f32 %v137, %v440
    %v442 = vand.u32 %v441, 4294901760
    %v443 = vsub.f32 %v441, %v442
    %v444 = vand.u32 %v443, 4294901760
    %445 = vmatpush1.msra.mxu0 %v444
    %446 = vmatprep.subr.mxu0 0.0
    %v447 = vand.u32 %v138, 4294901760
    %v448 = vsub.f32 %v138, %v447
    %v449 = vand.u32 %v448, 4294901760
    %v450 = vsub.f32 %v448, %v449
    %v451 = vand.u32 %v450, 4294901760
    %452 = vmatpush1.msra.mxu0 %v451
    %453 = vmatprep.subr.mxu0 0.0
    %454 = vmatpush1.msra.mxu0 0.0
    %455 = vmatprep.subr.mxu0 0.0
    %456 = vmatpush1.msra.mxu0 0.0
    %457 = vmatprep.subr.mxu0 0.0
    %458 = vmatpush1.msra.mxu0 0.0
    %459 = vmatprep.subr.mxu0 0.0
    %460 = vmatpush1.msra.mxu0 0.0
    %461 = vmatprep.subr.mxu0 0.0
    %462 = vmatpush1.msra.mxu0 0.0
    %463 = vmatprep.subr.mxu0 0.0
    %464 = vmatpush1.msra.mxu0 0.0
    %465 = vmatprep.subr.mxu0 0.0
    %466 = vmatpush1.msra.mxu0 0.0
    %467 = vmatprep.subr.mxu0 0.0
    %468 = vmatpush1.msra.mxu0 0.0
    %469 = vmatprep.subr.mxu0 0.0
    %470 = vmatpush1.msra.mxu0 0.0
    %471 = vmatprep.subr.mxu0 0.0
    %472 = vmatpush1.msra.mxu0 0.0
    %473 = vmatprep.subr.mxu0 0.0
    %474 = vmatpush1.msra.mxu0 0.0
    %475 = vmatprep.subr.mxu0 0.0
    %476 = vmatpush1.msra.mxu0 0.0
    %477 = vmatprep.subr.mxu0 0.0
    %478 = vmatpush1.msra.mxu0 0.0
    %479 = vmatprep.subr.mxu0 0.0
    %480 = vmatpush1.msra.mxu0 0.0
    %481 = vmatprep.subr.mxu0 0.0
    %482 = vmatpush1.msra.mxu0 0.0
    %483 = vmatprep.subr.mxu0 0.0
    %484 = vmatpush1.msra.mxu0 0.0
    %485 = vmatprep.mubr.f32.mxu0 0.0
    %v486 = vand.u32 %v139, 4294901760
    %487 = vmatmul.mubr.f32.gmra.mrb[0].mxu0 %v486
    %v488 = vpop.f32.mrb[0].mxu0
    %v489 = vadd.f32 %v238, %v488
    %v490 = vpop.f32.mrb[0].mxu0
    %491 = vmatprep.mubr.f32.mxu0 0.0
    %v492 = vand.u32 %v140, 4294901760
    %493 = vmatmul.mubr.f32.gmra.mrb[0].mxu0 %v492
    %v494 = vpop.f32.mrb[0].mxu0
    %v495 = vadd.f32 %v248, %v494
    %v496 = vpop.f32.mrb[0].mxu0
    %497 = vmatprep.mubr.f32.mxu0 0.0
    %v498 = vand.u32 %v141, 4294901760
    %499 = vmatmul.mubr.f32.gmra.mrb[0].mxu0 %v498
    %v500 = vpop.f32.mrb[0].mxu0
    %v501 = vadd.f32 %v258, %v500
    %v502 = vpop.f32.mrb[0].mxu0
    %503 = vmatprep.mubr.f32.mxu0 0.0
    %v504 = vand.u32 %v142, 4294901760
    %505 = vmatmul.mubr.f32.gmra.mrb[0].mxu0 %v504
    %v506 = vpop.f32.mrb[0].mxu0
    %v507 = vadd.f32 %v268, %v506
    %v508 = vpop.f32.mrb[0].mxu0
    %509 = vmatprep.mubr.f32.mxu0 0.0
    %v510 = vand.u32 %v143, 4294901760
    %511 = vmatmul.mubr.f32.gmra.mrb[0].mxu0 %v510
    %v512 = vpop.f32.mrb[0].mxu0
    %v513 = vadd.f32 %v278, %v512
    %v514 = vpop.f32.mrb[0].mxu0
    %515 = vmatprep.mubr.f32.mxu0 0.0
    %v516 = vand.u32 %v144, 4294901760
    %517 = vmatmul.mubr.f32.gmra.mrb[0].mxu0 %v516
    %v518 = vpop.f32.mrb[0].mxu0
    %v519 = vadd.f32 %v288, %v518
    %v520 = vpop.f32.mrb[0].mxu0
    %521 = vmatprep.mubr.f32.mxu0 0.0
    %v522 = vand.u32 %v145, 4294901760
    %523 = vmatmul.mubr.f32.gmra.mrb[0].mxu0 %v522
    %v524 = vpop.f32.mrb[0].mxu0
    %v525 = vadd.f32 %v298, %v524
    %v526 = vpop.f32.mrb[0].mxu0
    %527 = vmatprep.mubr.f32.mxu0 0.0
    %v528 = vand.u32 %v146, 4294901760
    %529 = vmatmul.mubr.f32.gmra.mrb[0].mxu0 %v528
    %v530 = vpop.f32.mrb[0].mxu0
    %v531 = vadd.f32 %v308, %v530
    %v532 = vpop.f32.mrb[0].mxu0
    %533 = vmatprep.mubr.f32.mxu0 0.0
    %v534 = vand.u32 %v147, 4294901760
    %535 = vmatmul.mubr.f32.gmra.mrb[0].mxu0 %v534
    %v536 = vpop.f32.mrb[0].mxu0
    %v537 = vadd.f32 %v318, %v536
    %v538 = vpop.f32.mrb[0].mxu0
    %539 = vmatprep.mubr.f32.mxu0 0.0
    %v540 = vand.u32 %v148, 4294901760
    %541 = vmatmul.mubr.f32.gmra.mrb[0].mxu0 %v540
    %v542 = vpop.f32.mrb[0].mxu0
    %v543 = vadd.f32 %v328, %v542
    %v544 = vpop.f32.mrb[0].mxu0
    %545 = vmatprep.mubr.f32.mxu0 0.0
    %v546 = vand.u32 %v149, 4294901760
    %547 = vmatmul.mubr.f32.gmra.mrb[0].mxu0 %v546
    %v548 = vpop.f32.mrb[0].mxu0
    %v549 = vadd.f32 %v338, %v548
    %v550 = vpop.f32.mrb[0].mxu0
    %551 = vdwg.mxu0
    %552 = vmatprep.subr.mxu0 0.0
    %v553 = vand.u32 %v123, 4294901760
    %v554 = vsub.f32 %v123, %v553
    %555 = vmatpush1.msra.mxu0 %v554
    %556 = vmatprep.subr.mxu0 0.0
    %v557 = vand.u32 %v124, 4294901760
    %v558 = vsub.f32 %v124, %v557
    %559 = vmatpush1.msra.mxu0 %v558
    %560 = vmatprep.subr.mxu0 0.0
    %v561 = vand.u32 %v125, 4294901760
    %v562 = vsub.f32 %v125, %v561
    %563 = vmatpush1.msra.mxu0 %v562
    %564 = vmatprep.subr.mxu0 0.0
    %v565 = vand.u32 %v126, 4294901760
    %v566 = vsub.f32 %v126, %v565
    %567 = vmatpush1.msra.mxu0 %v566
    %568 = vmatprep.subr.mxu0 0.0
    %v569 = vand.u32 %v127, 4294901760
    %v570 = vsub.f32 %v127, %v569
    %571 = vmatpush1.msra.mxu0 %v570
    %572 = vmatprep.subr.mxu0 0.0
    %v573 = vand.u32 %v128, 4294901760
    %v574 = vsub.f32 %v128, %v573
    %575 = vmatpush1.msra.mxu0 %v574
    %576 = vmatprep.subr.mxu0 0.0
    %v577 = vand.u32 %v129, 4294901760
    %v578 = vsub.f32 %v129, %v577
    %579 = vmatpush1.msra.mxu0 %v578
    %580 = vmatprep.subr.mxu0 0.0
    %v581 = vand.u32 %v130, 4294901760
    %v582 = vsub.f32 %v130, %v581
    %583 = vmatpush1.msra.mxu0 %v582
    %584 = vmatprep.subr.mxu0 0.0
    %v585 = vand.u32 %v131, 4294901760
    %v586 = vsub.f32 %v131, %v585
    %587 = vmatpush1.msra.mxu0 %v586
    %588 = vmatprep.subr.mxu0 0.0
    %v589 = vand.u32 %v132, 4294901760
    %v590 = vsub.f32 %v132, %v589
    %591 = vmatpush1.msra.mxu0 %v590
    %592 = vmatprep.subr.mxu0 0.0
    %v593 = vand.u32 %v133, 4294901760
    %v594 = vsub.f32 %v133, %v593
    %595 = vmatpush1.msra.mxu0 %v594
    %596 = vmatprep.subr.mxu0 0.0
    %v597 = vand.u32 %v134, 4294901760
    %v598 = vsub.f32 %v134, %v597
    %599 = vmatpush1.msra.mxu0 %v598
    %600 = vmatprep.subr.mxu0 0.0
    %v601 = vand.u32 %v135, 4294901760
    %v602 = vsub.f32 %v135, %v601
    %603 = vmatpush1.msra.mxu0 %v602
    %604 = vmatprep.subr.mxu0 0.0
    %v605 = vand.u32 %v136, 4294901760
    %v606 = vsub.f32 %v136, %v605
    %607 = vmatpush1.msra.mxu0 %v606
    %608 = vmatprep.subr.mxu0 0.0
    %v609 = vand.u32 %v137, 4294901760
    %v610 = vsub.f32 %v137, %v609
    %611 = vmatpush1.msra.mxu0 %v610
    %612 = vmatprep.subr.mxu0 0.0
    %v613 = vand.u32 %v138, 4294901760
    %v614 = vsub.f32 %v138, %v613
    %615 = vmatpush1.msra.mxu0 %v614
    %616 = vmatprep.subr.mxu0 0.0
    %617 = vmatpush1.msra.mxu0 0.0
    %618 = vmatprep.subr.mxu0 0.0
    %619 = vmatpush1.msra.mxu0 0.0
    %620 = vmatprep.subr.mxu0 0.0
    %621 = vmatpush1.msra.mxu0 0.0
    %622 = vmatprep.subr.mxu0 0.0
    %623 = vmatpush1.msra.mxu0 0.0
    %624 = vmatprep.subr.mxu0 0.0
    %625 = vmatpush1.msra.mxu0 0.0
    %626 = vmatprep.subr.mxu0 0.0
    %627 = vmatpush1.msra.mxu0 0.0
    %628 = vmatprep.subr.mxu0 0.0
    %629 = vmatpush1.msra.mxu0 0.0
    %630 = vmatprep.subr.mxu0 0.0
    %631 = vmatpush1.msra.mxu0 0.0
    %632 = vmatprep.subr.mxu0 0.0
    %633 = vmatpush1.msra.mxu0 0.0
    %634 = vmatprep.subr.mxu0 0.0
    %635 = vmatpush1.msra.mxu0 0.0
    %636 = vmatprep.subr.mxu0 0.0
    %637 = vmatpush1.msra.mxu0 0.0
    %638 = vmatprep.subr.mxu0 0.0
    %639 = vmatpush1.msra.mxu0 0.0
    %640 = vmatprep.subr.mxu0 0.0
    %641 = vmatpush1.msra.mxu0 0.0
    %642 = vmatprep.subr.mxu0 0.0
    %643 = vmatpush1.msra.mxu0 0.0
    %644 = vmatprep.subr.mxu0 0.0
    %645 = vmatpush1.msra.mxu0 0.0
    %646 = vmatprep.subr.mxu0 0.0
    %647 = vmatpush1.msra.mxu0 0.0
    %648 = vmatprep.mubr.f32.mxu0 0.0
    %v649 = vand.u32 %v139, 4294901760
    %v650 = vsub.f32 %v139, %v649
    %651 = vmatmul.mubr.f32.gmra.mrb[0].mxu0 %v650
    %v652 = vpop.f32.mrb[0].mxu0
    %v653 = vadd.f32 %v489, %v652
    %v654 = vpop.f32.mrb[0].mxu0
    %655 = vmatprep.mubr.f32.mxu0 0.0
    %v656 = vand.u32 %v140, 4294901760
    %v657 = vsub.f32 %v140, %v656
    %658 = vmatmul.mubr.f32.gmra.mrb[0].mxu0 %v657
    %v659 = vpop.f32.mrb[0].mxu0
    %v660 = vadd.f32 %v495, %v659
    %v661 = vpop.f32.mrb[0].mxu0
    %662 = vmatprep.mubr.f32.mxu0 0.0
    %v663 = vand.u32 %v141, 4294901760
    %v664 = vsub.f32 %v141, %v663
    %665 = vmatmul.mubr.f32.gmra.mrb[0].mxu0 %v664
    %v666 = vpop.f32.mrb[0].mxu0
    %v667 = vadd.f32 %v501, %v666
    %v668 = vpop.f32.mrb[0].mxu0
    %669 = vmatprep.mubr.f32.mxu0 0.0
    %v670 = vand.u32 %v142, 4294901760
    %v671 = vsub.f32 %v142, %v670
    %672 = vmatmul.mubr.f32.gmra.mrb[0].mxu0 %v671
    %v673 = vpop.f32.mrb[0].mxu0
    %v674 = vadd.f32 %v507, %v673
    %v675 = vpop.f32.mrb[0].mxu0
    %676 = vmatprep.mubr.f32.mxu0 0.0
    %v677 = vand.u32 %v143, 4294901760
    %v678 = vsub.f32 %v143, %v677
    %679 = vmatmul.mubr.f32.gmra.mrb[0].mxu0 %v678
    %v680 = vpop.f32.mrb[0].mxu0
    %v681 = vadd.f32 %v513, %v680
    %v682 = vpop.f32.mrb[0].mxu0
    %683 = vmatprep.mubr.f32.mxu0 0.0
    %v684 = vand.u32 %v144, 4294901760
    %v685 = vsub.f32 %v144, %v684
    %686 = vmatmul.mubr.f32.gmra.mrb[0].mxu0 %v685
    %v687 = vpop.f32.mrb[0].mxu0
    %v688 = vadd.f32 %v519, %v687
    %v689 = vpop.f32.mrb[0].mxu0
    %690 = vmatprep.mubr.f32.mxu0 0.0
    %v691 = vand.u32 %v145, 4294901760
    %v692 = vsub.f32 %v145, %v691
    %693 = vmatmul.mubr.f32.gmra.mrb[0].mxu0 %v692
    %v694 = vpop.f32.mrb[0].mxu0
    %v695 = vadd.f32 %v525, %v694
    %v696 = vpop.f32.mrb[0].mxu0
    %697 = vmatprep.mubr.f32.mxu0 0.0
    %v698 = vand.u32 %v146, 4294901760
    %v699 = vsub.f32 %v146, %v698
    %700 = vmatmul.mubr.f32.gmra.mrb[0].mxu0 %v699
    %v701 = vpop.f32.mrb[0].mxu0
    %v702 = vadd.f32 %v531, %v701
    %v703 = vpop.f32.mrb[0].mxu0
    %704 = vmatprep.mubr.f32.mxu0 0.0
    %v705 = vand.u32 %v147, 4294901760
    %v706 = vsub.f32 %v147, %v705
    %707 = vmatmul.mubr.f32.gmra.mrb[0].mxu0 %v706
    %v708 = vpop.f32.mrb[0].mxu0
    %v709 = vadd.f32 %v537, %v708
    %v710 = vpop.f32.mrb[0].mxu0
    %711 = vmatprep.mubr.f32.mxu0 0.0
    %v712 = vand.u32 %v148, 4294901760
    %v713 = vsub.f32 %v148, %v712
    %714 = vmatmul.mubr.f32.gmra.mrb[0].mxu0 %v713
    %v715 = vpop.f32.mrb[0].mxu0
    %v716 = vadd.f32 %v543, %v715
    %v717 = vpop.f32.mrb[0].mxu0
    %718 = vmatprep.mubr.f32.mxu0 0.0
    %v719 = vand.u32 %v149, 4294901760
    %v720 = vsub.f32 %v149, %v719
    %721 = vmatmul.mubr.f32.gmra.mrb[0].mxu0 %v720
    %v722 = vpop.f32.mrb[0].mxu0
    %v723 = vadd.f32 %v549, %v722
    %v724 = vpop.f32.mrb[0].mxu0
    %725 = vdwg.mxu0
    %726 = vmatprep.subr.mxu0 0.0
    %v727 = vand.u32 %v123, 4294901760
    %728 = vmatpush1.msra.mxu0 %v727
    %729 = vmatprep.subr.mxu0 0.0
    %v730 = vand.u32 %v124, 4294901760
    %731 = vmatpush1.msra.mxu0 %v730
    %732 = vmatprep.subr.mxu0 0.0
    %v733 = vand.u32 %v125, 4294901760
    %734 = vmatpush1.msra.mxu0 %v733
    %735 = vmatprep.subr.mxu0 0.0
    %v736 = vand.u32 %v126, 4294901760
    %737 = vmatpush1.msra.mxu0 %v736
    %738 = vmatprep.subr.mxu0 0.0
    %v739 = vand.u32 %v127, 4294901760
    %740 = vmatpush1.msra.mxu0 %v739
    %741 = vmatprep.subr.mxu0 0.0
    %v742 = vand.u32 %v128, 4294901760
    %743 = vmatpush1.msra.mxu0 %v742
    %744 = vmatprep.subr.mxu0 0.0
    %v745 = vand.u32 %v129, 4294901760
    %746 = vmatpush1.msra.mxu0 %v745
    %747 = vmatprep.subr.mxu0 0.0
    %v748 = vand.u32 %v130, 4294901760
    %749 = vmatpush1.msra.mxu0 %v748
    %750 = vmatprep.subr.mxu0 0.0
    %v751 = vand.u32 %v131, 4294901760
    %752 = vmatpush1.msra.mxu0 %v751
    %753 = vmatprep.subr.mxu0 0.0
    %v754 = vand.u32 %v132, 4294901760
    %755 = vmatpush1.msra.mxu0 %v754
    %756 = vmatprep.subr.mxu0 0.0
    %v757 = vand.u32 %v133, 4294901760
    %758 = vmatpush1.msra.mxu0 %v757
    %759 = vmatprep.subr.mxu0 0.0
    %v760 = vand.u32 %v134, 4294901760
    %761 = vmatpush1.msra.mxu0 %v760
    %762 = vmatprep.subr.mxu0 0.0
    %v763 = vand.u32 %v135, 4294901760
    %764 = vmatpush1.msra.mxu0 %v763
    %765 = vmatprep.subr.mxu0 0.0
    %v766 = vand.u32 %v136, 4294901760
    %767 = vmatpush1.msra.mxu0 %v766
    %768 = vmatprep.subr.mxu0 0.0
    %v769 = vand.u32 %v137, 4294901760
    %770 = vmatpush1.msra.mxu0 %v769
    %771 = vmatprep.subr.mxu0 0.0
    %v772 = vand.u32 %v138, 4294901760
    %773 = vmatpush1.msra.mxu0 %v772
    %774 = vmatprep.subr.mxu0 0.0
    %775 = vmatpush1.msra.mxu0 0.0
    %776 = vmatprep.subr.mxu0 0.0
    %777 = vmatpush1.msra.mxu0 0.0
    %778 = vmatprep.subr.mxu0 0.0
    %779 = vmatpush1.msra.mxu0 0.0
    %780 = vmatprep.subr.mxu0 0.0
    %781 = vmatpush1.msra.mxu0 0.0
    %782 = vmatprep.subr.mxu0 0.0
    %783 = vmatpush1.msra.mxu0 0.0
    %784 = vmatprep.subr.mxu0 0.0
    %785 = vmatpush1.msra.mxu0 0.0
    %786 = vmatprep.subr.mxu0 0.0
    %787 = vmatpush1.msra.mxu0 0.0
    %788 = vmatprep.subr.mxu0 0.0
    %789 = vmatpush1.msra.mxu0 0.0
    %790 = vmatprep.subr.mxu0 0.0
    %791 = vmatpush1.msra.mxu0 0.0
    %792 = vmatprep.subr.mxu0 0.0
    %793 = vmatpush1.msra.mxu0 0.0
    %794 = vmatprep.subr.mxu0 0.0
    %795 = vmatpush1.msra.mxu0 0.0
    %796 = vmatprep.subr.mxu0 0.0
    %797 = vmatpush1.msra.mxu0 0.0
    %798 = vmatprep.subr.mxu0 0.0
    %799 = vmatpush1.msra.mxu0 0.0
    %800 = vmatprep.subr.mxu0 0.0
    %801 = vmatpush1.msra.mxu0 0.0
    %802 = vmatprep.subr.mxu0 0.0
    %803 = vmatpush1.msra.mxu0 0.0
    %804 = vmatprep.subr.mxu0 0.0
    %805 = vmatpush1.msra.mxu0 0.0
    %806 = vmatprep.mubr.f32.mxu0 0.0
    %v807 = vand.u32 %v139, 4294901760
    %v808 = vsub.f32 %v139, %v807
    %v809 = vand.u32 %v808, 4294901760
    %810 = vmatmul.mubr.f32.gmra.mrb[0].mxu0 %v809
    %v811 = vpop.f32.mrb[0].mxu0
    %v812 = vadd.f32 %v653, %v811
    %v813 = vpop.f32.mrb[0].mxu0
    %814 = vmatprep.mubr.f32.mxu0 0.0
    %v815 = vand.u32 %v140, 4294901760
    %v816 = vsub.f32 %v140, %v815
    %v817 = vand.u32 %v816, 4294901760
    %818 = vmatmul.mubr.f32.gmra.mrb[0].mxu0 %v817
    %v819 = vpop.f32.mrb[0].mxu0
    %v820 = vadd.f32 %v660, %v819
    %v821 = vpop.f32.mrb[0].mxu0
    %822 = vmatprep.mubr.f32.mxu0 0.0
    %v823 = vand.u32 %v141, 4294901760
    %v824 = vsub.f32 %v141, %v823
    %v825 = vand.u32 %v824, 4294901760
    %826 = vmatmul.mubr.f32.gmra.mrb[0].mxu0 %v825
    %v827 = vpop.f32.mrb[0].mxu0
    %v828 = vadd.f32 %v667, %v827
    %v829 = vpop.f32.mrb[0].mxu0
    %830 = vmatprep.mubr.f32.mxu0 0.0
    %v831 = vand.u32 %v142, 4294901760
    %v832 = vsub.f32 %v142, %v831
    %v833 = vand.u32 %v832, 4294901760
    %834 = vmatmul.mubr.f32.gmra.mrb[0].mxu0 %v833
    %v835 = vpop.f32.mrb[0].mxu0
    %v836 = vadd.f32 %v674, %v835
    %v837 = vpop.f32.mrb[0].mxu0
    %838 = vmatprep.mubr.f32.mxu0 0.0
    %v839 = vand.u32 %v143, 4294901760
    %v840 = vsub.f32 %v143, %v839
    %v841 = vand.u32 %v840, 4294901760
    %842 = vmatmul.mubr.f32.gmra.mrb[0].mxu0 %v841
    %v843 = vpop.f32.mrb[0].mxu0
    %v844 = vadd.f32 %v681, %v843
    %v845 = vpop.f32.mrb[0].mxu0
    %846 = vmatprep.mubr.f32.mxu0 0.0
    %v847 = vand.u32 %v144, 4294901760
    %v848 = vsub.f32 %v144, %v847
    %v849 = vand.u32 %v848, 4294901760
    %850 = vmatmul.mubr.f32.gmra.mrb[0].mxu0 %v849
    %v851 = vpop.f32.mrb[0].mxu0
    %v852 = vadd.f32 %v688, %v851
    %v853 = vpop.f32.mrb[0].mxu0
    %854 = vmatprep.mubr.f32.mxu0 0.0
    %v855 = vand.u32 %v145, 4294901760
    %v856 = vsub.f32 %v145, %v855
    %v857 = vand.u32 %v856, 4294901760
    %858 = vmatmul.mubr.f32.gmra.mrb[0].mxu0 %v857
    %v859 = vpop.f32.mrb[0].mxu0
    %v860 = vadd.f32 %v695, %v859
    %v861 = vpop.f32.mrb[0].mxu0
    %862 = vmatprep.mubr.f32.mxu0 0.0
    %v863 = vand.u32 %v146, 4294901760
    %v864 = vsub.f32 %v146, %v863
    %v865 = vand.u32 %v864, 4294901760
    %866 = vmatmul.mubr.f32.gmra.mrb[0].mxu0 %v865
    %v867 = vpop.f32.mrb[0].mxu0
    %v868 = vadd.f32 %v702, %v867
    %v869 = vpop.f32.mrb[0].mxu0
    %870 = vmatprep.mubr.f32.mxu0 0.0
    %v871 = vand.u32 %v147, 4294901760
    %v872 = vsub.f32 %v147, %v871
    %v873 = vand.u32 %v872, 4294901760
    %874 = vmatmul.mubr.f32.gmra.mrb[0].mxu0 %v873
    %v875 = vpop.f32.mrb[0].mxu0
    %v876 = vadd.f32 %v709, %v875
    %v877 = vpop.f32.mrb[0].mxu0
    %878 = vmatprep.mubr.f32.mxu0 0.0
    %v879 = vand.u32 %v148, 4294901760
    %v880 = vsub.f32 %v148, %v879
    %v881 = vand.u32 %v880, 4294901760
    %882 = vmatmul.mubr.f32.gmra.mrb[0].mxu0 %v881
    %v883 = vpop.f32.mrb[0].mxu0
    %v884 = vadd.f32 %v716, %v883
    %v885 = vpop.f32.mrb[0].mxu0
    %886 = vmatprep.mubr.f32.mxu0 0.0
    %v887 = vand.u32 %v149, 4294901760
    %v888 = vsub.f32 %v149, %v887
    %v889 = vand.u32 %v888, 4294901760
    %890 = vmatmul.mubr.f32.gmra.mrb[0].mxu0 %v889
    %v891 = vpop.f32.mrb[0].mxu0
    %v892 = vadd.f32 %v723, %v891
    %v893 = vpop.f32.mrb[0].mxu0
    %894 = vdwg.mxu0
    %895 = vmatprep.subr.mxu0 0.0
    %v896 = vand.u32 %v123, 4294901760
    %v897 = vsub.f32 %v123, %v896
    %v898 = vand.u32 %v897, 4294901760
    %899 = vmatpush1.msra.mxu0 %v898
    %900 = vmatprep.subr.mxu0 0.0
    %v901 = vand.u32 %v124, 4294901760
    %v902 = vsub.f32 %v124, %v901
    %v903 = vand.u32 %v902, 4294901760
    %904 = vmatpush1.msra.mxu0 %v903
    %905 = vmatprep.subr.mxu0 0.0
    %v906 = vand.u32 %v125, 4294901760
    %v907 = vsub.f32 %v125, %v906
    %v908 = vand.u32 %v907, 4294901760
    %909 = vmatpush1.msra.mxu0 %v908
    %910 = vmatprep.subr.mxu0 0.0
    %v911 = vand.u32 %v126, 4294901760
    %v912 = vsub.f32 %v126, %v911
    %v913 = vand.u32 %v912, 4294901760
    %914 = vmatpush1.msra.mxu0 %v913
    %915 = vmatprep.subr.mxu0 0.0
    %v916 = vand.u32 %v127, 4294901760
    %v917 = vsub.f32 %v127, %v916
    %v918 = vand.u32 %v917, 4294901760
    %919 = vmatpush1.msra.mxu0 %v918
    %920 = vmatprep.subr.mxu0 0.0
    %v921 = vand.u32 %v128, 4294901760
    %v922 = vsub.f32 %v128, %v921
    %v923 = vand.u32 %v922, 4294901760
    %924 = vmatpush1.msra.mxu0 %v923
    %925 = vmatprep.subr.mxu0 0.0
    %v926 = vand.u32 %v129, 4294901760
    %v927 = vsub.f32 %v129, %v926
    %v928 = vand.u32 %v927, 4294901760
    %929 = vmatpush1.msra.mxu0 %v928
    %930 = vmatprep.subr.mxu0 0.0
    %v931 = vand.u32 %v130, 4294901760
    %v932 = vsub.f32 %v130, %v931
    %v933 = vand.u32 %v932, 4294901760
    %934 = vmatpush1.msra.mxu0 %v933
    %935 = vmatprep.subr.mxu0 0.0
    %v936 = vand.u32 %v131, 4294901760
    %v937 = vsub.f32 %v131, %v936
    %v938 = vand.u32 %v937, 4294901760
    %939 = vmatpush1.msra.mxu0 %v938
    %940 = vmatprep.subr.mxu0 0.0
    %v941 = vand.u32 %v132, 4294901760
    %v942 = vsub.f32 %v132, %v941
    %v943 = vand.u32 %v942, 4294901760
    %944 = vmatpush1.msra.mxu0 %v943
    %945 = vmatprep.subr.mxu0 0.0
    %v946 = vand.u32 %v133, 4294901760
    %v947 = vsub.f32 %v133, %v946
    %v948 = vand.u32 %v947, 4294901760
    %949 = vmatpush1.msra.mxu0 %v948
    %950 = vmatprep.subr.mxu0 0.0
    %v951 = vand.u32 %v134, 4294901760
    %v952 = vsub.f32 %v134, %v951
    %v953 = vand.u32 %v952, 4294901760
    %954 = vmatpush1.msra.mxu0 %v953
    %955 = vmatprep.subr.mxu0 0.0
    %v956 = vand.u32 %v135, 4294901760
    %v957 = vsub.f32 %v135, %v956
    %v958 = vand.u32 %v957, 4294901760
    %959 = vmatpush1.msra.mxu0 %v958
    %960 = vmatprep.subr.mxu0 0.0
    %v961 = vand.u32 %v136, 4294901760
    %v962 = vsub.f32 %v136, %v961
    %v963 = vand.u32 %v962, 4294901760
    %964 = vmatpush1.msra.mxu0 %v963
    %965 = vmatprep.subr.mxu0 0.0
    %v966 = vand.u32 %v137, 4294901760
    %v967 = vsub.f32 %v137, %v966
    %v968 = vand.u32 %v967, 4294901760
    %969 = vmatpush1.msra.mxu0 %v968
    %970 = vmatprep.subr.mxu0 0.0
    %v971 = vand.u32 %v138, 4294901760
    %v972 = vsub.f32 %v138, %v971
    %v973 = vand.u32 %v972, 4294901760
    %974 = vmatpush1.msra.mxu0 %v973
    %975 = vmatprep.subr.mxu0 0.0
    %976 = vmatpush1.msra.mxu0 0.0
    %977 = vmatprep.subr.mxu0 0.0
    %978 = vmatpush1.msra.mxu0 0.0
    %979 = vmatprep.subr.mxu0 0.0
    %980 = vmatpush1.msra.mxu0 0.0
    %981 = vmatprep.subr.mxu0 0.0
    %982 = vmatpush1.msra.mxu0 0.0
    %983 = vmatprep.subr.mxu0 0.0
    %984 = vmatpush1.msra.mxu0 0.0
    %985 = vmatprep.subr.mxu0 0.0
    %986 = vmatpush1.msra.mxu0 0.0
    %987 = vmatprep.subr.mxu0 0.0
    %988 = vmatpush1.msra.mxu0 0.0
    %989 = vmatprep.subr.mxu0 0.0
    %990 = vmatpush1.msra.mxu0 0.0
    %991 = vmatprep.subr.mxu0 0.0
    %992 = vmatpush1.msra.mxu0 0.0
    %993 = vmatprep.subr.mxu0 0.0
    %994 = vmatpush1.msra.mxu0 0.0
    %995 = vmatprep.subr.mxu0 0.0
    %996 = vmatpush1.msra.mxu0 0.0
    %997 = vmatprep.subr.mxu0 0.0
    %998 = vmatpush1.msra.mxu0 0.0
    %999 = vmatprep.subr.mxu0 0.0
    %1000 = vmatpush1.msra.mxu0 0.0
    %1001 = vmatprep.subr.mxu0 0.0
    %1002 = vmatpush1.msra.mxu0 0.0
    %1003 = vmatprep.subr.mxu0 0.0
    %1004 = vmatpush1.msra.mxu0 0.0
    %1005 = vmatprep.subr.mxu0 0.0
    %1006 = vmatpush1.msra.mxu0 0.0
    %1007 = vmatprep.mubr.f32.mxu0 0.0
    %v1008 = vand.u32 %v139, 4294901760
    %1009 = vmatmul.mubr.f32.gmra.mrb[0].mxu0 %v1008
    %v1010 = vpop.f32.mrb[0].mxu0
    %v1011 = vadd.f32 %v812, %v1010
    %v1012 = vpop.f32.mrb[0].mxu0
    %1013 = vmatprep.mubr.f32.mxu0 0.0
    %v1014 = vand.u32 %v140, 4294901760
    %1015 = vmatmul.mubr.f32.gmra.mrb[0].mxu0 %v1014
    %v1016 = vpop.f32.mrb[0].mxu0
    %v1017 = vadd.f32 %v820, %v1016
    %v1018 = vpop.f32.mrb[0].mxu0
    %1019 = vmatprep.mubr.f32.mxu0 0.0
    %v1020 = vand.u32 %v141, 4294901760
    %1021 = vmatmul.mubr.f32.gmra.mrb[0].mxu0 %v1020
    %v1022 = vpop.f32.mrb[0].mxu0
    %v1023 = vadd.f32 %v828, %v1022
    %v1024 = vpop.f32.mrb[0].mxu0
    %1025 = vmatprep.mubr.f32.mxu0 0.0
    %v1026 = vand.u32 %v142, 4294901760
    %1027 = vmatmul.mubr.f32.gmra.mrb[0].mxu0 %v1026
    %v1028 = vpop.f32.mrb[0].mxu0
    %v1029 = vadd.f32 %v836, %v1028
    %v1030 = vpop.f32.mrb[0].mxu0
    %1031 = vmatprep.mubr.f32.mxu0 0.0
    %v1032 = vand.u32 %v143, 4294901760
    %1033 = vmatmul.mubr.f32.gmra.mrb[0].mxu0 %v1032
    %v1034 = vpop.f32.mrb[0].mxu0
    %v1035 = vadd.f32 %v844, %v1034
    %v1036 = vpop.f32.mrb[0].mxu0
    %1037 = vmatprep.mubr.f32.mxu0 0.0
    %v1038 = vand.u32 %v144, 4294901760
    %1039 = vmatmul.mubr.f32.gmra.mrb[0].mxu0 %v1038
    %v1040 = vpop.f32.mrb[0].mxu0
    %v1041 = vadd.f32 %v852, %v1040
    %v1042 = vpop.f32.mrb[0].mxu0
    %1043 = vmatprep.mubr.f32.mxu0 0.0
    %v1044 = vand.u32 %v145, 4294901760
    %1045 = vmatmul.mubr.f32.gmra.mrb[0].mxu0 %v1044
    %v1046 = vpop.f32.mrb[0].mxu0
    %v1047 = vadd.f32 %v860, %v1046
    %v1048 = vpop.f32.mrb[0].mxu0
    %1049 = vmatprep.mubr.f32.mxu0 0.0
    %v1050 = vand.u32 %v146, 4294901760
    %1051 = vmatmul.mubr.f32.gmra.mrb[0].mxu0 %v1050
    %v1052 = vpop.f32.mrb[0].mxu0
    %v1053 = vadd.f32 %v868, %v1052
    %v1054 = vpop.f32.mrb[0].mxu0
    %1055 = vmatprep.mubr.f32.mxu0 0.0
    %v1056 = vand.u32 %v147, 4294901760
    %1057 = vmatmul.mubr.f32.gmra.mrb[0].mxu0 %v1056
    %v1058 = vpop.f32.mrb[0].mxu0
    %v1059 = vadd.f32 %v876, %v1058
    %v1060 = vpop.f32.mrb[0].mxu0
    %1061 = vmatprep.mubr.f32.mxu0 0.0
    %v1062 = vand.u32 %v148, 4294901760
    %1063 = vmatmul.mubr.f32.gmra.mrb[0].mxu0 %v1062
    %v1064 = vpop.f32.mrb[0].mxu0
    %v1065 = vadd.f32 %v884, %v1064
    %v1066 = vpop.f32.mrb[0].mxu0
    %1067 = vmatprep.mubr.f32.mxu0 0.0
    %v1068 = vand.u32 %v149, 4294901760
    %1069 = vmatmul.mubr.f32.gmra.mrb[0].mxu0 %v1068
    %v1070 = vpop.f32.mrb[0].mxu0
    %v1071 = vadd.f32 %v892, %v1070
    %v1072 = vpop.f32.mrb[0].mxu0
    %1073 = vdwg.mxu0
    %1074 = vmatprep.subr.mxu0 0.0
    %v1075 = vand.u32 %v123, 4294901760
    %1076 = vmatpush1.msra.mxu0 %v1075
    %1077 = vmatprep.subr.mxu0 0.0
    %v1078 = vand.u32 %v124, 4294901760
    %1079 = vmatpush1.msra.mxu0 %v1078
    %1080 = vmatprep.subr.mxu0 0.0
    %v1081 = vand.u32 %v125, 4294901760
    %1082 = vmatpush1.msra.mxu0 %v1081
    %1083 = vmatprep.subr.mxu0 0.0
    %v1084 = vand.u32 %v126, 4294901760
    %1085 = vmatpush1.msra.mxu0 %v1084
    %1086 = vmatprep.subr.mxu0 0.0
    %v1087 = vand.u32 %v127, 4294901760
    %1088 = vmatpush1.msra.mxu0 %v1087
    %1089 = vmatprep.subr.mxu0 0.0
    %v1090 = vand.u32 %v128, 4294901760
    %1091 = vmatpush1.msra.mxu0 %v1090
    %1092 = vmatprep.subr.mxu0 0.0
    %v1093 = vand.u32 %v129, 4294901760
    %1094 = vmatpush1.msra.mxu0 %v1093
    %1095 = vmatprep.subr.mxu0 0.0
    %v1096 = vand.u32 %v130, 4294901760
    %1097 = vmatpush1.msra.mxu0 %v1096
    %1098 = vmatprep.subr.mxu0 0.0
    %v1099 = vand.u32 %v131, 4294901760
    %1100 = vmatpush1.msra.mxu0 %v1099
    %1101 = vmatprep.subr.mxu0 0.0
    %v1102 = vand.u32 %v132, 4294901760
    %1103 = vmatpush1.msra.mxu0 %v1102
    %1104 = vmatprep.subr.mxu0 0.0
    %v1105 = vand.u32 %v133, 4294901760
    %1106 = vmatpush1.msra.mxu0 %v1105
    %1107 = vmatprep.subr.mxu0 0.0
    %v1108 = vand.u32 %v134, 4294901760
    %1109 = vmatpush1.msra.mxu0 %v1108
    %1110 = vmatprep.subr.mxu0 0.0
    %v1111 = vand.u32 %v135, 4294901760
    %1112 = vmatpush1.msra.mxu0 %v1111
    %1113 = vmatprep.subr.mxu0 0.0
    %v1114 = vand.u32 %v136, 4294901760
    %1115 = vmatpush1.msra.mxu0 %v1114
    %1116 = vmatprep.subr.mxu0 0.0
    %v1117 = vand.u32 %v137, 4294901760
    %1118 = vmatpush1.msra.mxu0 %v1117
    %1119 = vmatprep.subr.mxu0 0.0
    %v1120 = vand.u32 %v138, 4294901760
    %1121 = vmatpush1.msra.mxu0 %v1120
    %1122 = vmatprep.subr.mxu0 0.0
    %1123 = vmatpush1.msra.mxu0 0.0
    %1124 = vmatprep.subr.mxu0 0.0
    %1125 = vmatpush1.msra.mxu0 0.0
    %1126 = vmatprep.subr.mxu0 0.0
    %1127 = vmatpush1.msra.mxu0 0.0
    %1128 = vmatprep.subr.mxu0 0.0
    %1129 = vmatpush1.msra.mxu0 0.0
    %1130 = vmatprep.subr.mxu0 0.0
    %1131 = vmatpush1.msra.mxu0 0.0
    %1132 = vmatprep.subr.mxu0 0.0
    %1133 = vmatpush1.msra.mxu0 0.0
    %1134 = vmatprep.subr.mxu0 0.0
    %1135 = vmatpush1.msra.mxu0 0.0
    %1136 = vmatprep.subr.mxu0 0.0
    %1137 = vmatpush1.msra.mxu0 0.0
    %1138 = vmatprep.subr.mxu0 0.0
    %1139 = vmatpush1.msra.mxu0 0.0
    %1140 = vmatprep.subr.mxu0 0.0
    %1141 = vmatpush1.msra.mxu0 0.0
    %1142 = vmatprep.subr.mxu0 0.0
    %1143 = vmatpush1.msra.mxu0 0.0
    %1144 = vmatprep.subr.mxu0 0.0
    %1145 = vmatpush1.msra.mxu0 0.0
    %1146 = vmatprep.subr.mxu0 0.0
    %1147 = vmatpush1.msra.mxu0 0.0
    %1148 = vmatprep.subr.mxu0 0.0
    %1149 = vmatpush1.msra.mxu0 0.0
    %1150 = vmatprep.subr.mxu0 0.0
    %1151 = vmatpush1.msra.mxu0 0.0
    %1152 = vmatprep.subr.mxu0 0.0
    %1153 = vmatpush1.msra.mxu0 0.0
    %1154 = vmatprep.mubr.f32.mxu0 0.0
    %v1155 = vand.u32 %v139, 4294901760
    %1156 = vmatmul.mubr.f32.gmra.mrb[0].mxu0 %v1155
    %v1157 = vpop.f32.mrb[0].mxu0
    %v1158 = vadd.f32 %v1011, %v1157
    %v1159 = vpop.f32.mrb[0].mxu0
    %1160 = vmatprep.mubr.f32.mxu0 0.0
    %v1161 = vand.u32 %v140, 4294901760
    %1162 = vmatmul.mubr.f32.gmra.mrb[0].mxu0 %v1161
    %v1163 = vpop.f32.mrb[0].mxu0
    %v1164 = vadd.f32 %v1017, %v1163
    %v1165 = vpop.f32.mrb[0].mxu0
    %1166 = vmatprep.mubr.f32.mxu0 0.0
    %v1167 = vand.u32 %v141, 4294901760
    %1168 = vmatmul.mubr.f32.gmra.mrb[0].mxu0 %v1167
    %v1169 = vpop.f32.mrb[0].mxu0
    %v1170 = vadd.f32 %v1023, %v1169
    %v1171 = vpop.f32.mrb[0].mxu0
    %1172 = vmatprep.mubr.f32.mxu0 0.0
    %v1173 = vand.u32 %v142, 4294901760
    %1174 = vmatmul.mubr.f32.gmra.mrb[0].mxu0 %v1173
    %v1175 = vpop.f32.mrb[0].mxu0
    %v1176 = vadd.f32 %v1029, %v1175
    %v1177 = vpop.f32.mrb[0].mxu0
    %1178 = vmatprep.mubr.f32.mxu0 0.0
    %v1179 = vand.u32 %v143, 4294901760
    %1180 = vmatmul.mubr.f32.gmra.mrb[0].mxu0 %v1179
    %v1181 = vpop.f32.mrb[0].mxu0
    %v1182 = vadd.f32 %v1035, %v1181
    %v1183 = vpop.f32.mrb[0].mxu0
    %1184 = vmatprep.mubr.f32.mxu0 0.0
    %v1185 = vand.u32 %v144, 4294901760
    %1186 = vmatmul.mubr.f32.gmra.mrb[0].mxu0 %v1185
    %v1187 = vpop.f32.mrb[0].mxu0
    %v1188 = vadd.f32 %v1041, %v1187
    %v1189 = vpop.f32.mrb[0].mxu0
    %1190 = vmatprep.mubr.f32.mxu0 0.0
    %v1191 = vand.u32 %v145, 4294901760
    %1192 = vmatmul.mubr.f32.gmra.mrb[0].mxu0 %v1191
    %v1193 = vpop.f32.mrb[0].mxu0
    %v1194 = vadd.f32 %v1047, %v1193
    %v1195 = vpop.f32.mrb[0].mxu0
    %1196 = vmatprep.mubr.f32.mxu0 0.0
    %v1197 = vand.u32 %v146, 4294901760
    %1198 = vmatmul.mubr.f32.gmra.mrb[0].mxu0 %v1197
    %v1199 = vpop.f32.mrb[0].mxu0
    %v1200 = vadd.f32 %v1053, %v1199
    %v1201 = vpop.f32.mrb[0].mxu0
    %1202 = vmatprep.mubr.f32.mxu0 0.0
    %v1203 = vand.u32 %v147, 4294901760
    %1204 = vmatmul.mubr.f32.gmra.mrb[0].mxu0 %v1203
    %v1205 = vpop.f32.mrb[0].mxu0
    %v1206 = vadd.f32 %v1059, %v1205
    %v1207 = vpop.f32.mrb[0].mxu0
    %1208 = vmatprep.mubr.f32.mxu0 0.0
    %v1209 = vand.u32 %v148, 4294901760
    %1210 = vmatmul.mubr.f32.gmra.mrb[0].mxu0 %v1209
    %v1211 = vpop.f32.mrb[0].mxu0
    %v1212 = vadd.f32 %v1065, %v1211
    %v1213 = vpop.f32.mrb[0].mxu0
    %1214 = vmatprep.mubr.f32.mxu0 0.0
    %v1215 = vand.u32 %v149, 4294901760
    %1216 = vmatmul.mubr.f32.gmra.mrb[0].mxu0 %v1215
    %v1217 = vpop.f32.mrb[0].mxu0
    %v1218 = vadd.f32 %v1071, %v1217
    %v1219 = vpop.f32.mrb[0].mxu0
    %1220 = vdwg.mxu0
    %v1221 = vld [vmem:[%s5] sm:$0x1]
    %v1222 = vlaneseq
    %v1223 = vshrl.u32 %v1222, 7
    %v1224 = vsub.s32 0, %v1223
    %v1225 = vrot.slane %v1221, %v1224
    %vm1226 = vcmp.eq.s32.totalorder %v70, %v1225
    %vm1227 = vcmp.eq.s32.totalorder %v71, %v1225
    %vm1228 = vcmp.eq.s32.totalorder %v72, %v1225
    %vm1229 = vcmp.eq.s32.totalorder %v73, %v1225
    %vm1230 = vcmp.eq.s32.totalorder %v74, %v1225
    %vm1231 = vcmp.eq.s32.totalorder %v75, %v1225
    %vm1232 = vcmp.eq.s32.totalorder %v76, %v1225
    %vm1233 = vcmp.eq.s32.totalorder %v77, %v1225
    %vm1234 = vcmp.eq.s32.totalorder %v78, %v1225
    %vm1235 = vcmp.eq.s32.totalorder %v79, %v1225
    %vm1236 = vcmp.eq.s32.totalorder %v80, %v1225
    %vm1237 = vcmp.eq.s32.totalorder %v81, %v1225
    %vm1238 = vcmp.eq.s32.totalorder %v82, %v1225
    %vm1239 = vcmp.eq.s32.totalorder %v83, %v1225
    %vm1240 = vcmp.eq.s32.totalorder %v84, %v1225
    %vm1241 = vcmp.eq.s32.totalorder %v85, %v1225
    %v1242 = vsel %vm1226, 1, 0
    %v1243 = vsel %vm1227, 1, 0
    %v1244 = vsel %vm1228, 1, 0
    %v1245 = vsel %vm1229, 1, 0
    %v1246 = vsel %vm1230, 1, 0
    %v1247 = vsel %vm1231, 1, 0
    %v1248 = vsel %vm1232, 1, 0
    %v1249 = vsel %vm1233, 1, 0
    %v1250 = vsel %vm1234, 1, 0
    %v1251 = vsel %vm1235, 1, 0
    %v1252 = vsel %vm1236, 1, 0
    %v1253 = vsel %vm1237, 1, 0
    %v1254 = vsel %vm1238, 1, 0
    %v1255 = vsel %vm1239, 1, 0
    %v1256 = vsel %vm1240, 1, 0
    %v1257 = vsel %vm1241, 1, 0
    %v1258 = vcvt.s32.f32 %v1242
    %v1259 = vcvt.s32.f32 %v1243
    %v1260 = vcvt.s32.f32 %v1244
    %v1261 = vcvt.s32.f32 %v1245
    %v1262 = vcvt.s32.f32 %v1246
    %v1263 = vcvt.s32.f32 %v1247
    %v1264 = vcvt.s32.f32 %v1248
    %v1265 = vcvt.s32.f32 %v1249
    %v1266 = vcvt.s32.f32 %v1250
    %v1267 = vcvt.s32.f32 %v1251
    %v1268 = vcvt.s32.f32 %v1252
    %v1269 = vcvt.s32.f32 %v1253
    %v1270 = vcvt.s32.f32 %v1254
    %v1271 = vcvt.s32.f32 %v1255
    %v1272 = vcvt.s32.f32 %v1256
    %v1273 = vcvt.s32.f32 %v1257
    %v1274 = vld [vmem:[#allocation6] sm:$0xff]
    %v1275 = vld [vmem:[#allocation6 + $0x8] sm:$0xff]
    %v1276 = vld [vmem:[#allocation6 + $0x10] sm:$0xff]
    %v1277 = vld [vmem:[#allocation6 + $0x18] sm:$0xff]
    %v1278 = vld [vmem:[#allocation6 + $0x20] sm:$0xff]
    %v1279 = vld [vmem:[#allocation6 + $0x28] sm:$0xff]
    %v1280 = vld [vmem:[#allocation6 + $0x30] sm:$0xff]
    %v1281 = vld [vmem:[#allocation6 + $0x38] sm:$0xff]
    %v1282 = vld [vmem:[#allocation6 + $0x40] sm:$0xff]
    %v1283 = vld [vmem:[#allocation6 + $0x48] sm:$0xff]
    %v1284 = vld [vmem:[#allocation6 + $0x50] sm:$0x1f]
    %1285 = vmatprep.subr.mxu0 0.0
    %v1286 = vand.u32 %v1258, 4294901760
    %1287 = vmatpush1.msra.mxu0 %v1286
    %1288 = vmatprep.subr.mxu0 0.0
    %v1289 = vand.u32 %v1259, 4294901760
    %1290 = vmatpush1.msra.mxu0 %v1289
    %1291 = vmatprep.subr.mxu0 0.0
    %v1292 = vand.u32 %v1260, 4294901760
    %1293 = vmatpush1.msra.mxu0 %v1292
    %1294 = vmatprep.subr.mxu0 0.0
    %v1295 = vand.u32 %v1261, 4294901760
    %1296 = vmatpush1.msra.mxu0 %v1295
    %1297 = vmatprep.subr.mxu0 0.0
    %v1298 = vand.u32 %v1262, 4294901760
    %1299 = vmatpush1.msra.mxu0 %v1298
    %1300 = vmatprep.subr.mxu0 0.0
    %v1301 = vand.u32 %v1263, 4294901760
    %1302 = vmatpush1.msra.mxu0 %v1301
    %1303 = vmatprep.subr.mxu0 0.0
    %v1304 = vand.u32 %v1264, 4294901760
    %1305 = vmatpush1.msra.mxu0 %v1304
    %1306 = vmatprep.subr.mxu0 0.0
    %v1307 = vand.u32 %v1265, 4294901760
    %1308 = vmatpush1.msra.mxu0 %v1307
    %1309 = vmatprep.subr.mxu0 0.0
    %v1310 = vand.u32 %v1266, 4294901760
    %1311 = vmatpush1.msra.mxu0 %v1310
    %1312 = vmatprep.subr.mxu0 0.0
    %v1313 = vand.u32 %v1267, 4294901760
    %1314 = vmatpush1.msra.mxu0 %v1313
    %1315 = vmatprep.subr.mxu0 0.0
    %v1316 = vand.u32 %v1268, 4294901760
    %1317 = vmatpush1.msra.mxu0 %v1316
    %1318 = vmatprep.subr.mxu0 0.0
    %v1319 = vand.u32 %v1269, 4294901760
    %1320 = vmatpush1.msra.mxu0 %v1319
    %1321 = vmatprep.subr.mxu0 0.0
    %v1322 = vand.u32 %v1270, 4294901760
    %1323 = vmatpush1.msra.mxu0 %v1322
    %1324 = vmatprep.subr.mxu0 0.0
    %v1325 = vand.u32 %v1271, 4294901760
    %1326 = vmatpush1.msra.mxu0 %v1325
    %1327 = vmatprep.subr.mxu0 0.0
    %v1328 = vand.u32 %v1272, 4294901760
    %1329 = vmatpush1.msra.mxu0 %v1328
    %1330 = vmatprep.subr.mxu0 0.0
    %v1331 = vand.u32 %v1273, 4294901760
    %1332 = vmatpush1.msra.mxu0 %v1331
    %1333 = vmatprep.subr.mxu0 0.0
    %1334 = vmatpush1.msra.mxu0 0.0
    %1335 = vmatprep.subr.mxu0 0.0
    %1336 = vmatpush1.msra.mxu0 0.0
    %1337 = vmatprep.subr.mxu0 0.0
    %1338 = vmatpush1.msra.mxu0 0.0
    %1339 = vmatprep.subr.mxu0 0.0
    %1340 = vmatpush1.msra.mxu0 0.0
    %1341 = vmatprep.subr.mxu0 0.0
    %1342 = vmatpush1.msra.mxu0 0.0
    %1343 = vmatprep.subr.mxu0 0.0
    %1344 = vmatpush1.msra.mxu0 0.0
    %1345 = vmatprep.subr.mxu0 0.0
    %1346 = vmatpush1.msra.mxu0 0.0
    %1347 = vmatprep.subr.mxu0 0.0
    %1348 = vmatpush1.msra.mxu0 0.0
    %1349 = vmatprep.subr.mxu0 0.0
    %1350 = vmatpush1.msra.mxu0 0.0
    %1351 = vmatprep.subr.mxu0 0.0
    %1352 = vmatpush1.msra.mxu0 0.0
    %1353 = vmatprep.subr.mxu0 0.0
    %1354 = vmatpush1.msra.mxu0 0.0
    %1355 = vmatprep.subr.mxu0 0.0
    %1356 = vmatpush1.msra.mxu0 0.0
    %1357 = vmatprep.subr.mxu0 0.0
    %1358 = vmatpush1.msra.mxu0 0.0
    %1359 = vmatprep.subr.mxu0 0.0
    %1360 = vmatpush1.msra.mxu0 0.0
    %1361 = vmatprep.subr.mxu0 0.0
    %1362 = vmatpush1.msra.mxu0 0.0
    %1363 = vmatprep.subr.mxu0 0.0
    %1364 = vmatpush1.msra.mxu0 0.0
    %1365 = vmatprep.mubr.f32.mxu0 0.0
    %v1366 = vand.u32 %v1274, 4294901760
    %v1367 = vsub.f32 %v1274, %v1366
    %v1368 = vand.u32 %v1367, 4294901760
    %v1369 = vsub.f32 %v1367, %v1368
    %v1370 = vand.u32 %v1369, 4294901760
    %1371 = vmatmul.mubr.f32.gmra.mrb[0].mxu0 %v1370
    %v1372 = vpop.f32.mrb[0].mxu0
    %v1373 = vadd.f32 0.0, %v1372
    %v1374 = vpop.f32.mrb[0].mxu0
    %1375 = vmatprep.mubr.f32.mxu0 0.0
    %v1376 = vand.u32 %v1275, 4294901760
    %v1377 = vsub.f32 %v1275, %v1376
    %v1378 = vand.u32 %v1377, 4294901760
    %v1379 = vsub.f32 %v1377, %v1378
    %v1380 = vand.u32 %v1379, 4294901760
    %1381 = vmatmul.mubr.f32.gmra.mrb[0].mxu0 %v1380
    %v1382 = vpop.f32.mrb[0].mxu0
    %v1383 = vadd.f32 0.0, %v1382
    %v1384 = vpop.f32.mrb[0].mxu0
    %1385 = vmatprep.mubr.f32.mxu0 0.0
    %v1386 = vand.u32 %v1276, 4294901760
    %v1387 = vsub.f32 %v1276, %v1386
    %v1388 = vand.u32 %v1387, 4294901760
    %v1389 = vsub.f32 %v1387, %v1388
    %v1390 = vand.u32 %v1389, 4294901760
    %1391 = vmatmul.mubr.f32.gmra.mrb[0].mxu0 %v1390
    %v1392 = vpop.f32.mrb[0].mxu0
    %v1393 = vadd.f32 0.0, %v1392
    %v1394 = vpop.f32.mrb[0].mxu0
    %1395 = vmatprep.mubr.f32.mxu0 0.0
    %v1396 = vand.u32 %v1277, 4294901760
    %v1397 = vsub.f32 %v1277, %v1396
    %v1398 = vand.u32 %v1397, 4294901760
    %v1399 = vsub.f32 %v1397, %v1398
    %v1400 = vand.u32 %v1399, 4294901760
    %1401 = vmatmul.mubr.f32.gmra.mrb[0].mxu0 %v1400
    %v1402 = vpop.f32.mrb[0].mxu0
    %v1403 = vadd.f32 0.0, %v1402
    %v1404 = vpop.f32.mrb[0].mxu0
    %1405 = vmatprep.mubr.f32.mxu0 0.0
    %v1406 = vand.u32 %v1278, 4294901760
    %v1407 = vsub.f32 %v1278, %v1406
    %v1408 = vand.u32 %v1407, 4294901760
    %v1409 = vsub.f32 %v1407, %v1408
    %v1410 = vand.u32 %v1409, 4294901760
    %1411 = vmatmul.mubr.f32.gmra.mrb[0].mxu0 %v1410
    %v1412 = vpop.f32.mrb[0].mxu0
    %v1413 = vadd.f32 0.0, %v1412
    %v1414 = vpop.f32.mrb[0].mxu0
    %1415 = vmatprep.mubr.f32.mxu0 0.0
    %v1416 = vand.u32 %v1279, 4294901760
    %v1417 = vsub.f32 %v1279, %v1416
    %v1418 = vand.u32 %v1417, 4294901760
    %v1419 = vsub.f32 %v1417, %v1418
    %v1420 = vand.u32 %v1419, 4294901760
    %1421 = vmatmul.mubr.f32.gmra.mrb[0].mxu0 %v1420
    %v1422 = vpop.f32.mrb[0].mxu0
    %v1423 = vadd.f32 0.0, %v1422
    %v1424 = vpop.f32.mrb[0].mxu0
    %1425 = vmatprep.mubr.f32.mxu0 0.0
    %v1426 = vand.u32 %v1280, 4294901760
    %v1427 = vsub.f32 %v1280, %v1426
    %v1428 = vand.u32 %v1427, 4294901760
    %v1429 = vsub.f32 %v1427, %v1428
    %v1430 = vand.u32 %v1429, 4294901760
    %1431 = vmatmul.mubr.f32.gmra.mrb[0].mxu0 %v1430
    %v1432 = vpop.f32.mrb[0].mxu0
    %v1433 = vadd.f32 0.0, %v1432
    %v1434 = vpop.f32.mrb[0].mxu0
    %1435 = vmatprep.mubr.f32.mxu0 0.0
    %v1436 = vand.u32 %v1281, 4294901760
    %v1437 = vsub.f32 %v1281, %v1436
    %v1438 = vand.u32 %v1437, 4294901760
    %v1439 = vsub.f32 %v1437, %v1438
    %v1440 = vand.u32 %v1439, 4294901760
    %1441 = vmatmul.mubr.f32.gmra.mrb[0].mxu0 %v1440
    %v1442 = vpop.f32.mrb[0].mxu0
    %v1443 = vadd.f32 0.0, %v1442
    %v1444 = vpop.f32.mrb[0].mxu0
    %1445 = vmatprep.mubr.f32.mxu0 0.0
    %v1446 = vand.u32 %v1282, 4294901760
    %v1447 = vsub.f32 %v1282, %v1446
    %v1448 = vand.u32 %v1447, 4294901760
    %v1449 = vsub.f32 %v1447, %v1448
    %v1450 = vand.u32 %v1449, 4294901760
    %1451 = vmatmul.mubr.f32.gmra.mrb[0].mxu0 %v1450
    %v1452 = vpop.f32.mrb[0].mxu0
    %v1453 = vadd.f32 0.0, %v1452
    %v1454 = vpop.f32.mrb[0].mxu0
    %1455 = vmatprep.mubr.f32.mxu0 0.0
    %v1456 = vand.u32 %v1283, 4294901760
    %v1457 = vsub.f32 %v1283, %v1456
    %v1458 = vand.u32 %v1457, 4294901760
    %v1459 = vsub.f32 %v1457, %v1458
    %v1460 = vand.u32 %v1459, 4294901760
    %1461 = vmatmul.mubr.f32.gmra.mrb[0].mxu0 %v1460
    %v1462 = vpop.f32.mrb[0].mxu0
    %v1463 = vadd.f32 0.0, %v1462
    %v1464 = vpop.f32.mrb[0].mxu0
    %1465 = vmatprep.mubr.f32.mxu0 0.0
    %v1466 = vand.u32 %v1284, 4294901760
    %v1467 = vsub.f32 %v1284, %v1466
    %v1468 = vand.u32 %v1467, 4294901760
    %v1469 = vsub.f32 %v1467, %v1468
    %v1470 = vand.u32 %v1469, 4294901760
    %1471 = vmatmul.mubr.f32.gmra.mrb[0].mxu0 %v1470
    %v1472 = vpop.f32.mrb[0].mxu0
    %v1473 = vadd.f32 0.0, %v1472
    %v1474 = vpop.f32.mrb[0].mxu0
    %1475 = vdwg.mxu0
    %1476 = vmatprep.subr.mxu0 0.0
    %v1477 = vand.u32 %v1258, 4294901760
    %v1478 = vsub.f32 %v1258, %v1477
    %v1479 = vand.u32 %v1478, 4294901760
    %v1480 = vsub.f32 %v1478, %v1479
    %v1481 = vand.u32 %v1480, 4294901760
    %1482 = vmatpush1.msra.mxu0 %v1481
    %1483 = vmatprep.subr.mxu0 0.0
    %v1484 = vand.u32 %v1259, 4294901760
    %v1485 = vsub.f32 %v1259, %v1484
    %v1486 = vand.u32 %v1485, 4294901760
    %v1487 = vsub.f32 %v1485, %v1486
    %v1488 = vand.u32 %v1487, 4294901760
    %1489 = vmatpush1.msra.mxu0 %v1488
    %1490 = vmatprep.subr.mxu0 0.0
    %v1491 = vand.u32 %v1260, 4294901760
    %v1492 = vsub.f32 %v1260, %v1491
    %v1493 = vand.u32 %v1492, 4294901760
    %v1494 = vsub.f32 %v1492, %v1493
    %v1495 = vand.u32 %v1494, 4294901760
    %1496 = vmatpush1.msra.mxu0 %v1495
    %1497 = vmatprep.subr.mxu0 0.0
    %v1498 = vand.u32 %v1261, 4294901760
    %v1499 = vsub.f32 %v1261, %v1498
    %v1500 = vand.u32 %v1499, 4294901760
    %v1501 = vsub.f32 %v1499, %v1500
    %v1502 = vand.u32 %v1501, 4294901760
    %1503 = vmatpush1.msra.mxu0 %v1502
    %1504 = vmatprep.subr.mxu0 0.0
    %v1505 = vand.u32 %v1262, 4294901760
    %v1506 = vsub.f32 %v1262, %v1505
    %v1507 = vand.u32 %v1506, 4294901760
    %v1508 = vsub.f32 %v1506, %v1507
    %v1509 = vand.u32 %v1508, 4294901760
    %1510 = vmatpush1.msra.mxu0 %v1509
    %1511 = vmatprep.subr.mxu0 0.0
    %v1512 = vand.u32 %v1263, 4294901760
    %v1513 = vsub.f32 %v1263, %v1512
    %v1514 = vand.u32 %v1513, 4294901760
    %v1515 = vsub.f32 %v1513, %v1514
    %v1516 = vand.u32 %v1515, 4294901760
    %1517 = vmatpush1.msra.mxu0 %v1516
    %1518 = vmatprep.subr.mxu0 0.0
    %v1519 = vand.u32 %v1264, 4294901760
    %v1520 = vsub.f32 %v1264, %v1519
    %v1521 = vand.u32 %v1520, 4294901760
    %v1522 = vsub.f32 %v1520, %v1521
    %v1523 = vand.u32 %v1522, 4294901760
    %1524 = vmatpush1.msra.mxu0 %v1523
    %1525 = vmatprep.subr.mxu0 0.0
    %v1526 = vand.u32 %v1265, 4294901760
    %v1527 = vsub.f32 %v1265, %v1526
    %v1528 = vand.u32 %v1527, 4294901760
    %v1529 = vsub.f32 %v1527, %v1528
    %v1530 = vand.u32 %v1529, 4294901760
    %1531 = vmatpush1.msra.mxu0 %v1530
    %1532 = vmatprep.subr.mxu0 0.0
    %v1533 = vand.u32 %v1266, 4294901760
    %v1534 = vsub.f32 %v1266, %v1533
    %v1535 = vand.u32 %v1534, 4294901760
    %v1536 = vsub.f32 %v1534, %v1535
    %v1537 = vand.u32 %v1536, 4294901760
    %1538 = vmatpush1.msra.mxu0 %v1537
    %1539 = vmatprep.subr.mxu0 0.0
    %v1540 = vand.u32 %v1267, 4294901760
    %v1541 = vsub.f32 %v1267, %v1540
    %v1542 = vand.u32 %v1541, 4294901760
    %v1543 = vsub.f32 %v1541, %v1542
    %v1544 = vand.u32 %v1543, 4294901760
    %1545 = vmatpush1.msra.mxu0 %v1544
    %1546 = vmatprep.subr.mxu0 0.0
    %v1547 = vand.u32 %v1268, 4294901760
    %v1548 = vsub.f32 %v1268, %v1547
    %v1549 = vand.u32 %v1548, 4294901760
    %v1550 = vsub.f32 %v1548, %v1549
    %v1551 = vand.u32 %v1550, 4294901760
    %1552 = vmatpush1.msra.mxu0 %v1551
    %1553 = vmatprep.subr.mxu0 0.0
    %v1554 = vand.u32 %v1269, 4294901760
    %v1555 = vsub.f32 %v1269, %v1554
    %v1556 = vand.u32 %v1555, 4294901760
    %v1557 = vsub.f32 %v1555, %v1556
    %v1558 = vand.u32 %v1557, 4294901760
    %1559 = vmatpush1.msra.mxu0 %v1558
    %1560 = vmatprep.subr.mxu0 0.0
    %v1561 = vand.u32 %v1270, 4294901760
    %v1562 = vsub.f32 %v1270, %v1561
    %v1563 = vand.u32 %v1562, 4294901760
    %v1564 = vsub.f32 %v1562, %v1563
    %v1565 = vand.u32 %v1564, 4294901760
    %1566 = vmatpush1.msra.mxu0 %v1565
    %1567 = vmatprep.subr.mxu0 0.0
    %v1568 = vand.u32 %v1271, 4294901760
    %v1569 = vsub.f32 %v1271, %v1568
    %v1570 = vand.u32 %v1569, 4294901760
    %v1571 = vsub.f32 %v1569, %v1570
    %v1572 = vand.u32 %v1571, 4294901760
    %1573 = vmatpush1.msra.mxu0 %v1572
    %1574 = vmatprep.subr.mxu0 0.0
    %v1575 = vand.u32 %v1272, 4294901760
    %v1576 = vsub.f32 %v1272, %v1575
    %v1577 = vand.u32 %v1576, 4294901760
    %v1578 = vsub.f32 %v1576, %v1577
    %v1579 = vand.u32 %v1578, 4294901760
    %1580 = vmatpush1.msra.mxu0 %v1579
    %1581 = vmatprep.subr.mxu0 0.0
    %v1582 = vand.u32 %v1273, 4294901760
    %v1583 = vsub.f32 %v1273, %v1582
    %v1584 = vand.u32 %v1583, 4294901760
    %v1585 = vsub.f32 %v1583, %v1584
    %v1586 = vand.u32 %v1585, 4294901760
    %1587 = vmatpush1.msra.mxu0 %v1586
    %1588 = vmatprep.subr.mxu0 0.0
    %1589 = vmatpush1.msra.mxu0 0.0
    %1590 = vmatprep.subr.mxu0 0.0
    %1591 = vmatpush1.msra.mxu0 0.0
    %1592 = vmatprep.subr.mxu0 0.0
    %1593 = vmatpush1.msra.mxu0 0.0
    %1594 = vmatprep.subr.mxu0 0.0
    %1595 = vmatpush1.msra.mxu0 0.0
    %1596 = vmatprep.subr.mxu0 0.0
    %1597 = vmatpush1.msra.mxu0 0.0
    %1598 = vmatprep.subr.mxu0 0.0
    %1599 = vmatpush1.msra.mxu0 0.0
    %1600 = vmatprep.subr.mxu0 0.0
    %1601 = vmatpush1.msra.mxu0 0.0
    %1602 = vmatprep.subr.mxu0 0.0
    %1603 = vmatpush1.msra.mxu0 0.0
    %1604 = vmatprep.subr.mxu0 0.0
    %1605 = vmatpush1.msra.mxu0 0.0
    %1606 = vmatprep.subr.mxu0 0.0
    %1607 = vmatpush1.msra.mxu0 0.0
    %1608 = vmatprep.subr.mxu0 0.0
    %1609 = vmatpush1.msra.mxu0 0.0
    %1610 = vmatprep.subr.mxu0 0.0
    %1611 = vmatpush1.msra.mxu0 0.0
    %1612 = vmatprep.subr.mxu0 0.0
    %1613 = vmatpush1.msra.mxu0 0.0
    %1614 = vmatprep.subr.mxu0 0.0
    %1615 = vmatpush1.msra.mxu0 0.0
    %1616 = vmatprep.subr.mxu0 0.0
    %1617 = vmatpush1.msra.mxu0 0.0
    %1618 = vmatprep.subr.mxu0 0.0
    %1619 = vmatpush1.msra.mxu0 0.0
    %1620 = vmatprep.mubr.f32.mxu0 0.0
    %v1621 = vand.u32 %v1274, 4294901760
    %1622 = vmatmul.mubr.f32.gmra.mrb[0].mxu0 %v1621
    %v1623 = vpop.f32.mrb[0].mxu0
    %v1624 = vadd.f32 %v1373, %v1623
    %v1625 = vpop.f32.mrb[0].mxu0
    %1626 = vmatprep.mubr.f32.mxu0 0.0
    %v1627 = vand.u32 %v1275, 4294901760
    %1628 = vmatmul.mubr.f32.gmra.mrb[0].mxu0 %v1627
    %v1629 = vpop.f32.mrb[0].mxu0
    %v1630 = vadd.f32 %v1383, %v1629
    %v1631 = vpop.f32.mrb[0].mxu0
    %1632 = vmatprep.mubr.f32.mxu0 0.0
    %v1633 = vand.u32 %v1276, 4294901760
    %1634 = vmatmul.mubr.f32.gmra.mrb[0].mxu0 %v1633
    %v1635 = vpop.f32.mrb[0].mxu0
    %v1636 = vadd.f32 %v1393, %v1635
    %v1637 = vpop.f32.mrb[0].mxu0
    %1638 = vmatprep.mubr.f32.mxu0 0.0
    %v1639 = vand.u32 %v1277, 4294901760
    %1640 = vmatmul.mubr.f32.gmra.mrb[0].mxu0 %v1639
    %v1641 = vpop.f32.mrb[0].mxu0
    %v1642 = vadd.f32 %v1403, %v1641
    %v1643 = vpop.f32.mrb[0].mxu0
    %1644 = vmatprep.mubr.f32.mxu0 0.0
    %v1645 = vand.u32 %v1278, 4294901760
    %1646 = vmatmul.mubr.f32.gmra.mrb[0].mxu0 %v1645
    %v1647 = vpop.f32.mrb[0].mxu0
    %v1648 = vadd.f32 %v1413, %v1647
    %v1649 = vpop.f32.mrb[0].mxu0
    %1650 = vmatprep.mubr.f32.mxu0 0.0
    %v1651 = vand.u32 %v1279, 4294901760
    %1652 = vmatmul.mubr.f32.gmra.mrb[0].mxu0 %v1651
    %v1653 = vpop.f32.mrb[0].mxu0
    %v1654 = vadd.f32 %v1423, %v1653
    %v1655 = vpop.f32.mrb[0].mxu0
    %1656 = vmatprep.mubr.f32.mxu0 0.0
    %v1657 = vand.u32 %v1280, 4294901760
    %1658 = vmatmul.mubr.f32.gmra.mrb[0].mxu0 %v1657
    %v1659 = vpop.f32.mrb[0].mxu0
    %v1660 = vadd.f32 %v1433, %v1659
    %v1661 = vpop.f32.mrb[0].mxu0
    %1662 = vmatprep.mubr.f32.mxu0 0.0
    %v1663 = vand.u32 %v1281, 4294901760
    %1664 = vmatmul.mubr.f32.gmra.mrb[0].mxu0 %v1663
    %v1665 = vpop.f32.mrb[0].mxu0
    %v1666 = vadd.f32 %v1443, %v1665
    %v1667 = vpop.f32.mrb[0].mxu0
    %1668 = vmatprep.mubr.f32.mxu0 0.0
    %v1669 = vand.u32 %v1282, 4294901760
    %1670 = vmatmul.mubr.f32.gmra.mrb[0].mxu0 %v1669
    %v1671 = vpop.f32.mrb[0].mxu0
    %v1672 = vadd.f32 %v1453, %v1671
    %v1673 = vpop.f32.mrb[0].mxu0
    %1674 = vmatprep.mubr.f32.mxu0 0.0
    %v1675 = vand.u32 %v1283, 4294901760
    %1676 = vmatmul.mubr.f32.gmra.mrb[0].mxu0 %v1675
    %v1677 = vpop.f32.mrb[0].mxu0
    %v1678 = vadd.f32 %v1463, %v1677
    %v1679 = vpop.f32.mrb[0].mxu0
    %1680 = vmatprep.mubr.f32.mxu0 0.0
    %v1681 = vand.u32 %v1284, 4294901760
    %1682 = vmatmul.mubr.f32.gmra.mrb[0].mxu0 %v1681
    %v1683 = vpop.f32.mrb[0].mxu0
    %v1684 = vadd.f32 %v1473, %v1683
    %v1685 = vpop.f32.mrb[0].mxu0
    %1686 = vdwg.mxu0
    %1687 = vmatprep.subr.mxu0 0.0
    %v1688 = vand.u32 %v1258, 4294901760
    %v1689 = vsub.f32 %v1258, %v1688
    %1690 = vmatpush1.msra.mxu0 %v1689
    %1691 = vmatprep.subr.mxu0 0.0
    %v1692 = vand.u32 %v1259, 4294901760
    %v1693 = vsub.f32 %v1259, %v1692
    %1694 = vmatpush1.msra.mxu0 %v1693
    %1695 = vmatprep.subr.mxu0 0.0
    %v1696 = vand.u32 %v1260, 4294901760
    %v1697 = vsub.f32 %v1260, %v1696
    %1698 = vmatpush1.msra.mxu0 %v1697
    %1699 = vmatprep.subr.mxu0 0.0
    %v1700 = vand.u32 %v1261, 4294901760
    %v1701 = vsub.f32 %v1261, %v1700
    %1702 = vmatpush1.msra.mxu0 %v1701
    %1703 = vmatprep.subr.mxu0 0.0
    %v1704 = vand.u32 %v1262, 4294901760
    %v1705 = vsub.f32 %v1262, %v1704
    %1706 = vmatpush1.msra.mxu0 %v1705
    %1707 = vmatprep.subr.mxu0 0.0
    %v1708 = vand.u32 %v1263, 4294901760
    %v1709 = vsub.f32 %v1263, %v1708
    %1710 = vmatpush1.msra.mxu0 %v1709
    %1711 = vmatprep.subr.mxu0 0.0
    %v1712 = vand.u32 %v1264, 4294901760
    %v1713 = vsub.f32 %v1264, %v1712
    %1714 = vmatpush1.msra.mxu0 %v1713
    %1715 = vmatprep.subr.mxu0 0.0
    %v1716 = vand.u32 %v1265, 4294901760
    %v1717 = vsub.f32 %v1265, %v1716
    %1718 = vmatpush1.msra.mxu0 %v1717
    %1719 = vmatprep.subr.mxu0 0.0
    %v1720 = vand.u32 %v1266, 4294901760
    %v1721 = vsub.f32 %v1266, %v1720
    %1722 = vmatpush1.msra.mxu0 %v1721
    %1723 = vmatprep.subr.mxu0 0.0
    %v1724 = vand.u32 %v1267, 4294901760
    %v1725 = vsub.f32 %v1267, %v1724
    %1726 = vmatpush1.msra.mxu0 %v1725
    %1727 = vmatprep.subr.mxu0 0.0
    %v1728 = vand.u32 %v1268, 4294901760
    %v1729 = vsub.f32 %v1268, %v1728
    %1730 = vmatpush1.msra.mxu0 %v1729
    %1731 = vmatprep.subr.mxu0 0.0
    %v1732 = vand.u32 %v1269, 4294901760
    %v1733 = vsub.f32 %v1269, %v1732
    %1734 = vmatpush1.msra.mxu0 %v1733
    %1735 = vmatprep.subr.mxu0 0.0
    %v1736 = vand.u32 %v1270, 4294901760
    %v1737 = vsub.f32 %v1270, %v1736
    %1738 = vmatpush1.msra.mxu0 %v1737
    %1739 = vmatprep.subr.mxu0 0.0
    %v1740 = vand.u32 %v1271, 4294901760
    %v1741 = vsub.f32 %v1271, %v1740
    %1742 = vmatpush1.msra.mxu0 %v1741
    %1743 = vmatprep.subr.mxu0 0.0
    %v1744 = vand.u32 %v1272, 4294901760
    %v1745 = vsub.f32 %v1272, %v1744
    %1746 = vmatpush1.msra.mxu0 %v1745
    %1747 = vmatprep.subr.mxu0 0.0
    %v1748 = vand.u32 %v1273, 4294901760
    %v1749 = vsub.f32 %v1273, %v1748
    %1750 = vmatpush1.msra.mxu0 %v1749
    %1751 = vmatprep.subr.mxu0 0.0
    %1752 = vmatpush1.msra.mxu0 0.0
    %1753 = vmatprep.subr.mxu0 0.0
    %1754 = vmatpush1.msra.mxu0 0.0
    %1755 = vmatprep.subr.mxu0 0.0
    %1756 = vmatpush1.msra.mxu0 0.0
    %1757 = vmatprep.subr.mxu0 0.0
    %1758 = vmatpush1.msra.mxu0 0.0
    %1759 = vmatprep.subr.mxu0 0.0
    %1760 = vmatpush1.msra.mxu0 0.0
    %1761 = vmatprep.subr.mxu0 0.0
    %1762 = vmatpush1.msra.mxu0 0.0
    %1763 = vmatprep.subr.mxu0 0.0
    %1764 = vmatpush1.msra.mxu0 0.0
    %1765 = vmatprep.subr.mxu0 0.0
    %1766 = vmatpush1.msra.mxu0 0.0
    %1767 = vmatprep.subr.mxu0 0.0
    %1768 = vmatpush1.msra.mxu0 0.0
    %1769 = vmatprep.subr.mxu0 0.0
    %1770 = vmatpush1.msra.mxu0 0.0
    %1771 = vmatprep.subr.mxu0 0.0
    %1772 = vmatpush1.msra.mxu0 0.0
    %1773 = vmatprep.subr.mxu0 0.0
    %1774 = vmatpush1.msra.mxu0 0.0
    %1775 = vmatprep.subr.mxu0 0.0
    %1776 = vmatpush1.msra.mxu0 0.0
    %1777 = vmatprep.subr.mxu0 0.0
    %1778 = vmatpush1.msra.mxu0 0.0
    %1779 = vmatprep.subr.mxu0 0.0
    %1780 = vmatpush1.msra.mxu0 0.0
    %1781 = vmatprep.subr.mxu0 0.0
    %1782 = vmatpush1.msra.mxu0 0.0
    %1783 = vmatprep.mubr.f32.mxu0 0.0
    %v1784 = vand.u32 %v1274, 4294901760
    %v1785 = vsub.f32 %v1274, %v1784
    %1786 = vmatmul.mubr.f32.gmra.mrb[0].mxu0 %v1785
    %v1787 = vpop.f32.mrb[0].mxu0
    %v1788 = vadd.f32 %v1624, %v1787
    %v1789 = vpop.f32.mrb[0].mxu0
    %1790 = vmatprep.mubr.f32.mxu0 0.0
    %v1791 = vand.u32 %v1275, 4294901760
    %v1792 = vsub.f32 %v1275, %v1791
    %1793 = vmatmul.mubr.f32.gmra.mrb[0].mxu0 %v1792
    %v1794 = vpop.f32.mrb[0].mxu0
    %v1795 = vadd.f32 %v1630, %v1794
    %v1796 = vpop.f32.mrb[0].mxu0
    %1797 = vmatprep.mubr.f32.mxu0 0.0
    %v1798 = vand.u32 %v1276, 4294901760
    %v1799 = vsub.f32 %v1276, %v1798
    %1800 = vmatmul.mubr.f32.gmra.mrb[0].mxu0 %v1799
    %v1801 = vpop.f32.mrb[0].mxu0
    %v1802 = vadd.f32 %v1636, %v1801
    %v1803 = vpop.f32.mrb[0].mxu0
    %1804 = vmatprep.mubr.f32.mxu0 0.0
    %v1805 = vand.u32 %v1277, 4294901760
    %v1806 = vsub.f32 %v1277, %v1805
    %1807 = vmatmul.mubr.f32.gmra.mrb[0].mxu0 %v1806
    %v1808 = vpop.f32.mrb[0].mxu0
    %v1809 = vadd.f32 %v1642, %v1808
    %v1810 = vpop.f32.mrb[0].mxu0
    %1811 = vmatprep.mubr.f32.mxu0 0.0
    %v1812 = vand.u32 %v1278, 4294901760
    %v1813 = vsub.f32 %v1278, %v1812
    %1814 = vmatmul.mubr.f32.gmra.mrb[0].mxu0 %v1813
    %v1815 = vpop.f32.mrb[0].mxu0
    %v1816 = vadd.f32 %v1648, %v1815
    %v1817 = vpop.f32.mrb[0].mxu0
    %1818 = vmatprep.mubr.f32.mxu0 0.0
    %v1819 = vand.u32 %v1279, 4294901760
    %v1820 = vsub.f32 %v1279, %v1819
    %1821 = vmatmul.mubr.f32.gmra.mrb[0].mxu0 %v1820
    %v1822 = vpop.f32.mrb[0].mxu0
    %v1823 = vadd.f32 %v1654, %v1822
    %v1824 = vpop.f32.mrb[0].mxu0
    %1825 = vmatprep.mubr.f32.mxu0 0.0
    %v1826 = vand.u32 %v1280, 4294901760
    %v1827 = vsub.f32 %v1280, %v1826
    %1828 = vmatmul.mubr.f32.gmra.mrb[0].mxu0 %v1827
    %v1829 = vpop.f32.mrb[0].mxu0
    %v1830 = vadd.f32 %v1660, %v1829
    %v1831 = vpop.f32.mrb[0].mxu0
    %1832 = vmatprep.mubr.f32.mxu0 0.0
    %v1833 = vand.u32 %v1281, 4294901760
    %v1834 = vsub.f32 %v1281, %v1833
    %1835 = vmatmul.mubr.f32.gmra.mrb[0].mxu0 %v1834
    %v1836 = vpop.f32.mrb[0].mxu0
    %v1837 = vadd.f32 %v1666, %v1836
    %v1838 = vpop.f32.mrb[0].mxu0
    %1839 = vmatprep.mubr.f32.mxu0 0.0
    %v1840 = vand.u32 %v1282, 4294901760
    %v1841 = vsub.f32 %v1282, %v1840
    %1842 = vmatmul.mubr.f32.gmra.mrb[0].mxu0 %v1841
    %v1843 = vpop.f32.mrb[0].mxu0
    %v1844 = vadd.f32 %v1672, %v1843
    %v1845 = vpop.f32.mrb[0].mxu0
    %1846 = vmatprep.mubr.f32.mxu0 0.0
    %v1847 = vand.u32 %v1283, 4294901760
    %v1848 = vsub.f32 %v1283, %v1847
    %1849 = vmatmul.mubr.f32.gmra.mrb[0].mxu0 %v1848
    %v1850 = vpop.f32.mrb[0].mxu0
    %v1851 = vadd.f32 %v1678, %v1850
    %v1852 = vpop.f32.mrb[0].mxu0
    %1853 = vmatprep.mubr.f32.mxu0 0.0
    %v1854 = vand.u32 %v1284, 4294901760
    %v1855 = vsub.f32 %v1284, %v1854
    %1856 = vmatmul.mubr.f32.gmra.mrb[0].mxu0 %v1855
    %v1857 = vpop.f32.mrb[0].mxu0
    %v1858 = vadd.f32 %v1684, %v1857
    %v1859 = vpop.f32.mrb[0].mxu0
    %1860 = vdwg.mxu0
    %1861 = vmatprep.subr.mxu0 0.0
    %v1862 = vand.u32 %v1258, 4294901760
    %1863 = vmatpush1.msra.mxu0 %v1862
    %1864 = vmatprep.subr.mxu0 0.0
    %v1865 = vand.u32 %v1259, 4294901760
    %1866 = vmatpush1.msra.mxu0 %v1865
    %1867 = vmatprep.subr.mxu0 0.0
    %v1868 = vand.u32 %v1260, 4294901760
    %1869 = vmatpush1.msra.mxu0 %v1868
    %1870 = vmatprep.subr.mxu0 0.0
    %v1871 = vand.u32 %v1261, 4294901760
    %1872 = vmatpush1.msra.mxu0 %v1871
    %1873 = vmatprep.subr.mxu0 0.0
    %v1874 = vand.u32 %v1262, 4294901760
    %1875 = vmatpush1.msra.mxu0 %v1874
    %1876 = vmatprep.subr.mxu0 0.0
    %v1877 = vand.u32 %v1263, 4294901760
    %1878 = vmatpush1.msra.mxu0 %v1877
    %1879 = vmatprep.subr.mxu0 0.0
    %v1880 = vand.u32 %v1264, 4294901760
    %1881 = vmatpush1.msra.mxu0 %v1880
    %1882 = vmatprep.subr.mxu0 0.0
    %v1883 = vand.u32 %v1265, 4294901760
    %1884 = vmatpush1.msra.mxu0 %v1883
    %1885 = vmatprep.subr.mxu0 0.0
    %v1886 = vand.u32 %v1266, 4294901760
    %1887 = vmatpush1.msra.mxu0 %v1886
    %1888 = vmatprep.subr.mxu0 0.0
    %v1889 = vand.u32 %v1267, 4294901760
    %1890 = vmatpush1.msra.mxu0 %v1889
    %1891 = vmatprep.subr.mxu0 0.0
    %v1892 = vand.u32 %v1268, 4294901760
    %1893 = vmatpush1.msra.mxu0 %v1892
    %1894 = vmatprep.subr.mxu0 0.0
    %v1895 = vand.u32 %v1269, 4294901760
    %1896 = vmatpush1.msra.mxu0 %v1895
    %1897 = vmatprep.subr.mxu0 0.0
    %v1898 = vand.u32 %v1270, 4294901760
    %1899 = vmatpush1.msra.mxu0 %v1898
    %1900 = vmatprep.subr.mxu0 0.0
    %v1901 = vand.u32 %v1271, 4294901760
    %1902 = vmatpush1.msra.mxu0 %v1901
    %1903 = vmatprep.subr.mxu0 0.0
    %v1904 = vand.u32 %v1272, 4294901760
    %1905 = vmatpush1.msra.mxu0 %v1904
    %1906 = vmatprep.subr.mxu0 0.0
    %v1907 = vand.u32 %v1273, 4294901760
    %1908 = vmatpush1.msra.mxu0 %v1907
    %1909 = vmatprep.subr.mxu0 0.0
    %1910 = vmatpush1.msra.mxu0 0.0
    %1911 = vmatprep.subr.mxu0 0.0
    %1912 = vmatpush1.msra.mxu0 0.0
    %1913 = vmatprep.subr.mxu0 0.0
    %1914 = vmatpush1.msra.mxu0 0.0
    %1915 = vmatprep.subr.mxu0 0.0
    %1916 = vmatpush1.msra.mxu0 0.0
    %1917 = vmatprep.subr.mxu0 0.0
    %1918 = vmatpush1.msra.mxu0 0.0
    %1919 = vmatprep.subr.mxu0 0.0
    %1920 = vmatpush1.msra.mxu0 0.0
    %1921 = vmatprep.subr.mxu0 0.0
    %1922 = vmatpush1.msra.mxu0 0.0
    %1923 = vmatprep.subr.mxu0 0.0
    %1924 = vmatpush1.msra.mxu0 0.0
    %1925 = vmatprep.subr.mxu0 0.0
    %1926 = vmatpush1.msra.mxu0 0.0
    %1927 = vmatprep.subr.mxu0 0.0
    %1928 = vmatpush1.msra.mxu0 0.0
    %1929 = vmatprep.subr.mxu0 0.0
    %1930 = vmatpush1.msra.mxu0 0.0
    %1931 = vmatprep.subr.mxu0 0.0
    %1932 = vmatpush1.msra.mxu0 0.0
    %1933 = vmatprep.subr.mxu0 0.0
    %1934 = vmatpush1.msra.mxu0 0.0
    %1935 = vmatprep.subr.mxu0 0.0
    %1936 = vmatpush1.msra.mxu0 0.0
    %1937 = vmatprep.subr.mxu0 0.0
    %1938 = vmatpush1.msra.mxu0 0.0
    %1939 = vmatprep.subr.mxu0 0.0
    %1940 = vmatpush1.msra.mxu0 0.0
    %1941 = vmatprep.mubr.f32.mxu0 0.0
    %v1942 = vand.u32 %v1274, 4294901760
    %v1943 = vsub.f32 %v1274, %v1942
    %v1944 = vand.u32 %v1943, 4294901760
    %1945 = vmatmul.mubr.f32.gmra.mrb[0].mxu0 %v1944
    %v1946 = vpop.f32.mrb[0].mxu0
    %v1947 = vadd.f32 %v1788, %v1946
    %v1948 = vpop.f32.mrb[0].mxu0
    %1949 = vmatprep.mubr.f32.mxu0 0.0
    %v1950 = vand.u32 %v1275, 4294901760
    %v1951 = vsub.f32 %v1275, %v1950
    %v1952 = vand.u32 %v1951, 4294901760
    %1953 = vmatmul.mubr.f32.gmra.mrb[0].mxu0 %v1952
    %v1954 = vpop.f32.mrb[0].mxu0
    %v1955 = vadd.f32 %v1795, %v1954
    %v1956 = vpop.f32.mrb[0].mxu0
    %1957 = vmatprep.mubr.f32.mxu0 0.0
    %v1958 = vand.u32 %v1276, 4294901760
    %v1959 = vsub.f32 %v1276, %v1958
    %v1960 = vand.u32 %v1959, 4294901760
    %1961 = vmatmul.mubr.f32.gmra.mrb[0].mxu0 %v1960
    %v1962 = vpop.f32.mrb[0].mxu0
    %v1963 = vadd.f32 %v1802, %v1962
    %v1964 = vpop.f32.mrb[0].mxu0
    %1965 = vmatprep.mubr.f32.mxu0 0.0
    %v1966 = vand.u32 %v1277, 4294901760
    %v1967 = vsub.f32 %v1277, %v1966
    %v1968 = vand.u32 %v1967, 4294901760
    %1969 = vmatmul.mubr.f32.gmra.mrb[0].mxu0 %v1968
    %v1970 = vpop.f32.mrb[0].mxu0
    %v1971 = vadd.f32 %v1809, %v1970
    %v1972 = vpop.f32.mrb[0].mxu0
    %1973 = vmatprep.mubr.f32.mxu0 0.0
    %v1974 = vand.u32 %v1278, 4294901760
    %v1975 = vsub.f32 %v1278, %v1974
    %v1976 = vand.u32 %v1975, 4294901760
    %1977 = vmatmul.mubr.f32.gmra.mrb[0].mxu0 %v1976
    %v1978 = vpop.f32.mrb[0].mxu0
    %v1979 = vadd.f32 %v1816, %v1978
    %v1980 = vpop.f32.mrb[0].mxu0
    %1981 = vmatprep.mubr.f32.mxu0 0.0
    %v1982 = vand.u32 %v1279, 4294901760
    %v1983 = vsub.f32 %v1279, %v1982
    %v1984 = vand.u32 %v1983, 4294901760
    %1985 = vmatmul.mubr.f32.gmra.mrb[0].mxu0 %v1984
    %v1986 = vpop.f32.mrb[0].mxu0
    %v1987 = vadd.f32 %v1823, %v1986
    %v1988 = vpop.f32.mrb[0].mxu0
    %1989 = vmatprep.mubr.f32.mxu0 0.0
    %v1990 = vand.u32 %v1280, 4294901760
    %v1991 = vsub.f32 %v1280, %v1990
    %v1992 = vand.u32 %v1991, 4294901760
    %1993 = vmatmul.mubr.f32.gmra.mrb[0].mxu0 %v1992
    %v1994 = vpop.f32.mrb[0].mxu0
    %v1995 = vadd.f32 %v1830, %v1994
    %v1996 = vpop.f32.mrb[0].mxu0
    %1997 = vmatprep.mubr.f32.mxu0 0.0
    %v1998 = vand.u32 %v1281, 4294901760
    %v1999 = vsub.f32 %v1281, %v1998
    %v2000 = vand.u32 %v1999, 4294901760
    %2001 = vmatmul.mubr.f32.gmra.mrb[0].mxu0 %v2000
    %v2002 = vpop.f32.mrb[0].mxu0
    %v2003 = vadd.f32 %v1837, %v2002
    %v2004 = vpop.f32.mrb[0].mxu0
    %2005 = vmatprep.mubr.f32.mxu0 0.0
    %v2006 = vand.u32 %v1282, 4294901760
    %v2007 = vsub.f32 %v1282, %v2006
    %v2008 = vand.u32 %v2007, 4294901760
    %2009 = vmatmul.mubr.f32.gmra.mrb[0].mxu0 %v2008
    %v2010 = vpop.f32.mrb[0].mxu0
    %v2011 = vadd.f32 %v1844, %v2010
    %v2012 = vpop.f32.mrb[0].mxu0
    %2013 = vmatprep.mubr.f32.mxu0 0.0
    %v2014 = vand.u32 %v1283, 4294901760
    %v2015 = vsub.f32 %v1283, %v2014
    %v2016 = vand.u32 %v2015, 4294901760
    %2017 = vmatmul.mubr.f32.gmra.mrb[0].mxu0 %v2016
    %v2018 = vpop.f32.mrb[0].mxu0
    %v2019 = vadd.f32 %v1851, %v2018
    %v2020 = vpop.f32.mrb[0].mxu0
    %2021 = vmatprep.mubr.f32.mxu0 0.0
    %v2022 = vand.u32 %v1284, 4294901760
    %v2023 = vsub.f32 %v1284, %v2022
    %v2024 = vand.u32 %v2023, 4294901760
    %2025 = vmatmul.mubr.f32.gmra.mrb[0].mxu0 %v2024
    %v2026 = vpop.f32.mrb[0].mxu0
    %v2027 = vadd.f32 %v1858, %v2026
    %v2028 = vpop.f32.mrb[0].mxu0
    %2029 = vdwg.mxu0
    %2030 = vmatprep.subr.mxu0 0.0
    %v2031 = vand.u32 %v1258, 4294901760
    %v2032 = vsub.f32 %v1258, %v2031
    %v2033 = vand.u32 %v2032, 4294901760
    %2034 = vmatpush1.msra.mxu0 %v2033
    %2035 = vmatprep.subr.mxu0 0.0
    %v2036 = vand.u32 %v1259, 4294901760
    %v2037 = vsub.f32 %v1259, %v2036
    %v2038 = vand.u32 %v2037, 4294901760
    %2039 = vmatpush1.msra.mxu0 %v2038
    %2040 = vmatprep.subr.mxu0 0.0
    %v2041 = vand.u32 %v1260, 4294901760
    %v2042 = vsub.f32 %v1260, %v2041
    %v2043 = vand.u32 %v2042, 4294901760
    %2044 = vmatpush1.msra.mxu0 %v2043
    %2045 = vmatprep.subr.mxu0 0.0
    %v2046 = vand.u32 %v1261, 4294901760
    %v2047 = vsub.f32 %v1261, %v2046
    %v2048 = vand.u32 %v2047, 4294901760
    %2049 = vmatpush1.msra.mxu0 %v2048
    %2050 = vmatprep.subr.mxu0 0.0
    %v2051 = vand.u32 %v1262, 4294901760
    %v2052 = vsub.f32 %v1262, %v2051
    %v2053 = vand.u32 %v2052, 4294901760
    %2054 = vmatpush1.msra.mxu0 %v2053
    %2055 = vmatprep.subr.mxu0 0.0
    %v2056 = vand.u32 %v1263, 4294901760
    %v2057 = vsub.f32 %v1263, %v2056
    %v2058 = vand.u32 %v2057, 4294901760
    %2059 = vmatpush1.msra.mxu0 %v2058
    %2060 = vmatprep.subr.mxu0 0.0
    %v2061 = vand.u32 %v1264, 4294901760
    %v2062 = vsub.f32 %v1264, %v2061
    %v2063 = vand.u32 %v2062, 4294901760
    %2064 = vmatpush1.msra.mxu0 %v2063
    %2065 = vmatprep.subr.mxu0 0.0
    %v2066 = vand.u32 %v1265, 4294901760
    %v2067 = vsub.f32 %v1265, %v2066
    %v2068 = vand.u32 %v2067, 4294901760
    %2069 = vmatpush1.msra.mxu0 %v2068
    %2070 = vmatprep.subr.mxu0 0.0
    %v2071 = vand.u32 %v1266, 4294901760
    %v2072 = vsub.f32 %v1266, %v2071
    %v2073 = vand.u32 %v2072, 4294901760
    %2074 = vmatpush1.msra.mxu0 %v2073
    %2075 = vmatprep.subr.mxu0 0.0
    %v2076 = vand.u32 %v1267, 4294901760
    %v2077 = vsub.f32 %v1267, %v2076
    %v2078 = vand.u32 %v2077, 4294901760
    %2079 = vmatpush1.msra.mxu0 %v2078
    %2080 = vmatprep.subr.mxu0 0.0
    %v2081 = vand.u32 %v1268, 4294901760
    %v2082 = vsub.f32 %v1268, %v2081
    %v2083 = vand.u32 %v2082, 4294901760
    %2084 = vmatpush1.msra.mxu0 %v2083
    %2085 = vmatprep.subr.mxu0 0.0
    %v2086 = vand.u32 %v1269, 4294901760
    %v2087 = vsub.f32 %v1269, %v2086
    %v2088 = vand.u32 %v2087, 4294901760
    %2089 = vmatpush1.msra.mxu0 %v2088
    %2090 = vmatprep.subr.mxu0 0.0
    %v2091 = vand.u32 %v1270, 4294901760
    %v2092 = vsub.f32 %v1270, %v2091
    %v2093 = vand.u32 %v2092, 4294901760
    %2094 = vmatpush1.msra.mxu0 %v2093
    %2095 = vmatprep.subr.mxu0 0.0
    %v2096 = vand.u32 %v1271, 4294901760
    %v2097 = vsub.f32 %v1271, %v2096
    %v2098 = vand.u32 %v2097, 4294901760
    %2099 = vmatpush1.msra.mxu0 %v2098
    %2100 = vmatprep.subr.mxu0 0.0
    %v2101 = vand.u32 %v1272, 4294901760
    %v2102 = vsub.f32 %v1272, %v2101
    %v2103 = vand.u32 %v2102, 4294901760
    %2104 = vmatpush1.msra.mxu0 %v2103
    %2105 = vmatprep.subr.mxu0 0.0
    %v2106 = vand.u32 %v1273, 4294901760
    %v2107 = vsub.f32 %v1273, %v2106
    %v2108 = vand.u32 %v2107, 4294901760
    %2109 = vmatpush1.msra.mxu0 %v2108
    %2110 = vmatprep.subr.mxu0 0.0
    %2111 = vmatpush1.msra.mxu0 0.0
    %2112 = vmatprep.subr.mxu0 0.0
    %2113 = vmatpush1.msra.mxu0 0.0
    %2114 = vmatprep.subr.mxu0 0.0
    %2115 = vmatpush1.msra.mxu0 0.0
    %2116 = vmatprep.subr.mxu0 0.0
    %2117 = vmatpush1.msra.mxu0 0.0
    %2118 = vmatprep.subr.mxu0 0.0
    %2119 = vmatpush1.msra.mxu0 0.0
    %2120 = vmatprep.subr.mxu0 0.0
    %2121 = vmatpush1.msra.mxu0 0.0
    %2122 = vmatprep.subr.mxu0 0.0
    %2123 = vmatpush1.msra.mxu0 0.0
    %2124 = vmatprep.subr.mxu0 0.0
    %2125 = vmatpush1.msra.mxu0 0.0
    %2126 = vmatprep.subr.mxu0 0.0
    %2127 = vmatpush1.msra.mxu0 0.0
    %2128 = vmatprep.subr.mxu0 0.0
    %2129 = vmatpush1.msra.mxu0 0.0
    %2130 = vmatprep.subr.mxu0 0.0
    %2131 = vmatpush1.msra.mxu0 0.0
    %2132 = vmatprep.subr.mxu0 0.0
    %2133 = vmatpush1.msra.mxu0 0.0
    %2134 = vmatprep.subr.mxu0 0.0
    %2135 = vmatpush1.msra.mxu0 0.0
    %2136 = vmatprep.subr.mxu0 0.0
    %2137 = vmatpush1.msra.mxu0 0.0
    %2138 = vmatprep.subr.mxu0 0.0
    %2139 = vmatpush1.msra.mxu0 0.0
    %2140 = vmatprep.subr.mxu0 0.0
    %2141 = vmatpush1.msra.mxu0 0.0
    %2142 = vmatprep.mubr.f32.mxu0 0.0
    %v2143 = vand.u32 %v1274, 4294901760
    %2144 = vmatmul.mubr.f32.gmra.mrb[0].mxu0 %v2143
    %v2145 = vpop.f32.mrb[0].mxu0
    %v2146 = vadd.f32 %v1947, %v2145
    %v2147 = vpop.f32.mrb[0].mxu0
    %2148 = vmatprep.mubr.f32.mxu0 0.0
    %v2149 = vand.u32 %v1275, 4294901760
    %2150 = vmatmul.mubr.f32.gmra.mrb[0].mxu0 %v2149
    %v2151 = vpop.f32.mrb[0].mxu0
    %v2152 = vadd.f32 %v1955, %v2151
    %v2153 = vpop.f32.mrb[0].mxu0
    %2154 = vmatprep.mubr.f32.mxu0 0.0
    %v2155 = vand.u32 %v1276, 4294901760
    %2156 = vmatmul.mubr.f32.gmra.mrb[0].mxu0 %v2155
    %v2157 = vpop.f32.mrb[0].mxu0
    %v2158 = vadd.f32 %v1963, %v2157
    %v2159 = vpop.f32.mrb[0].mxu0
    %2160 = vmatprep.mubr.f32.mxu0 0.0
    %v2161 = vand.u32 %v1277, 4294901760
    %2162 = vmatmul.mubr.f32.gmra.mrb[0].mxu0 %v2161
    %v2163 = vpop.f32.mrb[0].mxu0
    %v2164 = vadd.f32 %v1971, %v2163
    %v2165 = vpop.f32.mrb[0].mxu0
    %2166 = vmatprep.mubr.f32.mxu0 0.0
    %v2167 = vand.u32 %v1278, 4294901760
    %2168 = vmatmul.mubr.f32.gmra.mrb[0].mxu0 %v2167
    %v2169 = vpop.f32.mrb[0].mxu0
    %v2170 = vadd.f32 %v1979, %v2169
    %v2171 = vpop.f32.mrb[0].mxu0
    %2172 = vmatprep.mubr.f32.mxu0 0.0
    %v2173 = vand.u32 %v1279, 4294901760
    %2174 = vmatmul.mubr.f32.gmra.mrb[0].mxu0 %v2173
    %v2175 = vpop.f32.mrb[0].mxu0
    %v2176 = vadd.f32 %v1987, %v2175
    %v2177 = vpop.f32.mrb[0].mxu0
    %2178 = vmatprep.mubr.f32.mxu0 0.0
    %v2179 = vand.u32 %v1280, 4294901760
    %2180 = vmatmul.mubr.f32.gmra.mrb[0].mxu0 %v2179
    %v2181 = vpop.f32.mrb[0].mxu0
    %v2182 = vadd.f32 %v1995, %v2181
    %v2183 = vpop.f32.mrb[0].mxu0
    %2184 = vmatprep.mubr.f32.mxu0 0.0
    %v2185 = vand.u32 %v1281, 4294901760
    %2186 = vmatmul.mubr.f32.gmra.mrb[0].mxu0 %v2185
    %v2187 = vpop.f32.mrb[0].mxu0
    %v2188 = vadd.f32 %v2003, %v2187
    %v2189 = vpop.f32.mrb[0].mxu0
    %2190 = vmatprep.mubr.f32.mxu0 0.0
    %v2191 = vand.u32 %v1282, 4294901760
    %2192 = vmatmul.mubr.f32.gmra.mrb[0].mxu0 %v2191
    %v2193 = vpop.f32.mrb[0].mxu0
    %v2194 = vadd.f32 %v2011, %v2193
    %v2195 = vpop.f32.mrb[0].mxu0
    %2196 = vmatprep.mubr.f32.mxu0 0.0
    %v2197 = vand.u32 %v1283, 4294901760
    %2198 = vmatmul.mubr.f32.gmra.mrb[0].mxu0 %v2197
    %v2199 = vpop.f32.mrb[0].mxu0
    %v2200 = vadd.f32 %v2019, %v2199
    %v2201 = vpop.f32.mrb[0].mxu0
    %2202 = vmatprep.mubr.f32.mxu0 0.0
    %v2203 = vand.u32 %v1284, 4294901760
    %2204 = vmatmul.mubr.f32.gmra.mrb[0].mxu0 %v2203
    %v2205 = vpop.f32.mrb[0].mxu0
    %v2206 = vadd.f32 %v2027, %v2205
    %v2207 = vpop.f32.mrb[0].mxu0
    %2208 = vdwg.mxu0
    %2209 = vmatprep.subr.mxu0 0.0
    %v2210 = vand.u32 %v1258, 4294901760
    %2211 = vmatpush1.msra.mxu0 %v2210
    %2212 = vmatprep.subr.mxu0 0.0
    %v2213 = vand.u32 %v1259, 4294901760
    %2214 = vmatpush1.msra.mxu0 %v2213
    %2215 = vmatprep.subr.mxu0 0.0
    %v2216 = vand.u32 %v1260, 4294901760
    %2217 = vmatpush1.msra.mxu0 %v2216
    %2218 = vmatprep.subr.mxu0 0.0
    %v2219 = vand.u32 %v1261, 4294901760
    %2220 = vmatpush1.msra.mxu0 %v2219
    %2221 = vmatprep.subr.mxu0 0.0
    %v2222 = vand.u32 %v1262, 4294901760
    %2223 = vmatpush1.msra.mxu0 %v2222
    %2224 = vmatprep.subr.mxu0 0.0
    %v2225 = vand.u32 %v1263, 4294901760
    %2226 = vmatpush1.msra.mxu0 %v2225
    %2227 = vmatprep.subr.mxu0 0.0
    %v2228 = vand.u32 %v1264, 4294901760
    %2229 = vmatpush1.msra.mxu0 %v2228
    %2230 = vmatprep.subr.mxu0 0.0
    %v2231 = vand.u32 %v1265, 4294901760
    %2232 = vmatpush1.msra.mxu0 %v2231
    %2233 = vmatprep.subr.mxu0 0.0
    %v2234 = vand.u32 %v1266, 4294901760
    %2235 = vmatpush1.msra.mxu0 %v2234
    %2236 = vmatprep.subr.mxu0 0.0
    %v2237 = vand.u32 %v1267, 4294901760
    %2238 = vmatpush1.msra.mxu0 %v2237
    %2239 = vmatprep.subr.mxu0 0.0
    %v2240 = vand.u32 %v1268, 4294901760
    %2241 = vmatpush1.msra.mxu0 %v2240
    %2242 = vmatprep.subr.mxu0 0.0
    %v2243 = vand.u32 %v1269, 4294901760
    %2244 = vmatpush1.msra.mxu0 %v2243
    %2245 = vmatprep.subr.mxu0 0.0
    %v2246 = vand.u32 %v1270, 4294901760
    %2247 = vmatpush1.msra.mxu0 %v2246
    %2248 = vmatprep.subr.mxu0 0.0
    %v2249 = vand.u32 %v1271, 4294901760
    %2250 = vmatpush1.msra.mxu0 %v2249
    %2251 = vmatprep.subr.mxu0 0.0
    %v2252 = vand.u32 %v1272, 4294901760
    %2253 = vmatpush1.msra.mxu0 %v2252
    %2254 = vmatprep.subr.mxu0 0.0
    %v2255 = vand.u32 %v1273, 4294901760
    %2256 = vmatpush1.msra.mxu0 %v2255
    %2257 = vmatprep.subr.mxu0 0.0
    %2258 = vmatpush1.msra.mxu0 0.0
    %2259 = vmatprep.subr.mxu0 0.0
    %2260 = vmatpush1.msra.mxu0 0.0
    %2261 = vmatprep.subr.mxu0 0.0
    %2262 = vmatpush1.msra.mxu0 0.0
    %2263 = vmatprep.subr.mxu0 0.0
    %2264 = vmatpush1.msra.mxu0 0.0
    %2265 = vmatprep.subr.mxu0 0.0
    %2266 = vmatpush1.msra.mxu0 0.0
    %2267 = vmatprep.subr.mxu0 0.0
    %2268 = vmatpush1.msra.mxu0 0.0
    %2269 = vmatprep.subr.mxu0 0.0
    %2270 = vmatpush1.msra.mxu0 0.0
    %2271 = vmatprep.subr.mxu0 0.0
    %2272 = vmatpush1.msra.mxu0 0.0
    %2273 = vmatprep.subr.mxu0 0.0
    %2274 = vmatpush1.msra.mxu0 0.0
    %2275 = vmatprep.subr.mxu0 0.0
    %2276 = vmatpush1.msra.mxu0 0.0
    %2277 = vmatprep.subr.mxu0 0.0
    %2278 = vmatpush1.msra.mxu0 0.0
    %2279 = vmatprep.subr.mxu0 0.0
    %2280 = vmatpush1.msra.mxu0 0.0
    %2281 = vmatprep.subr.mxu0 0.0
    %2282 = vmatpush1.msra.mxu0 0.0
    %2283 = vmatprep.subr.mxu0 0.0
    %2284 = vmatpush1.msra.mxu0 0.0
    %2285 = vmatprep.subr.mxu0 0.0
    %2286 = vmatpush1.msra.mxu0 0.0
    %2287 = vmatprep.subr.mxu0 0.0
    %2288 = vmatpush1.msra.mxu0 0.0
    %2289 = vmatprep.mubr.f32.mxu0 0.0
    %v2290 = vand.u32 %v1274, 4294901760
    %2291 = vmatmul.mubr.f32.gmra.mrb[0].mxu0 %v2290
    %v2292 = vpop.f32.mrb[0].mxu0
    %v2293 = vadd.f32 %v2146, %v2292
    %v2294 = vpop.f32.mrb[0].mxu0
    %2295 = vmatprep.mubr.f32.mxu0 0.0
    %v2296 = vand.u32 %v1275, 4294901760
    %2297 = vmatmul.mubr.f32.gmra.mrb[0].mxu0 %v2296
    %v2298 = vpop.f32.mrb[0].mxu0
    %v2299 = vadd.f32 %v2152, %v2298
    %v2300 = vpop.f32.mrb[0].mxu0
    %2301 = vmatprep.mubr.f32.mxu0 0.0
    %v2302 = vand.u32 %v1276, 4294901760
    %2303 = vmatmul.mubr.f32.gmra.mrb[0].mxu0 %v2302
    %v2304 = vpop.f32.mrb[0].mxu0
    %v2305 = vadd.f32 %v2158, %v2304
    %v2306 = vpop.f32.mrb[0].mxu0
    %2307 = vmatprep.mubr.f32.mxu0 0.0
    %v2308 = vand.u32 %v1277, 4294901760
    %2309 = vmatmul.mubr.f32.gmra.mrb[0].mxu0 %v2308
    %v2310 = vpop.f32.mrb[0].mxu0
    %v2311 = vadd.f32 %v2164, %v2310
    %v2312 = vpop.f32.mrb[0].mxu0
    %2313 = vmatprep.mubr.f32.mxu0 0.0
    %v2314 = vand.u32 %v1278, 4294901760
    %2315 = vmatmul.mubr.f32.gmra.mrb[0].mxu0 %v2314
    %v2316 = vpop.f32.mrb[0].mxu0
    %v2317 = vadd.f32 %v2170, %v2316
    %v2318 = vpop.f32.mrb[0].mxu0
    %2319 = vmatprep.mubr.f32.mxu0 0.0
    %v2320 = vand.u32 %v1279, 4294901760
    %2321 = vmatmul.mubr.f32.gmra.mrb[0].mxu0 %v2320
    %v2322 = vpop.f32.mrb[0].mxu0
    %v2323 = vadd.f32 %v2176, %v2322
    %v2324 = vpop.f32.mrb[0].mxu0
    %2325 = vmatprep.mubr.f32.mxu0 0.0
    %v2326 = vand.u32 %v1280, 4294901760
    %2327 = vmatmul.mubr.f32.gmra.mrb[0].mxu0 %v2326
    %v2328 = vpop.f32.mrb[0].mxu0
    %v2329 = vadd.f32 %v2182, %v2328
    %v2330 = vpop.f32.mrb[0].mxu0
    %2331 = vmatprep.mubr.f32.mxu0 0.0
    %v2332 = vand.u32 %v1281, 4294901760
    %2333 = vmatmul.mubr.f32.gmra.mrb[0].mxu0 %v2332
    %v2334 = vpop.f32.mrb[0].mxu0
    %v2335 = vadd.f32 %v2188, %v2334
    %v2336 = vpop.f32.mrb[0].mxu0
    %2337 = vmatprep.mubr.f32.mxu0 0.0
    %v2338 = vand.u32 %v1282, 4294901760
    %2339 = vmatmul.mubr.f32.gmra.mrb[0].mxu0 %v2338
    %v2340 = vpop.f32.mrb[0].mxu0
    %v2341 = vadd.f32 %v2194, %v2340
    %v2342 = vpop.f32.mrb[0].mxu0
    %2343 = vmatprep.mubr.f32.mxu0 0.0
    %v2344 = vand.u32 %v1283, 4294901760
    %2345 = vmatmul.mubr.f32.gmra.mrb[0].mxu0 %v2344
    %v2346 = vpop.f32.mrb[0].mxu0
    %v2347 = vadd.f32 %v2200, %v2346
    %v2348 = vpop.f32.mrb[0].mxu0
    %2349 = vmatprep.mubr.f32.mxu0 0.0
    %v2350 = vand.u32 %v1284, 4294901760
    %2351 = vmatmul.mubr.f32.gmra.mrb[0].mxu0 %v2350
    %v2352 = vpop.f32.mrb[0].mxu0
    %v2353 = vadd.f32 %v2206, %v2352
    %v2354 = vpop.f32.mrb[0].mxu0
    %2355 = vdwg.mxu0
    %v2356 = vld [vmem:[%s6] sm:$0x1]
    %v2357 = vlaneseq
    %v2358 = vshrl.u32 %v2357, 7
    %v2359 = vsub.s32 0, %v2358
    %v2360 = vrot.slane %v2356, %v2359
    %vm2361 = vcmp.eq.s32.totalorder %v70, %v2360
    %vm2362 = vcmp.eq.s32.totalorder %v71, %v2360
    %vm2363 = vcmp.eq.s32.totalorder %v72, %v2360
    %vm2364 = vcmp.eq.s32.totalorder %v73, %v2360
    %vm2365 = vcmp.eq.s32.totalorder %v74, %v2360
    %vm2366 = vcmp.eq.s32.totalorder %v75, %v2360
    %vm2367 = vcmp.eq.s32.totalorder %v76, %v2360
    %vm2368 = vcmp.eq.s32.totalorder %v77, %v2360
    %vm2369 = vcmp.eq.s32.totalorder %v78, %v2360
    %vm2370 = vcmp.eq.s32.totalorder %v79, %v2360
    %vm2371 = vcmp.eq.s32.totalorder %v80, %v2360
    %vm2372 = vcmp.eq.s32.totalorder %v81, %v2360
    %vm2373 = vcmp.eq.s32.totalorder %v82, %v2360
    %vm2374 = vcmp.eq.s32.totalorder %v83, %v2360
    %vm2375 = vcmp.eq.s32.totalorder %v84, %v2360
    %vm2376 = vcmp.eq.s32.totalorder %v85, %v2360
    %v2377 = vsel %vm2361, 1, 0
    %v2378 = vsel %vm2362, 1, 0
    %v2379 = vsel %vm2363, 1, 0
    %v2380 = vsel %vm2364, 1, 0
    %v2381 = vsel %vm2365, 1, 0
    %v2382 = vsel %vm2366, 1, 0
    %v2383 = vsel %vm2367, 1, 0
    %v2384 = vsel %vm2368, 1, 0
    %v2385 = vsel %vm2369, 1, 0
    %v2386 = vsel %vm2370, 1, 0
    %v2387 = vsel %vm2371, 1, 0
    %v2388 = vsel %vm2372, 1, 0
    %v2389 = vsel %vm2373, 1, 0
    %v2390 = vsel %vm2374, 1, 0
    %v2391 = vsel %vm2375, 1, 0
    %v2392 = vsel %vm2376, 1, 0
    %v2393 = vcvt.s32.f32 %v2377
    %v2394 = vcvt.s32.f32 %v2378
    %v2395 = vcvt.s32.f32 %v2379
    %v2396 = vcvt.s32.f32 %v2380
    %v2397 = vcvt.s32.f32 %v2381
    %v2398 = vcvt.s32.f32 %v2382
    %v2399 = vcvt.s32.f32 %v2383
    %v2400 = vcvt.s32.f32 %v2384
    %v2401 = vcvt.s32.f32 %v2385
    %v2402 = vcvt.s32.f32 %v2386
    %v2403 = vcvt.s32.f32 %v2387
    %v2404 = vcvt.s32.f32 %v2388
    %v2405 = vcvt.s32.f32 %v2389
    %v2406 = vcvt.s32.f32 %v2390
    %v2407 = vcvt.s32.f32 %v2391
    %v2408 = vcvt.s32.f32 %v2392
    %v2409 = vld [vmem:[#allocation8] sm:$0xff]
    %v2410 = vld [vmem:[#allocation8 + $0x8] sm:$0xff]
    %v2411 = vld [vmem:[#allocation8 + $0x10] sm:$0xff]
    %v2412 = vld [vmem:[#allocation8 + $0x18] sm:$0xff]
    %v2413 = vld [vmem:[#allocation8 + $0x20] sm:$0xff]
    %v2414 = vld [vmem:[#allocation8 + $0x28] sm:$0xff]
    %v2415 = vld [vmem:[#allocation8 + $0x30] sm:$0xff]
    %v2416 = vld [vmem:[#allocation8 + $0x38] sm:$0xff]
    %v2417 = vld [vmem:[#allocation8 + $0x40] sm:$0xff]
    %v2418 = vld [vmem:[#allocation8 + $0x48] sm:$0xff]
    %v2419 = vld [vmem:[#allocation8 + $0x50] sm:$0x1f]
    %2420 = vmatprep.subr.mxu0 0.0
    %v2421 = vand.u32 %v2393, 4294901760
    %2422 = vmatpush1.msra.mxu0 %v2421
    %2423 = vmatprep.subr.mxu0 0.0
    %v2424 = vand.u32 %v2394, 4294901760
    %2425 = vmatpush1.msra.mxu0 %v2424
    %2426 = vmatprep.subr.mxu0 0.0
    %v2427 = vand.u32 %v2395, 4294901760
    %2428 = vmatpush1.msra.mxu0 %v2427
    %2429 = vmatprep.subr.mxu0 0.0
    %v2430 = vand.u32 %v2396, 4294901760
    %2431 = vmatpush1.msra.mxu0 %v2430
    %2432 = vmatprep.subr.mxu0 0.0
    %v2433 = vand.u32 %v2397, 4294901760
    %2434 = vmatpush1.msra.mxu0 %v2433
    %2435 = vmatprep.subr.mxu0 0.0
    %v2436 = vand.u32 %v2398, 4294901760
    %2437 = vmatpush1.msra.mxu0 %v2436
    %2438 = vmatprep.subr.mxu0 0.0
    %v2439 = vand.u32 %v2399, 4294901760
    %2440 = vmatpush1.msra.mxu0 %v2439
    %2441 = vmatprep.subr.mxu0 0.0
    %v2442 = vand.u32 %v2400, 4294901760
    %2443 = vmatpush1.msra.mxu0 %v2442
    %2444 = vmatprep.subr.mxu0 0.0
    %v2445 = vand.u32 %v2401, 4294901760
    %2446 = vmatpush1.msra.mxu0 %v2445
    %2447 = vmatprep.subr.mxu0 0.0
    %v2448 = vand.u32 %v2402, 4294901760
    %2449 = vmatpush1.msra.mxu0 %v2448
    %2450 = vmatprep.subr.mxu0 0.0
    %v2451 = vand.u32 %v2403, 4294901760
    %2452 = vmatpush1.msra.mxu0 %v2451
    %2453 = vmatprep.subr.mxu0 0.0
    %v2454 = vand.u32 %v2404, 4294901760
    %2455 = vmatpush1.msra.mxu0 %v2454
    %2456 = vmatprep.subr.mxu0 0.0
    %v2457 = vand.u32 %v2405, 4294901760
    %2458 = vmatpush1.msra.mxu0 %v2457
    %2459 = vmatprep.subr.mxu0 0.0
    %v2460 = vand.u32 %v2406, 4294901760
    %2461 = vmatpush1.msra.mxu0 %v2460
    %2462 = vmatprep.subr.mxu0 0.0
    %v2463 = vand.u32 %v2407, 4294901760
    %2464 = vmatpush1.msra.mxu0 %v2463
    %2465 = vmatprep.subr.mxu0 0.0
    %v2466 = vand.u32 %v2408, 4294901760
    %2467 = vmatpush1.msra.mxu0 %v2466
    %2468 = vmatprep.subr.mxu0 0.0
    %2469 = vmatpush1.msra.mxu0 0.0
    %2470 = vmatprep.subr.mxu0 0.0
    %2471 = vmatpush1.msra.mxu0 0.0
    %2472 = vmatprep.subr.mxu0 0.0
    %2473 = vmatpush1.msra.mxu0 0.0
    %2474 = vmatprep.subr.mxu0 0.0
    %2475 = vmatpush1.msra.mxu0 0.0
    %2476 = vmatprep.subr.mxu0 0.0
    %2477 = vmatpush1.msra.mxu0 0.0
    %2478 = vmatprep.subr.mxu0 0.0
    %2479 = vmatpush1.msra.mxu0 0.0
    %2480 = vmatprep.subr.mxu0 0.0
    %2481 = vmatpush1.msra.mxu0 0.0
    %2482 = vmatprep.subr.mxu0 0.0
    %2483 = vmatpush1.msra.mxu0 0.0
    %2484 = vmatprep.subr.mxu0 0.0
    %2485 = vmatpush1.msra.mxu0 0.0
    %2486 = vmatprep.subr.mxu0 0.0
    %2487 = vmatpush1.msra.mxu0 0.0
    %2488 = vmatprep.subr.mxu0 0.0
    %2489 = vmatpush1.msra.mxu0 0.0
    %2490 = vmatprep.subr.mxu0 0.0
    %2491 = vmatpush1.msra.mxu0 0.0
    %2492 = vmatprep.subr.mxu0 0.0
    %2493 = vmatpush1.msra.mxu0 0.0
    %2494 = vmatprep.subr.mxu0 0.0
    %2495 = vmatpush1.msra.mxu0 0.0
    %2496 = vmatprep.subr.mxu0 0.0
    %2497 = vmatpush1.msra.mxu0 0.0
    %2498 = vmatprep.subr.mxu0 0.0
    %2499 = vmatpush1.msra.mxu0 0.0
    %2500 = vmatprep.mubr.f32.mxu0 0.0
    %v2501 = vand.u32 %v2409, 4294901760
    %v2502 = vsub.f32 %v2409, %v2501
    %v2503 = vand.u32 %v2502, 4294901760
    %v2504 = vsub.f32 %v2502, %v2503
    %v2505 = vand.u32 %v2504, 4294901760
    %2506 = vmatmul.mubr.f32.gmra.mrb[0].mxu0 %v2505
    %v2507 = vpop.f32.mrb[0].mxu0
    %v2508 = vadd.f32 0.0, %v2507
    %v2509 = vpop.f32.mrb[0].mxu0
    %2510 = vmatprep.mubr.f32.mxu0 0.0
    %v2511 = vand.u32 %v2410, 4294901760
    %v2512 = vsub.f32 %v2410, %v2511
    %v2513 = vand.u32 %v2512, 4294901760
    %v2514 = vsub.f32 %v2512, %v2513
    %v2515 = vand.u32 %v2514, 4294901760
    %2516 = vmatmul.mubr.f32.gmra.mrb[0].mxu0 %v2515
    %v2517 = vpop.f32.mrb[0].mxu0
    %v2518 = vadd.f32 0.0, %v2517
    %v2519 = vpop.f32.mrb[0].mxu0
    %2520 = vmatprep.mubr.f32.mxu0 0.0
    %v2521 = vand.u32 %v2411, 4294901760
    %v2522 = vsub.f32 %v2411, %v2521
    %v2523 = vand.u32 %v2522, 4294901760
    %v2524 = vsub.f32 %v2522, %v2523
    %v2525 = vand.u32 %v2524, 4294901760
    %2526 = vmatmul.mubr.f32.gmra.mrb[0].mxu0 %v2525
    %v2527 = vpop.f32.mrb[0].mxu0
    %v2528 = vadd.f32 0.0, %v2527
    %v2529 = vpop.f32.mrb[0].mxu0
    %2530 = vmatprep.mubr.f32.mxu0 0.0
    %v2531 = vand.u32 %v2412, 4294901760
    %v2532 = vsub.f32 %v2412, %v2531
    %v2533 = vand.u32 %v2532, 4294901760
    %v2534 = vsub.f32 %v2532, %v2533
    %v2535 = vand.u32 %v2534, 4294901760
    %2536 = vmatmul.mubr.f32.gmra.mrb[0].mxu0 %v2535
    %v2537 = vpop.f32.mrb[0].mxu0
    %v2538 = vadd.f32 0.0, %v2537
    %v2539 = vpop.f32.mrb[0].mxu0
    %2540 = vmatprep.mubr.f32.mxu0 0.0
    %v2541 = vand.u32 %v2413, 4294901760
    %v2542 = vsub.f32 %v2413, %v2541
    %v2543 = vand.u32 %v2542, 4294901760
    %v2544 = vsub.f32 %v2542, %v2543
    %v2545 = vand.u32 %v2544, 4294901760
    %2546 = vmatmul.mubr.f32.gmra.mrb[0].mxu0 %v2545
    %v2547 = vpop.f32.mrb[0].mxu0
    %v2548 = vadd.f32 0.0, %v2547
    %v2549 = vpop.f32.mrb[0].mxu0
    %2550 = vmatprep.mubr.f32.mxu0 0.0
    %v2551 = vand.u32 %v2414, 4294901760
    %v2552 = vsub.f32 %v2414, %v2551
    %v2553 = vand.u32 %v2552, 4294901760
    %v2554 = vsub.f32 %v2552, %v2553
    %v2555 = vand.u32 %v2554, 4294901760
    %2556 = vmatmul.mubr.f32.gmra.mrb[0].mxu0 %v2555
    %v2557 = vpop.f32.mrb[0].mxu0
    %v2558 = vadd.f32 0.0, %v2557
    %v2559 = vpop.f32.mrb[0].mxu0
    %2560 = vmatprep.mubr.f32.mxu0 0.0
    %v2561 = vand.u32 %v2415, 4294901760
    %v2562 = vsub.f32 %v2415, %v2561
    %v2563 = vand.u32 %v2562, 4294901760
    %v2564 = vsub.f32 %v2562, %v2563
    %v2565 = vand.u32 %v2564, 4294901760
    %2566 = vmatmul.mubr.f32.gmra.mrb[0].mxu0 %v2565
    %v2567 = vpop.f32.mrb[0].mxu0
    %v2568 = vadd.f32 0.0, %v2567
    %v2569 = vpop.f32.mrb[0].mxu0
    %2570 = vmatprep.mubr.f32.mxu0 0.0
    %v2571 = vand.u32 %v2416, 4294901760
    %v2572 = vsub.f32 %v2416, %v2571
    %v2573 = vand.u32 %v2572, 4294901760
    %v2574 = vsub.f32 %v2572, %v2573
    %v2575 = vand.u32 %v2574, 4294901760
    %2576 = vmatmul.mubr.f32.gmra.mrb[0].mxu0 %v2575
    %v2577 = vpop.f32.mrb[0].mxu0
    %v2578 = vadd.f32 0.0, %v2577
    %v2579 = vpop.f32.mrb[0].mxu0
    %2580 = vmatprep.mubr.f32.mxu0 0.0
    %v2581 = vand.u32 %v2417, 4294901760
    %v2582 = vsub.f32 %v2417, %v2581
    %v2583 = vand.u32 %v2582, 4294901760
    %v2584 = vsub.f32 %v2582, %v2583
    %v2585 = vand.u32 %v2584, 4294901760
    %2586 = vmatmul.mubr.f32.gmra.mrb[0].mxu0 %v2585
    %v2587 = vpop.f32.mrb[0].mxu0
    %v2588 = vadd.f32 0.0, %v2587
    %v2589 = vpop.f32.mrb[0].mxu0
    %2590 = vmatprep.mubr.f32.mxu0 0.0
    %v2591 = vand.u32 %v2418, 4294901760
    %v2592 = vsub.f32 %v2418, %v2591
    %v2593 = vand.u32 %v2592, 4294901760
    %v2594 = vsub.f32 %v2592, %v2593
    %v2595 = vand.u32 %v2594, 4294901760
    %2596 = vmatmul.mubr.f32.gmra.mrb[0].mxu0 %v2595
    %v2597 = vpop.f32.mrb[0].mxu0
    %v2598 = vadd.f32 0.0, %v2597
    %v2599 = vpop.f32.mrb[0].mxu0
    %2600 = vmatprep.mubr.f32.mxu0 0.0
    %v2601 = vand.u32 %v2419, 4294901760
    %v2602 = vsub.f32 %v2419, %v2601
    %v2603 = vand.u32 %v2602, 4294901760
    %v2604 = vsub.f32 %v2602, %v2603
    %v2605 = vand.u32 %v2604, 4294901760
    %2606 = vmatmul.mubr.f32.gmra.mrb[0].mxu0 %v2605
    %v2607 = vpop.f32.mrb[0].mxu0
    %v2608 = vadd.f32 0.0, %v2607
    %v2609 = vpop.f32.mrb[0].mxu0
    %2610 = vdwg.mxu0
    %2611 = vmatprep.subr.mxu0 0.0
    %v2612 = vand.u32 %v2393, 4294901760
    %v2613 = vsub.f32 %v2393, %v2612
    %v2614 = vand.u32 %v2613, 4294901760
    %v2615 = vsub.f32 %v2613, %v2614
    %v2616 = vand.u32 %v2615, 4294901760
    %2617 = vmatpush1.msra.mxu0 %v2616
    %2618 = vmatprep.subr.mxu0 0.0
    %v2619 = vand.u32 %v2394, 4294901760
    %v2620 = vsub.f32 %v2394, %v2619
    %v2621 = vand.u32 %v2620, 4294901760
    %v2622 = vsub.f32 %v2620, %v2621
    %v2623 = vand.u32 %v2622, 4294901760
    %2624 = vmatpush1.msra.mxu0 %v2623
    %2625 = vmatprep.subr.mxu0 0.0
    %v2626 = vand.u32 %v2395, 4294901760
    %v2627 = vsub.f32 %v2395, %v2626
    %v2628 = vand.u32 %v2627, 4294901760
    %v2629 = vsub.f32 %v2627, %v2628
    %v2630 = vand.u32 %v2629, 4294901760
    %2631 = vmatpush1.msra.mxu0 %v2630
    %2632 = vmatprep.subr.mxu0 0.0
    %v2633 = vand.u32 %v2396, 4294901760
    %v2634 = vsub.f32 %v2396, %v2633
    %v2635 = vand.u32 %v2634, 4294901760
    %v2636 = vsub.f32 %v2634, %v2635
    %v2637 = vand.u32 %v2636, 4294901760
    %2638 = vmatpush1.msra.mxu0 %v2637
    %2639 = vmatprep.subr.mxu0 0.0
    %v2640 = vand.u32 %v2397, 4294901760
    %v2641 = vsub.f32 %v2397, %v2640
    %v2642 = vand.u32 %v2641, 4294901760
    %v2643 = vsub.f32 %v2641, %v2642
    %v2644 = vand.u32 %v2643, 4294901760
    %2645 = vmatpush1.msra.mxu0 %v2644
    %2646 = vmatprep.subr.mxu0 0.0
    %v2647 = vand.u32 %v2398, 4294901760
    %v2648 = vsub.f32 %v2398, %v2647
    %v2649 = vand.u32 %v2648, 4294901760
    %v2650 = vsub.f32 %v2648, %v2649
    %v2651 = vand.u32 %v2650, 4294901760
    %2652 = vmatpush1.msra.mxu0 %v2651
    %2653 = vmatprep.subr.mxu0 0.0
    %v2654 = vand.u32 %v2399, 4294901760
    %v2655 = vsub.f32 %v2399, %v2654
    %v2656 = vand.u32 %v2655, 4294901760
    %v2657 = vsub.f32 %v2655, %v2656
    %v2658 = vand.u32 %v2657, 4294901760
    %2659 = vmatpush1.msra.mxu0 %v2658
    %2660 = vmatprep.subr.mxu0 0.0
    %v2661 = vand.u32 %v2400, 4294901760
    %v2662 = vsub.f32 %v2400, %v2661
    %v2663 = vand.u32 %v2662, 4294901760
    %v2664 = vsub.f32 %v2662, %v2663
    %v2665 = vand.u32 %v2664, 4294901760
    %2666 = vmatpush1.msra.mxu0 %v2665
    %2667 = vmatprep.subr.mxu0 0.0
    %v2668 = vand.u32 %v2401, 4294901760
    %v2669 = vsub.f32 %v2401, %v2668
    %v2670 = vand.u32 %v2669, 4294901760
    %v2671 = vsub.f32 %v2669, %v2670
    %v2672 = vand.u32 %v2671, 4294901760
    %2673 = vmatpush1.msra.mxu0 %v2672
    %2674 = vmatprep.subr.mxu0 0.0
    %v2675 = vand.u32 %v2402, 4294901760
    %v2676 = vsub.f32 %v2402, %v2675
    %v2677 = vand.u32 %v2676, 4294901760
    %v2678 = vsub.f32 %v2676, %v2677
    %v2679 = vand.u32 %v2678, 4294901760
    %2680 = vmatpush1.msra.mxu0 %v2679
    %2681 = vmatprep.subr.mxu0 0.0
    %v2682 = vand.u32 %v2403, 4294901760
    %v2683 = vsub.f32 %v2403, %v2682
    %v2684 = vand.u32 %v2683, 4294901760
    %v2685 = vsub.f32 %v2683, %v2684
    %v2686 = vand.u32 %v2685, 4294901760
    %2687 = vmatpush1.msra.mxu0 %v2686
    %2688 = vmatprep.subr.mxu0 0.0
    %v2689 = vand.u32 %v2404, 4294901760
    %v2690 = vsub.f32 %v2404, %v2689
    %v2691 = vand.u32 %v2690, 4294901760
    %v2692 = vsub.f32 %v2690, %v2691
    %v2693 = vand.u32 %v2692, 4294901760
    %2694 = vmatpush1.msra.mxu0 %v2693
    %2695 = vmatprep.subr.mxu0 0.0
    %v2696 = vand.u32 %v2405, 4294901760
    %v2697 = vsub.f32 %v2405, %v2696
    %v2698 = vand.u32 %v2697, 4294901760
    %v2699 = vsub.f32 %v2697, %v2698
    %v2700 = vand.u32 %v2699, 4294901760
    %2701 = vmatpush1.msra.mxu0 %v2700
    %2702 = vmatprep.subr.mxu0 0.0
    %v2703 = vand.u32 %v2406, 4294901760
    %v2704 = vsub.f32 %v2406, %v2703
    %v2705 = vand.u32 %v2704, 4294901760
    %v2706 = vsub.f32 %v2704, %v2705
    %v2707 = vand.u32 %v2706, 4294901760
    %2708 = vmatpush1.msra.mxu0 %v2707
    %2709 = vmatprep.subr.mxu0 0.0
    %v2710 = vand.u32 %v2407, 4294901760
    %v2711 = vsub.f32 %v2407, %v2710
    %v2712 = vand.u32 %v2711, 4294901760
    %v2713 = vsub.f32 %v2711, %v2712
    %v2714 = vand.u32 %v2713, 4294901760
    %2715 = vmatpush1.msra.mxu0 %v2714
    %2716 = vmatprep.subr.mxu0 0.0
    %v2717 = vand.u32 %v2408, 4294901760
    %v2718 = vsub.f32 %v2408, %v2717
    %v2719 = vand.u32 %v2718, 4294901760
    %v2720 = vsub.f32 %v2718, %v2719
    %v2721 = vand.u32 %v2720, 4294901760
    %2722 = vmatpush1.msra.mxu0 %v2721
    %2723 = vmatprep.subr.mxu0 0.0
    %2724 = vmatpush1.msra.mxu0 0.0
    %2725 = vmatprep.subr.mxu0 0.0
    %2726 = vmatpush1.msra.mxu0 0.0
    %2727 = vmatprep.subr.mxu0 0.0
    %2728 = vmatpush1.msra.mxu0 0.0
    %2729 = vmatprep.subr.mxu0 0.0
    %2730 = vmatpush1.msra.mxu0 0.0
    %2731 = vmatprep.subr.mxu0 0.0
    %2732 = vmatpush1.msra.mxu0 0.0
    %2733 = vmatprep.subr.mxu0 0.0
    %2734 = vmatpush1.msra.mxu0 0.0
    %2735 = vmatprep.subr.mxu0 0.0
    %2736 = vmatpush1.msra.mxu0 0.0
    %2737 = vmatprep.subr.mxu0 0.0
    %2738 = vmatpush1.msra.mxu0 0.0
    %2739 = vmatprep.subr.mxu0 0.0
    %2740 = vmatpush1.msra.mxu0 0.0
    %2741 = vmatprep.subr.mxu0 0.0
    %2742 = vmatpush1.msra.mxu0 0.0
    %2743 = vmatprep.subr.mxu0 0.0
    %2744 = vmatpush1.msra.mxu0 0.0
    %2745 = vmatprep.subr.mxu0 0.0
    %2746 = vmatpush1.msra.mxu0 0.0
    %2747 = vmatprep.subr.mxu0 0.0
    %2748 = vmatpush1.msra.mxu0 0.0
    %2749 = vmatprep.subr.mxu0 0.0
    %2750 = vmatpush1.msra.mxu0 0.0
    %2751 = vmatprep.subr.mxu0 0.0
    %2752 = vmatpush1.msra.mxu0 0.0
    %2753 = vmatprep.subr.mxu0 0.0
    %2754 = vmatpush1.msra.mxu0 0.0
    %2755 = vmatprep.mubr.f32.mxu0 0.0
    %v2756 = vand.u32 %v2409, 4294901760
    %2757 = vmatmul.mubr.f32.gmra.mrb[0].mxu0 %v2756
    %v2758 = vpop.f32.mrb[0].mxu0
    %v2759 = vadd.f32 %v2508, %v2758
    %v2760 = vpop.f32.mrb[0].mxu0
    %2761 = vmatprep.mubr.f32.mxu0 0.0
    %v2762 = vand.u32 %v2410, 4294901760
    %2763 = vmatmul.mubr.f32.gmra.mrb[0].mxu0 %v2762
    %v2764 = vpop.f32.mrb[0].mxu0
    %v2765 = vadd.f32 %v2518, %v2764
    %v2766 = vpop.f32.mrb[0].mxu0
    %2767 = vmatprep.mubr.f32.mxu0 0.0
    %v2768 = vand.u32 %v2411, 4294901760
    %2769 = vmatmul.mubr.f32.gmra.mrb[0].mxu0 %v2768
    %v2770 = vpop.f32.mrb[0].mxu0
    %v2771 = vadd.f32 %v2528, %v2770
    %v2772 = vpop.f32.mrb[0].mxu0
    %2773 = vmatprep.mubr.f32.mxu0 0.0
    %v2774 = vand.u32 %v2412, 4294901760
    %2775 = vmatmul.mubr.f32.gmra.mrb[0].mxu0 %v2774
    %v2776 = vpop.f32.mrb[0].mxu0
    %v2777 = vadd.f32 %v2538, %v2776
    %v2778 = vpop.f32.mrb[0].mxu0
    %2779 = vmatprep.mubr.f32.mxu0 0.0
    %v2780 = vand.u32 %v2413, 4294901760
    %2781 = vmatmul.mubr.f32.gmra.mrb[0].mxu0 %v2780
    %v2782 = vpop.f32.mrb[0].mxu0
    %v2783 = vadd.f32 %v2548, %v2782
    %v2784 = vpop.f32.mrb[0].mxu0
    %2785 = vmatprep.mubr.f32.mxu0 0.0
    %v2786 = vand.u32 %v2414, 4294901760
    %2787 = vmatmul.mubr.f32.gmra.mrb[0].mxu0 %v2786
    %v2788 = vpop.f32.mrb[0].mxu0
    %v2789 = vadd.f32 %v2558, %v2788
    %v2790 = vpop.f32.mrb[0].mxu0
    %2791 = vmatprep.mubr.f32.mxu0 0.0
    %v2792 = vand.u32 %v2415, 4294901760
    %2793 = vmatmul.mubr.f32.gmra.mrb[0].mxu0 %v2792
    %v2794 = vpop.f32.mrb[0].mxu0
    %v2795 = vadd.f32 %v2568, %v2794
    %v2796 = vpop.f32.mrb[0].mxu0
    %2797 = vmatprep.mubr.f32.mxu0 0.0
    %v2798 = vand.u32 %v2416, 4294901760
    %2799 = vmatmul.mubr.f32.gmra.mrb[0].mxu0 %v2798
    %v2800 = vpop.f32.mrb[0].mxu0
    %v2801 = vadd.f32 %v2578, %v2800
    %v2802 = vpop.f32.mrb[0].mxu0
    %2803 = vmatprep.mubr.f32.mxu0 0.0
    %v2804 = vand.u32 %v2417, 4294901760
    %2805 = vmatmul.mubr.f32.gmra.mrb[0].mxu0 %v2804
    %v2806 = vpop.f32.mrb[0].mxu0
    %v2807 = vadd.f32 %v2588, %v2806
    %v2808 = vpop.f32.mrb[0].mxu0
    %2809 = vmatprep.mubr.f32.mxu0 0.0
    %v2810 = vand.u32 %v2418, 4294901760
    %2811 = vmatmul.mubr.f32.gmra.mrb[0].mxu0 %v2810
    %v2812 = vpop.f32.mrb[0].mxu0
    %v2813 = vadd.f32 %v2598, %v2812
    %v2814 = vpop.f32.mrb[0].mxu0
    %2815 = vmatprep.mubr.f32.mxu0 0.0
    %v2816 = vand.u32 %v2419, 4294901760
    %2817 = vmatmul.mubr.f32.gmra.mrb[0].mxu0 %v2816
    %v2818 = vpop.f32.mrb[0].mxu0
    %v2819 = vadd.f32 %v2608, %v2818
    %v2820 = vpop.f32.mrb[0].mxu0
    %2821 = vdwg.mxu0
    %2822 = vmatprep.subr.mxu0 0.0
    %v2823 = vand.u32 %v2393, 4294901760
    %v2824 = vsub.f32 %v2393, %v2823
    %2825 = vmatpush1.msra.mxu0 %v2824
    %2826 = vmatprep.subr.mxu0 0.0
    %v2827 = vand.u32 %v2394, 4294901760
    %v2828 = vsub.f32 %v2394, %v2827
    %2829 = vmatpush1.msra.mxu0 %v2828
    %2830 = vmatprep.subr.mxu0 0.0
    %v2831 = vand.u32 %v2395, 4294901760
    %v2832 = vsub.f32 %v2395, %v2831
    %2833 = vmatpush1.msra.mxu0 %v2832
    %2834 = vmatprep.subr.mxu0 0.0
    %v2835 = vand.u32 %v2396, 4294901760
    %v2836 = vsub.f32 %v2396, %v2835
    %2837 = vmatpush1.msra.mxu0 %v2836
    %2838 = vmatprep.subr.mxu0 0.0
    %v2839 = vand.u32 %v2397, 4294901760
    %v2840 = vsub.f32 %v2397, %v2839
    %2841 = vmatpush1.msra.mxu0 %v2840
    %2842 = vmatprep.subr.mxu0 0.0
    %v2843 = vand.u32 %v2398, 4294901760
    %v2844 = vsub.f32 %v2398, %v2843
    %2845 = vmatpush1.msra.mxu0 %v2844
    %2846 = vmatprep.subr.mxu0 0.0
    %v2847 = vand.u32 %v2399, 4294901760
    %v2848 = vsub.f32 %v2399, %v2847
    %2849 = vmatpush1.msra.mxu0 %v2848
    %2850 = vmatprep.subr.mxu0 0.0
    %v2851 = vand.u32 %v2400, 4294901760
    %v2852 = vsub.f32 %v2400, %v2851
    %2853 = vmatpush1.msra.mxu0 %v2852
    %2854 = vmatprep.subr.mxu0 0.0
    %v2855 = vand.u32 %v2401, 4294901760
    %v2856 = vsub.f32 %v2401, %v2855
    %2857 = vmatpush1.msra.mxu0 %v2856
    %2858 = vmatprep.subr.mxu0 0.0
    %v2859 = vand.u32 %v2402, 4294901760
    %v2860 = vsub.f32 %v2402, %v2859
    %2861 = vmatpush1.msra.mxu0 %v2860
    %2862 = vmatprep.subr.mxu0 0.0
    %v2863 = vand.u32 %v2403, 4294901760
    %v2864 = vsub.f32 %v2403, %v2863
    %2865 = vmatpush1.msra.mxu0 %v2864
    %2866 = vmatprep.subr.mxu0 0.0
    %v2867 = vand.u32 %v2404, 4294901760
    %v2868 = vsub.f32 %v2404, %v2867
    %2869 = vmatpush1.msra.mxu0 %v2868
    %2870 = vmatprep.subr.mxu0 0.0
    %v2871 = vand.u32 %v2405, 4294901760
    %v2872 = vsub.f32 %v2405, %v2871
    %2873 = vmatpush1.msra.mxu0 %v2872
    %2874 = vmatprep.subr.mxu0 0.0
    %v2875 = vand.u32 %v2406, 4294901760
    %v2876 = vsub.f32 %v2406, %v2875
    %2877 = vmatpush1.msra.mxu0 %v2876
    %2878 = vmatprep.subr.mxu0 0.0
    %v2879 = vand.u32 %v2407, 4294901760
    %v2880 = vsub.f32 %v2407, %v2879
    %2881 = vmatpush1.msra.mxu0 %v2880
    %2882 = vmatprep.subr.mxu0 0.0
    %v2883 = vand.u32 %v2408, 4294901760
    %v2884 = vsub.f32 %v2408, %v2883
    %2885 = vmatpush1.msra.mxu0 %v2884
    %2886 = vmatprep.subr.mxu0 0.0
    %2887 = vmatpush1.msra.mxu0 0.0
    %2888 = vmatprep.subr.mxu0 0.0
    %2889 = vmatpush1.msra.mxu0 0.0
    %2890 = vmatprep.subr.mxu0 0.0
    %2891 = vmatpush1.msra.mxu0 0.0
    %2892 = vmatprep.subr.mxu0 0.0
    %2893 = vmatpush1.msra.mxu0 0.0
    %2894 = vmatprep.subr.mxu0 0.0
    %2895 = vmatpush1.msra.mxu0 0.0
    %2896 = vmatprep.subr.mxu0 0.0
    %2897 = vmatpush1.msra.mxu0 0.0
    %2898 = vmatprep.subr.mxu0 0.0
    %2899 = vmatpush1.msra.mxu0 0.0
    %2900 = vmatprep.subr.mxu0 0.0
    %2901 = vmatpush1.msra.mxu0 0.0
    %2902 = vmatprep.subr.mxu0 0.0
    %2903 = vmatpush1.msra.mxu0 0.0
    %2904 = vmatprep.subr.mxu0 0.0
    %2905 = vmatpush1.msra.mxu0 0.0
    %2906 = vmatprep.subr.mxu0 0.0
    %2907 = vmatpush1.msra.mxu0 0.0
    %2908 = vmatprep.subr.mxu0 0.0
    %2909 = vmatpush1.msra.mxu0 0.0
    %2910 = vmatprep.subr.mxu0 0.0
    %2911 = vmatpush1.msra.mxu0 0.0
    %2912 = vmatprep.subr.mxu0 0.0
    %2913 = vmatpush1.msra.mxu0 0.0
    %2914 = vmatprep.subr.mxu0 0.0
    %2915 = vmatpush1.msra.mxu0 0.0
    %2916 = vmatprep.subr.mxu0 0.0
    %2917 = vmatpush1.msra.mxu0 0.0
    %2918 = vmatprep.mubr.f32.mxu0 0.0
    %v2919 = vand.u32 %v2409, 4294901760
    %v2920 = vsub.f32 %v2409, %v2919
    %2921 = vmatmul.mubr.f32.gmra.mrb[0].mxu0 %v2920
    %v2922 = vpop.f32.mrb[0].mxu0
    %v2923 = vadd.f32 %v2759, %v2922
    %v2924 = vpop.f32.mrb[0].mxu0
    %2925 = vmatprep.mubr.f32.mxu0 0.0
    %v2926 = vand.u32 %v2410, 4294901760
    %v2927 = vsub.f32 %v2410, %v2926
    %2928 = vmatmul.mubr.f32.gmra.mrb[0].mxu0 %v2927
    %v2929 = vpop.f32.mrb[0].mxu0
    %v2930 = vadd.f32 %v2765, %v2929
    %v2931 = vpop.f32.mrb[0].mxu0
    %2932 = vmatprep.mubr.f32.mxu0 0.0
    %v2933 = vand.u32 %v2411, 4294901760
    %v2934 = vsub.f32 %v2411, %v2933
    %2935 = vmatmul.mubr.f32.gmra.mrb[0].mxu0 %v2934
    %v2936 = vpop.f32.mrb[0].mxu0
    %v2937 = vadd.f32 %v2771, %v2936
    %v2938 = vpop.f32.mrb[0].mxu0
    %2939 = vmatprep.mubr.f32.mxu0 0.0
    %v2940 = vand.u32 %v2412, 4294901760
    %v2941 = vsub.f32 %v2412, %v2940
    %2942 = vmatmul.mubr.f32.gmra.mrb[0].mxu0 %v2941
    %v2943 = vpop.f32.mrb[0].mxu0
    %v2944 = vadd.f32 %v2777, %v2943
    %v2945 = vpop.f32.mrb[0].mxu0
    %2946 = vmatprep.mubr.f32.mxu0 0.0
    %v2947 = vand.u32 %v2413, 4294901760
    %v2948 = vsub.f32 %v2413, %v2947
    %2949 = vmatmul.mubr.f32.gmra.mrb[0].mxu0 %v2948
    %v2950 = vpop.f32.mrb[0].mxu0
    %v2951 = vadd.f32 %v2783, %v2950
    %v2952 = vpop.f32.mrb[0].mxu0
    %2953 = vmatprep.mubr.f32.mxu0 0.0
    %v2954 = vand.u32 %v2414, 4294901760
    %v2955 = vsub.f32 %v2414, %v2954
    %2956 = vmatmul.mubr.f32.gmra.mrb[0].mxu0 %v2955
    %v2957 = vpop.f32.mrb[0].mxu0
    %v2958 = vadd.f32 %v2789, %v2957
    %v2959 = vpop.f32.mrb[0].mxu0
    %2960 = vmatprep.mubr.f32.mxu0 0.0
    %v2961 = vand.u32 %v2415, 4294901760
    %v2962 = vsub.f32 %v2415, %v2961
    %2963 = vmatmul.mubr.f32.gmra.mrb[0].mxu0 %v2962
    %v2964 = vpop.f32.mrb[0].mxu0
    %v2965 = vadd.f32 %v2795, %v2964
    %v2966 = vpop.f32.mrb[0].mxu0
    %2967 = vmatprep.mubr.f32.mxu0 0.0
    %v2968 = vand.u32 %v2416, 4294901760
    %v2969 = vsub.f32 %v2416, %v2968
    %2970 = vmatmul.mubr.f32.gmra.mrb[0].mxu0 %v2969
    %v2971 = vpop.f32.mrb[0].mxu0
    %v2972 = vadd.f32 %v2801, %v2971
    %v2973 = vpop.f32.mrb[0].mxu0
    %2974 = vmatprep.mubr.f32.mxu0 0.0
    %v2975 = vand.u32 %v2417, 4294901760
    %v2976 = vsub.f32 %v2417, %v2975
    %2977 = vmatmul.mubr.f32.gmra.mrb[0].mxu0 %v2976
    %v2978 = vpop.f32.mrb[0].mxu0
    %v2979 = vadd.f32 %v2807, %v2978
    %v2980 = vpop.f32.mrb[0].mxu0
    %2981 = vmatprep.mubr.f32.mxu0 0.0
    %v2982 = vand.u32 %v2418, 4294901760
    %v2983 = vsub.f32 %v2418, %v2982
    %2984 = vmatmul.mubr.f32.gmra.mrb[0].mxu0 %v2983
    %v2985 = vpop.f32.mrb[0].mxu0
    %v2986 = vadd.f32 %v2813, %v2985
    %v2987 = vpop.f32.mrb[0].mxu0
    %2988 = vmatprep.mubr.f32.mxu0 0.0
    %v2989 = vand.u32 %v2419, 4294901760
    %v2990 = vsub.f32 %v2419, %v2989
    %2991 = vmatmul.mubr.f32.gmra.mrb[0].mxu0 %v2990
    %v2992 = vpop.f32.mrb[0].mxu0
    %v2993 = vadd.f32 %v2819, %v2992
    %v2994 = vpop.f32.mrb[0].mxu0
    %2995 = vdwg.mxu0
    %2996 = vmatprep.subr.mxu0 0.0
    %v2997 = vand.u32 %v2393, 4294901760
    %2998 = vmatpush1.msra.mxu0 %v2997
    %2999 = vmatprep.subr.mxu0 0.0
    %v3000 = vand.u32 %v2394, 4294901760
    %3001 = vmatpush1.msra.mxu0 %v3000
    %3002 = vmatprep.subr.mxu0 0.0
    %v3003 = vand.u32 %v2395, 4294901760
    %3004 = vmatpush1.msra.mxu0 %v3003
    %3005 = vmatprep.subr.mxu0 0.0
    %v3006 = vand.u32 %v2396, 4294901760
    %3007 = vmatpush1.msra.mxu0 %v3006
    %3008 = vmatprep.subr.mxu0 0.0
    %v3009 = vand.u32 %v2397, 4294901760
    %3010 = vmatpush1.msra.mxu0 %v3009
    %3011 = vmatprep.subr.mxu0 0.0
    %v3012 = vand.u32 %v2398, 4294901760
    %3013 = vmatpush1.msra.mxu0 %v3012
    %3014 = vmatprep.subr.mxu0 0.0
    %v3015 = vand.u32 %v2399, 4294901760
    %3016 = vmatpush1.msra.mxu0 %v3015
    %3017 = vmatprep.subr.mxu0 0.0
    %v3018 = vand.u32 %v2400, 4294901760
    %3019 = vmatpush1.msra.mxu0 %v3018
    %3020 = vmatprep.subr.mxu0 0.0
    %v3021 = vand.u32 %v2401, 4294901760
    %3022 = vmatpush1.msra.mxu0 %v3021
    %3023 = vmatprep.subr.mxu0 0.0
    %v3024 = vand.u32 %v2402, 4294901760
    %3025 = vmatpush1.msra.mxu0 %v3024
    %3026 = vmatprep.subr.mxu0 0.0
    %v3027 = vand.u32 %v2403, 4294901760
    %3028 = vmatpush1.msra.mxu0 %v3027
    %3029 = vmatprep.subr.mxu0 0.0
    %v3030 = vand.u32 %v2404, 4294901760
    %3031 = vmatpush1.msra.mxu0 %v3030
    %3032 = vmatprep.subr.mxu0 0.0
    %v3033 = vand.u32 %v2405, 4294901760
    %3034 = vmatpush1.msra.mxu0 %v3033
    %3035 = vmatprep.subr.mxu0 0.0
    %v3036 = vand.u32 %v2406, 4294901760
    %3037 = vmatpush1.msra.mxu0 %v3036
    %3038 = vmatprep.subr.mxu0 0.0
    %v3039 = vand.u32 %v2407, 4294901760
    %3040 = vmatpush1.msra.mxu0 %v3039
    %3041 = vmatprep.subr.mxu0 0.0
    %v3042 = vand.u32 %v2408, 4294901760
    %3043 = vmatpush1.msra.mxu0 %v3042
    %3044 = vmatprep.subr.mxu0 0.0
    %3045 = vmatpush1.msra.mxu0 0.0
    %3046 = vmatprep.subr.mxu0 0.0
    %3047 = vmatpush1.msra.mxu0 0.0
    %3048 = vmatprep.subr.mxu0 0.0
    %3049 = vmatpush1.msra.mxu0 0.0
    %3050 = vmatprep.subr.mxu0 0.0
    %3051 = vmatpush1.msra.mxu0 0.0
    %3052 = vmatprep.subr.mxu0 0.0
    %3053 = vmatpush1.msra.mxu0 0.0
    %3054 = vmatprep.subr.mxu0 0.0
    %3055 = vmatpush1.msra.mxu0 0.0
    %3056 = vmatprep.subr.mxu0 0.0
    %3057 = vmatpush1.msra.mxu0 0.0
    %3058 = vmatprep.subr.mxu0 0.0
    %3059 = vmatpush1.msra.mxu0 0.0
    %3060 = vmatprep.subr.mxu0 0.0
    %3061 = vmatpush1.msra.mxu0 0.0
    %3062 = vmatprep.subr.mxu0 0.0
    %3063 = vmatpush1.msra.mxu0 0.0
    %3064 = vmatprep.subr.mxu0 0.0
    %3065 = vmatpush1.msra.mxu0 0.0
    %3066 = vmatprep.subr.mxu0 0.0
    %3067 = vmatpush1.msra.mxu0 0.0
    %3068 = vmatprep.subr.mxu0 0.0
    %3069 = vmatpush1.msra.mxu0 0.0
    %3070 = vmatprep.subr.mxu0 0.0
    %3071 = vmatpush1.msra.mxu0 0.0
    %3072 = vmatprep.subr.mxu0 0.0
    %3073 = vmatpush1.msra.mxu0 0.0
    %3074 = vmatprep.subr.mxu0 0.0
    %3075 = vmatpush1.msra.mxu0 0.0
    %3076 = vmatprep.mubr.f32.mxu0 0.0
    %v3077 = vand.u32 %v2409, 4294901760
    %v3078 = vsub.f32 %v2409, %v3077
    %v3079 = vand.u32 %v3078, 4294901760
    %3080 = vmatmul.mubr.f32.gmra.mrb[0].mxu0 %v3079
    %v3081 = vpop.f32.mrb[0].mxu0
    %v3082 = vadd.f32 %v2923, %v3081
    %v3083 = vpop.f32.mrb[0].mxu0
    %3084 = vmatprep.mubr.f32.mxu0 0.0
    %v3085 = vand.u32 %v2410, 4294901760
    %v3086 = vsub.f32 %v2410, %v3085
    %v3087 = vand.u32 %v3086, 4294901760
    %3088 = vmatmul.mubr.f32.gmra.mrb[0].mxu0 %v3087
    %v3089 = vpop.f32.mrb[0].mxu0
    %v3090 = vadd.f32 %v2930, %v3089
    %v3091 = vpop.f32.mrb[0].mxu0
    %3092 = vmatprep.mubr.f32.mxu0 0.0
    %v3093 = vand.u32 %v2411, 4294901760
    %v3094 = vsub.f32 %v2411, %v3093
    %v3095 = vand.u32 %v3094, 4294901760
    %3096 = vmatmul.mubr.f32.gmra.mrb[0].mxu0 %v3095
    %v3097 = vpop.f32.mrb[0].mxu0
    %v3098 = vadd.f32 %v2937, %v3097
    %v3099 = vpop.f32.mrb[0].mxu0
    %3100 = vmatprep.mubr.f32.mxu0 0.0
    %v3101 = vand.u32 %v2412, 4294901760
    %v3102 = vsub.f32 %v2412, %v3101
    %v3103 = vand.u32 %v3102, 4294901760
    %3104 = vmatmul.mubr.f32.gmra.mrb[0].mxu0 %v3103
    %v3105 = vpop.f32.mrb[0].mxu0
    %v3106 = vadd.f32 %v2944, %v3105
    %v3107 = vpop.f32.mrb[0].mxu0
    %3108 = vmatprep.mubr.f32.mxu0 0.0
    %v3109 = vand.u32 %v2413, 4294901760
    %v3110 = vsub.f32 %v2413, %v3109
    %v3111 = vand.u32 %v3110, 4294901760
    %3112 = vmatmul.mubr.f32.gmra.mrb[0].mxu0 %v3111
    %v3113 = vpop.f32.mrb[0].mxu0
    %v3114 = vadd.f32 %v2951, %v3113
    %v3115 = vpop.f32.mrb[0].mxu0
    %3116 = vmatprep.mubr.f32.mxu0 0.0
    %v3117 = vand.u32 %v2414, 4294901760
    %v3118 = vsub.f32 %v2414, %v3117
    %v3119 = vand.u32 %v3118, 4294901760
    %3120 = vmatmul.mubr.f32.gmra.mrb[0].mxu0 %v3119
    %v3121 = vpop.f32.mrb[0].mxu0
    %v3122 = vadd.f32 %v2958, %v3121
    %v3123 = vpop.f32.mrb[0].mxu0
    %3124 = vmatprep.mubr.f32.mxu0 0.0
    %v3125 = vand.u32 %v2415, 4294901760
    %v3126 = vsub.f32 %v2415, %v3125
    %v3127 = vand.u32 %v3126, 4294901760
    %3128 = vmatmul.mubr.f32.gmra.mrb[0].mxu0 %v3127
    %v3129 = vpop.f32.mrb[0].mxu0
    %v3130 = vadd.f32 %v2965, %v3129
    %v3131 = vpop.f32.mrb[0].mxu0
    %3132 = vmatprep.mubr.f32.mxu0 0.0
    %v3133 = vand.u32 %v2416, 4294901760
    %v3134 = vsub.f32 %v2416, %v3133
    %v3135 = vand.u32 %v3134, 4294901760
    %3136 = vmatmul.mubr.f32.gmra.mrb[0].mxu0 %v3135
    %v3137 = vpop.f32.mrb[0].mxu0
    %v3138 = vadd.f32 %v2972, %v3137
    %v3139 = vpop.f32.mrb[0].mxu0
    %3140 = vmatprep.mubr.f32.mxu0 0.0
    %v3141 = vand.u32 %v2417, 4294901760
    %v3142 = vsub.f32 %v2417, %v3141
    %v3143 = vand.u32 %v3142, 4294901760
    %3144 = vmatmul.mubr.f32.gmra.mrb[0].mxu0 %v3143
    %v3145 = vpop.f32.mrb[0].mxu0
    %v3146 = vadd.f32 %v2979, %v3145
    %v3147 = vpop.f32.mrb[0].mxu0
    %3148 = vmatprep.mubr.f32.mxu0 0.0
    %v3149 = vand.u32 %v2418, 4294901760
    %v3150 = vsub.f32 %v2418, %v3149
    %v3151 = vand.u32 %v3150, 4294901760
    %3152 = vmatmul.mubr.f32.gmra.mrb[0].mxu0 %v3151
    %v3153 = vpop.f32.mrb[0].mxu0
    %v3154 = vadd.f32 %v2986, %v3153
    %v3155 = vpop.f32.mrb[0].mxu0
    %3156 = vmatprep.mubr.f32.mxu0 0.0
    %v3157 = vand.u32 %v2419, 4294901760
    %v3158 = vsub.f32 %v2419, %v3157
    %v3159 = vand.u32 %v3158, 4294901760
    %3160 = vmatmul.mubr.f32.gmra.mrb[0].mxu0 %v3159
    %v3161 = vpop.f32.mrb[0].mxu0
    %v3162 = vadd.f32 %v2993, %v3161
    %v3163 = vpop.f32.mrb[0].mxu0
    %3164 = vdwg.mxu0
    %3165 = vmatprep.subr.mxu0 0.0
    %v3166 = vand.u32 %v2393, 4294901760
    %v3167 = vsub.f32 %v2393, %v3166
    %v3168 = vand.u32 %v3167, 4294901760
    %3169 = vmatpush1.msra.mxu0 %v3168
    %3170 = vmatprep.subr.mxu0 0.0
    %v3171 = vand.u32 %v2394, 4294901760
    %v3172 = vsub.f32 %v2394, %v3171
    %v3173 = vand.u32 %v3172, 4294901760
    %3174 = vmatpush1.msra.mxu0 %v3173
    %3175 = vmatprep.subr.mxu0 0.0
    %v3176 = vand.u32 %v2395, 4294901760
    %v3177 = vsub.f32 %v2395, %v3176
    %v3178 = vand.u32 %v3177, 4294901760
    %3179 = vmatpush1.msra.mxu0 %v3178
    %3180 = vmatprep.subr.mxu0 0.0
    %v3181 = vand.u32 %v2396, 4294901760
    %v3182 = vsub.f32 %v2396, %v3181
    %v3183 = vand.u32 %v3182, 4294901760
    %3184 = vmatpush1.msra.mxu0 %v3183
    %3185 = vmatprep.subr.mxu0 0.0
    %v3186 = vand.u32 %v2397, 4294901760
    %v3187 = vsub.f32 %v2397, %v3186
    %v3188 = vand.u32 %v3187, 4294901760
    %3189 = vmatpush1.msra.mxu0 %v3188
    %3190 = vmatprep.subr.mxu0 0.0
    %v3191 = vand.u32 %v2398, 4294901760
    %v3192 = vsub.f32 %v2398, %v3191
    %v3193 = vand.u32 %v3192, 4294901760
    %3194 = vmatpush1.msra.mxu0 %v3193
    %3195 = vmatprep.subr.mxu0 0.0
    %v3196 = vand.u32 %v2399, 4294901760
    %v3197 = vsub.f32 %v2399, %v3196
    %v3198 = vand.u32 %v3197, 4294901760
    %3199 = vmatpush1.msra.mxu0 %v3198
    %3200 = vmatprep.subr.mxu0 0.0
    %v3201 = vand.u32 %v2400, 4294901760
    %v3202 = vsub.f32 %v2400, %v3201
    %v3203 = vand.u32 %v3202, 4294901760
    %3204 = vmatpush1.msra.mxu0 %v3203
    %3205 = vmatprep.subr.mxu0 0.0
    %v3206 = vand.u32 %v2401, 4294901760
    %v3207 = vsub.f32 %v2401, %v3206
    %v3208 = vand.u32 %v3207, 4294901760
    %3209 = vmatpush1.msra.mxu0 %v3208
    %3210 = vmatprep.subr.mxu0 0.0
    %v3211 = vand.u32 %v2402, 4294901760
    %v3212 = vsub.f32 %v2402, %v3211
    %v3213 = vand.u32 %v3212, 4294901760
    %3214 = vmatpush1.msra.mxu0 %v3213
    %3215 = vmatprep.subr.mxu0 0.0
    %v3216 = vand.u32 %v2403, 4294901760
    %v3217 = vsub.f32 %v2403, %v3216
    %v3218 = vand.u32 %v3217, 4294901760
    %3219 = vmatpush1.msra.mxu0 %v3218
    %3220 = vmatprep.subr.mxu0 0.0
    %v3221 = vand.u32 %v2404, 4294901760
    %v3222 = vsub.f32 %v2404, %v3221
    %v3223 = vand.u32 %v3222, 4294901760
    %3224 = vmatpush1.msra.mxu0 %v3223
    %3225 = vmatprep.subr.mxu0 0.0
    %v3226 = vand.u32 %v2405, 4294901760
    %v3227 = vsub.f32 %v2405, %v3226
    %v3228 = vand.u32 %v3227, 4294901760
    %3229 = vmatpush1.msra.mxu0 %v3228
    %3230 = vmatprep.subr.mxu0 0.0
    %v3231 = vand.u32 %v2406, 4294901760
    %v3232 = vsub.f32 %v2406, %v3231
    %v3233 = vand.u32 %v3232, 4294901760
    %3234 = vmatpush1.msra.mxu0 %v3233
    %3235 = vmatprep.subr.mxu0 0.0
    %v3236 = vand.u32 %v2407, 4294901760
    %v3237 = vsub.f32 %v2407, %v3236
    %v3238 = vand.u32 %v3237, 4294901760
    %3239 = vmatpush1.msra.mxu0 %v3238
    %3240 = vmatprep.subr.mxu0 0.0
    %v3241 = vand.u32 %v2408, 4294901760
    %v3242 = vsub.f32 %v2408, %v3241
    %v3243 = vand.u32 %v3242, 4294901760
    %3244 = vmatpush1.msra.mxu0 %v3243
    %3245 = vmatprep.subr.mxu0 0.0
    %3246 = vmatpush1.msra.mxu0 0.0
    %3247 = vmatprep.subr.mxu0 0.0
    %3248 = vmatpush1.msra.mxu0 0.0
    %3249 = vmatprep.subr.mxu0 0.0
    %3250 = vmatpush1.msra.mxu0 0.0
    %3251 = vmatprep.subr.mxu0 0.0
    %3252 = vmatpush1.msra.mxu0 0.0
    %3253 = vmatprep.subr.mxu0 0.0
    %3254 = vmatpush1.msra.mxu0 0.0
    %3255 = vmatprep.subr.mxu0 0.0
    %3256 = vmatpush1.msra.mxu0 0.0
    %3257 = vmatprep.subr.mxu0 0.0
    %3258 = vmatpush1.msra.mxu0 0.0
    %3259 = vmatprep.subr.mxu0 0.0
    %3260 = vmatpush1.msra.mxu0 0.0
    %3261 = vmatprep.subr.mxu0 0.0
    %3262 = vmatpush1.msra.mxu0 0.0
    %3263 = vmatprep.subr.mxu0 0.0
    %3264 = vmatpush1.msra.mxu0 0.0
    %3265 = vmatprep.subr.mxu0 0.0
    %3266 = vmatpush1.msra.mxu0 0.0
    %3267 = vmatprep.subr.mxu0 0.0
    %3268 = vmatpush1.msra.mxu0 0.0
    %3269 = vmatprep.subr.mxu0 0.0
    %3270 = vmatpush1.msra.mxu0 0.0
    %3271 = vmatprep.subr.mxu0 0.0
    %3272 = vmatpush1.msra.mxu0 0.0
    %3273 = vmatprep.subr.mxu0 0.0
    %3274 = vmatpush1.msra.mxu0 0.0
    %3275 = vmatprep.subr.mxu0 0.0
    %3276 = vmatpush1.msra.mxu0 0.0
    %3277 = vmatprep.mubr.f32.mxu0 0.0
    %v3278 = vand.u32 %v2409, 4294901760
    %3279 = vmatmul.mubr.f32.gmra.mrb[0].mxu0 %v3278
    %v3280 = vpop.f32.mrb[0].mxu0
    %v3281 = vadd.f32 %v3082, %v3280
    %v3282 = vpop.f32.mrb[0].mxu0
    %3283 = vmatprep.mubr.f32.mxu0 0.0
    %v3284 = vand.u32 %v2410, 4294901760
    %3285 = vmatmul.mubr.f32.gmra.mrb[0].mxu0 %v3284
    %v3286 = vpop.f32.mrb[0].mxu0
    %v3287 = vadd.f32 %v3090, %v3286
    %v3288 = vpop.f32.mrb[0].mxu0
    %3289 = vmatprep.mubr.f32.mxu0 0.0
    %v3290 = vand.u32 %v2411, 4294901760
    %3291 = vmatmul.mubr.f32.gmra.mrb[0].mxu0 %v3290
    %v3292 = vpop.f32.mrb[0].mxu0
    %v3293 = vadd.f32 %v3098, %v3292
    %v3294 = vpop.f32.mrb[0].mxu0
    %3295 = vmatprep.mubr.f32.mxu0 0.0
    %v3296 = vand.u32 %v2412, 4294901760
    %3297 = vmatmul.mubr.f32.gmra.mrb[0].mxu0 %v3296
    %v3298 = vpop.f32.mrb[0].mxu0
    %v3299 = vadd.f32 %v3106, %v3298
    %v3300 = vpop.f32.mrb[0].mxu0
    %3301 = vmatprep.mubr.f32.mxu0 0.0
    %v3302 = vand.u32 %v2413, 4294901760
    %3303 = vmatmul.mubr.f32.gmra.mrb[0].mxu0 %v3302
    %v3304 = vpop.f32.mrb[0].mxu0
    %v3305 = vadd.f32 %v3114, %v3304
    %v3306 = vpop.f32.mrb[0].mxu0
    %3307 = vmatprep.mubr.f32.mxu0 0.0
    %v3308 = vand.u32 %v2414, 4294901760
    %3309 = vmatmul.mubr.f32.gmra.mrb[0].mxu0 %v3308
    %v3310 = vpop.f32.mrb[0].mxu0
    %v3311 = vadd.f32 %v3122, %v3310
    %v3312 = vpop.f32.mrb[0].mxu0
    %3313 = vmatprep.mubr.f32.mxu0 0.0
    %v3314 = vand.u32 %v2415, 4294901760
    %3315 = vmatmul.mubr.f32.gmra.mrb[0].mxu0 %v3314
    %v3316 = vpop.f32.mrb[0].mxu0
    %v3317 = vadd.f32 %v3130, %v3316
    %v3318 = vpop.f32.mrb[0].mxu0
    %3319 = vmatprep.mubr.f32.mxu0 0.0
    %v3320 = vand.u32 %v2416, 4294901760
    %3321 = vmatmul.mubr.f32.gmra.mrb[0].mxu0 %v3320
    %v3322 = vpop.f32.mrb[0].mxu0
    %v3323 = vadd.f32 %v3138, %v3322
    %v3324 = vpop.f32.mrb[0].mxu0
    %3325 = vmatprep.mubr.f32.mxu0 0.0
    %v3326 = vand.u32 %v2417, 4294901760
    %3327 = vmatmul.mubr.f32.gmra.mrb[0].mxu0 %v3326
    %v3328 = vpop.f32.mrb[0].mxu0
    %v3329 = vadd.f32 %v3146, %v3328
    %v3330 = vpop.f32.mrb[0].mxu0
    %3331 = vmatprep.mubr.f32.mxu0 0.0
    %v3332 = vand.u32 %v2418, 4294901760
    %3333 = vmatmul.mubr.f32.gmra.mrb[0].mxu0 %v3332
    %v3334 = vpop.f32.mrb[0].mxu0
    %v3335 = vadd.f32 %v3154, %v3334
    %v3336 = vpop.f32.mrb[0].mxu0
    %3337 = vmatprep.mubr.f32.mxu0 0.0
    %v3338 = vand.u32 %v2419, 4294901760
    %3339 = vmatmul.mubr.f32.gmra.mrb[0].mxu0 %v3338
    %v3340 = vpop.f32.mrb[0].mxu0
    %v3341 = vadd.f32 %v3162, %v3340
    %v3342 = vpop.f32.mrb[0].mxu0
    %3343 = vdwg.mxu0
    %3344 = vmatprep.subr.mxu0 0.0
    %v3345 = vand.u32 %v2393, 4294901760
    %3346 = vmatpush1.msra.mxu0 %v3345
    %3347 = vmatprep.subr.mxu0 0.0
    %v3348 = vand.u32 %v2394, 4294901760
    %3349 = vmatpush1.msra.mxu0 %v3348
    %3350 = vmatprep.subr.mxu0 0.0
    %v3351 = vand.u32 %v2395, 4294901760
    %3352 = vmatpush1.msra.mxu0 %v3351
    %3353 = vmatprep.subr.mxu0 0.0
    %v3354 = vand.u32 %v2396, 4294901760
    %3355 = vmatpush1.msra.mxu0 %v3354
    %3356 = vmatprep.subr.mxu0 0.0
    %v3357 = vand.u32 %v2397, 4294901760
    %3358 = vmatpush1.msra.mxu0 %v3357
    %3359 = vmatprep.subr.mxu0 0.0
    %v3360 = vand.u32 %v2398, 4294901760
    %3361 = vmatpush1.msra.mxu0 %v3360
    %3362 = vmatprep.subr.mxu0 0.0
    %v3363 = vand.u32 %v2399, 4294901760
    %3364 = vmatpush1.msra.mxu0 %v3363
    %3365 = vmatprep.subr.mxu0 0.0
    %v3366 = vand.u32 %v2400, 4294901760
    %3367 = vmatpush1.msra.mxu0 %v3366
    %3368 = vmatprep.subr.mxu0 0.0
    %v3369 = vand.u32 %v2401, 4294901760
    %3370 = vmatpush1.msra.mxu0 %v3369
    %3371 = vmatprep.subr.mxu0 0.0
    %v3372 = vand.u32 %v2402, 4294901760
    %3373 = vmatpush1.msra.mxu0 %v3372
    %3374 = vmatprep.subr.mxu0 0.0
    %v3375 = vand.u32 %v2403, 4294901760
    %3376 = vmatpush1.msra.mxu0 %v3375
    %3377 = vmatprep.subr.mxu0 0.0
    %v3378 = vand.u32 %v2404, 4294901760
    %3379 = vmatpush1.msra.mxu0 %v3378
    %3380 = vmatprep.subr.mxu0 0.0
    %v3381 = vand.u32 %v2405, 4294901760
    %3382 = vmatpush1.msra.mxu0 %v3381
    %3383 = vmatprep.subr.mxu0 0.0
    %v3384 = vand.u32 %v2406, 4294901760
    %3385 = vmatpush1.msra.mxu0 %v3384
    %3386 = vmatprep.subr.mxu0 0.0
    %v3387 = vand.u32 %v2407, 4294901760
    %3388 = vmatpush1.msra.mxu0 %v3387
    %3389 = vmatprep.subr.mxu0 0.0
    %v3390 = vand.u32 %v2408, 4294901760
    %3391 = vmatpush1.msra.mxu0 %v3390
    %3392 = vmatprep.subr.mxu0 0.0
    %3393 = vmatpush1.msra.mxu0 0.0
    %3394 = vmatprep.subr.mxu0 0.0
    %3395 = vmatpush1.msra.mxu0 0.0
    %3396 = vmatprep.subr.mxu0 0.0
    %3397 = vmatpush1.msra.mxu0 0.0
    %3398 = vmatprep.subr.mxu0 0.0
    %3399 = vmatpush1.msra.mxu0 0.0
    %3400 = vmatprep.subr.mxu0 0.0
    %3401 = vmatpush1.msra.mxu0 0.0
    %3402 = vmatprep.subr.mxu0 0.0
    %3403 = vmatpush1.msra.mxu0 0.0
    %3404 = vmatprep.subr.mxu0 0.0
    %3405 = vmatpush1.msra.mxu0 0.0
    %3406 = vmatprep.subr.mxu0 0.0
    %3407 = vmatpush1.msra.mxu0 0.0
    %3408 = vmatprep.subr.mxu0 0.0
    %3409 = vmatpush1.msra.mxu0 0.0
    %3410 = vmatprep.subr.mxu0 0.0
    %3411 = vmatpush1.msra.mxu0 0.0
    %3412 = vmatprep.subr.mxu0 0.0
    %3413 = vmatpush1.msra.mxu0 0.0
    %3414 = vmatprep.subr.mxu0 0.0
    %3415 = vmatpush1.msra.mxu0 0.0
    %3416 = vmatprep.subr.mxu0 0.0
    %3417 = vmatpush1.msra.mxu0 0.0
    %3418 = vmatprep.subr.mxu0 0.0
    %3419 = vmatpush1.msra.mxu0 0.0
    %3420 = vmatprep.subr.mxu0 0.0
    %3421 = vmatpush1.msra.mxu0 0.0
    %3422 = vmatprep.subr.mxu0 0.0
    %3423 = vmatpush1.msra.mxu0 0.0
    %3424 = vmatprep.mubr.f32.mxu0 0.0
    %v3425 = vand.u32 %v2409, 4294901760
    %3426 = vmatmul.mubr.f32.gmra.mrb[0].mxu0 %v3425
    %v3427 = vpop.f32.mrb[0].mxu0
    %v3428 = vadd.f32 %v3281, %v3427
    %v3429 = vpop.f32.mrb[0].mxu0
    %3430 = vmatprep.mubr.f32.mxu0 0.0
    %v3431 = vand.u32 %v2410, 4294901760
    %3432 = vmatmul.mubr.f32.gmra.mrb[0].mxu0 %v3431
    %v3433 = vpop.f32.mrb[0].mxu0
    %v3434 = vadd.f32 %v3287, %v3433
    %v3435 = vpop.f32.mrb[0].mxu0
    %3436 = vmatprep.mubr.f32.mxu0 0.0
    %v3437 = vand.u32 %v2411, 4294901760
    %3438 = vmatmul.mubr.f32.gmra.mrb[0].mxu0 %v3437
    %v3439 = vpop.f32.mrb[0].mxu0
    %v3440 = vadd.f32 %v3293, %v3439
    %v3441 = vpop.f32.mrb[0].mxu0
    %3442 = vmatprep.mubr.f32.mxu0 0.0
    %v3443 = vand.u32 %v2412, 4294901760
    %3444 = vmatmul.mubr.f32.gmra.mrb[0].mxu0 %v3443
    %v3445 = vpop.f32.mrb[0].mxu0
    %v3446 = vadd.f32 %v3299, %v3445
    %v3447 = vpop.f32.mrb[0].mxu0
    %3448 = vmatprep.mubr.f32.mxu0 0.0
    %v3449 = vand.u32 %v2413, 4294901760
    %3450 = vmatmul.mubr.f32.gmra.mrb[0].mxu0 %v3449
    %v3451 = vpop.f32.mrb[0].mxu0
    %v3452 = vadd.f32 %v3305, %v3451
    %v3453 = vpop.f32.mrb[0].mxu0
    %3454 = vmatprep.mubr.f32.mxu0 0.0
    %v3455 = vand.u32 %v2414, 4294901760
    %3456 = vmatmul.mubr.f32.gmra.mrb[0].mxu0 %v3455
    %v3457 = vpop.f32.mrb[0].mxu0
    %v3458 = vadd.f32 %v3311, %v3457
    %v3459 = vpop.f32.mrb[0].mxu0
    %3460 = vmatprep.mubr.f32.mxu0 0.0
    %v3461 = vand.u32 %v2415, 4294901760
    %3462 = vmatmul.mubr.f32.gmra.mrb[0].mxu0 %v3461
    %v3463 = vpop.f32.mrb[0].mxu0
    %v3464 = vadd.f32 %v3317, %v3463
    %v3465 = vpop.f32.mrb[0].mxu0
    %3466 = vmatprep.mubr.f32.mxu0 0.0
    %v3467 = vand.u32 %v2416, 4294901760
    %3468 = vmatmul.mubr.f32.gmra.mrb[0].mxu0 %v3467
    %v3469 = vpop.f32.mrb[0].mxu0
    %v3470 = vadd.f32 %v3323, %v3469
    %v3471 = vpop.f32.mrb[0].mxu0
    %3472 = vmatprep.mubr.f32.mxu0 0.0
    %v3473 = vand.u32 %v2417, 4294901760
    %3474 = vmatmul.mubr.f32.gmra.mrb[0].mxu0 %v3473
    %v3475 = vpop.f32.mrb[0].mxu0
    %v3476 = vadd.f32 %v3329, %v3475
    %v3477 = vpop.f32.mrb[0].mxu0
    %3478 = vmatprep.mubr.f32.mxu0 0.0
    %v3479 = vand.u32 %v2418, 4294901760
    %3480 = vmatmul.mubr.f32.gmra.mrb[0].mxu0 %v3479
    %v3481 = vpop.f32.mrb[0].mxu0
    %v3482 = vadd.f32 %v3335, %v3481
    %v3483 = vpop.f32.mrb[0].mxu0
    %3484 = vmatprep.mubr.f32.mxu0 0.0
    %v3485 = vand.u32 %v2419, 4294901760
    %3486 = vmatmul.mubr.f32.gmra.mrb[0].mxu0 %v3485
    %v3487 = vpop.f32.mrb[0].mxu0
    %v3488 = vadd.f32 %v3341, %v3487
    %v3489 = vpop.f32.mrb[0].mxu0
    %3490 = vdwg.mxu0
    %v3491 = vadd.f32 %v2293, %v3428
    %v3492 = vadd.f32 %v2299, %v3434
    %v3493 = vadd.f32 %v2305, %v3440
    %v3494 = vadd.f32 %v2311, %v3446
    %v3495 = vadd.f32 %v2317, %v3452
    %v3496 = vadd.f32 %v2323, %v3458
    %v3497 = vadd.f32 %v2329, %v3464
    %v3498 = vadd.f32 %v2335, %v3470
    %v3499 = vadd.f32 %v2341, %v3476
    %v3500 = vadd.f32 %v2347, %v3482
    %v3501 = vadd.f32 %v2353, %v3488
    %v3502 = vmul.f32 %v1158, %v3491
    %v3503 = vmul.f32 %v1164, %v3492
    %v3504 = vmul.f32 %v1170, %v3493
    %v3505 = vmul.f32 %v1176, %v3494
    %v3506 = vmul.f32 %v1182, %v3495
    %v3507 = vmul.f32 %v1188, %v3496
    %v3508 = vmul.f32 %v1194, %v3497
    %v3509 = vmul.f32 %v1200, %v3498
    %v3510 = vmul.f32 %v1206, %v3499
    %v3511 = vmul.f32 %v1212, %v3500
    %v3512 = vmul.f32 %v1218, %v3501
    %v3513 = vmul.f32 %v3428, %v2293
    %v3514 = vmul.f32 %v3434, %v2299
    %v3515 = vmul.f32 %v3440, %v2305
    %v3516 = vmul.f32 %v3446, %v2311
    %v3517 = vmul.f32 %v3452, %v2317
    %v3518 = vmul.f32 %v3458, %v2323
    %v3519 = vmul.f32 %v3464, %v2329
    %v3520 = vmul.f32 %v3470, %v2335
    %v3521 = vmul.f32 %v3476, %v2341
    %v3522 = vmul.f32 %v3482, %v2347
    %v3523 = vmul.f32 %v3488, %v2353
    %v3524 = vadd.f32 %v3502, %v3513
    %v3525 = vadd.f32 %v3503, %v3514
    %v3526 = vadd.f32 %v3504, %v3515
    %v3527 = vadd.f32 %v3505, %v3516
    %v3528 = vadd.f32 %v3506, %v3517
    %v3529 = vadd.f32 %v3507, %v3518
    %v3530 = vadd.f32 %v3508, %v3519
    %v3531 = vadd.f32 %v3509, %v3520
    %v3532 = vadd.f32 %v3510, %v3521
    %v3533 = vadd.f32 %v3511, %v3522
    %v3534 = vadd.f32 %v3512, %v3523
    %v3535 = vadd.f32 %v3524, %v3525
    %v3536 = vadd.f32 %v3535, %v3526
    %v3537 = vadd.f32 %v3536, %v3527
    %v3538 = vadd.f32 %v3537, %v3528
    %v3539 = vadd.f32 %v3538, %v3529
    %v3540 = vadd.f32 %v3539, %v3530
    %v3541 = vadd.f32 %v3540, %v3531
    %v3542 = vadd.f32 %v3541, %v3532
    %v3543 = vadd.f32 %v3542, %v3533
    %vm3544 = vcmask 1044480
    %v3545 = vsel %vm3544, %v3534, 0.0
    %v3546 = vadd.f32 %v3543, %v3545
    %v3547 = vrot.slane %v3546, 4
    %v3548 = vadd.f32 %v3546, %v3547
    %v3549 = vrot.slane %v3548, 2
    %v3550 = vadd.f32 %v3548, %v3549
    %v3551 = vrot.slane %v3550, 1
    %v3552 = vadd.f32 %v3550, %v3551
    %v3553 = vsub.f32 %v3552, %v3534
    %v3554 = vadd.f32 %v3553, %v1218
    %v3555 = vadd.f32 %v3554, %v2353
    %v3556 = vadd.f32 %v3555, %v3488
    %s3557 = sld [smem:[#allocation2]]
    %v3558 = vstv %s3557
    %v3559 = vadd.f32 %v3556, %v3558
    %3560 = vst [vmem:[#allocation9 - $0x4] sm:$0x10] %v3559
    // Predicated region
    $region42: #{tpu_custom_call.1} parent=1 // pred_check
      _
    $region43: #{tpu_custom_call.1} parent=1 // pred_check_branch
      %3562 = sbr.rel (0) target = $region45
    $region44: #{tpu_custom_call.1} parent=1 // pred_region
      %s3564 = ssub.s32 16, 16
      %3565 = vsyncadd [#allocation5], %s3564
      %s3567 = sshll.u32 [#allocation9], 4
      %s3568 = int_to_ptr.vmem [resolvable:$true] %s3567
      %3570 = dma.vmem_to_hbm [thread:$0]  %s3568, 16, %s7, [#allocation5]
    $region45: #{tpu_custom_call.1} parent=1 // pred_fallthru
      _
    // Predicated region
    $region46: #{tpu_custom_call.1} parent=1 // pred_check
      _
    $region47: #{tpu_custom_call.1} parent=1 // pred_check_branch
      %3572 = sbr.rel (0) target = $region49
    $region48: #{tpu_custom_call.1} parent=1 // pred_region
      %3573 = dma.done [#allocation5], 16
    $region49: #{tpu_custom_call.1} parent=1 // pred_fallthru
      _
    %3574 = vsyncpa [#allocation4], 1
    %3575 = vsyncpa [#allocation7], 1
    %3576 = vsyncpa [#allocation5], 1

</llo_original>
